<compile_context>
chip_gen: v7x
topology: tpu7x:2x2x1
jax: 0.10.0
libtpu: 0.0.40
codegen_flags: <defaults>
</compile_context>

<pallas_src>
import jax
import jax.numpy as jnp
from jax.experimental import pallas as pl
from jax.experimental.pallas import tpu as pltpu

# ---- model constants (from RLBind / Net __init__) ----
OUT_CHANNEL = 128                       # conv output channels
CONV_K = 17                             # Net kernels[0]
FEATURES_DIM = 10
LOCAL_WINDOW = 11
LOCAL_DIM = LOCAL_WINDOW * FEATURES_DIM # 110
INPUT_DIM = LOCAL_DIM + OUT_CHANNEL     # 238
H1, H2, CLASS_NUM = 192, 96, 1
SEQ_LEN = 16                            # defconstant.cutoff_seq_len (small synthetic choice)
PAD = (CONV_K - 1) // 2                 # 8 -> 'same' padding along the sequence axis

# ---- TPU-friendly padded dims ----
KF = CONV_K * FEATURES_DIM              # 170 = im2col contraction depth
KF_PAD = 256                            # pad contraction to one full 256-deep MXU pass
LOCAL_PAD = 128                         # lane-pad the local feature dim
H2_PAD = 128                            # lane-pad the second hidden layer
B_TILE = 128                            # batch tile per grid step (multiple of 128)


def rlbind_kernel(patches_ref, local_ref, cw_ref, cb_ref,
                  w1c_ref, w1l_ref, b1_ref,
                  w2_ref, b2_ref, w3_ref, b3_ref, out_ref):
    """Fused im2col-conv + maxpool + 3-layer MLP + sigmoid for one batch tile.

    patches_ref : (B_TILE, S, KF_PAD)   bf16 im2col patches (zero-padded contraction)
    local_ref   : (B_TILE, LOCAL_PAD)   bf16 flattened local features (zero-padded)
    cw_ref      : (KF_PAD, C)           bf16 conv weight, rows ordered kh*F + f
    cb_ref      : (1, C)                f32 conv bias
    w1c_ref     : (C, H1)               bf16 Dense1 rows acting on CNN features
    w1l_ref     : (LOCAL_PAD, H1)       bf16 Dense1 rows acting on local features
    b1_ref      : (1, H1)               f32
    w2_ref      : (H1, H2_PAD)          bf16 (padded output cols are zero)
    b2_ref      : (1, H2_PAD)           f32 (padded cols zero)
    w3_ref      : (H2_PAD, 1)           f32 (padded rows zero)
    b3_ref      : (1, 1)                f32
    out_ref     : (1, 1, B_TILE)        f32 lane-dense per-tile probabilities
    """
    bt, s, kfp = patches_ref.shape
    c = cw_ref.shape[1]

    # --- Conv2d(1, C, (K, F), padding=(PAD, 0)) as a single im2col matmul ---
    x = patches_ref[...].reshape(bt * s, kfp)                       # bf16, lane dim kept
    conv = jnp.dot(x, cw_ref[...], preferred_element_type=jnp.float32)   # (bt*s, C) f32
    conv = jnp.maximum(conv + cb_ref[...], 0.0)                     # bias + ReLU

    # --- MaxPool2d((S, 1)) -> global max over the sequence axis ---
    pooled = jnp.max(conv.reshape(bt, s, c), axis=1)                # (bt, C) f32

    # --- cat([pooled, local], 1) @ W1 == pooled @ W1c + local @ W1l ---
    h1 = jnp.dot(pooled.astype(jnp.bfloat16), w1c_ref[...],
                 preferred_element_type=jnp.float32)
    h1 = h1 + jnp.dot(local_ref[...], w1l_ref[...],
                      preferred_element_type=jnp.float32)
    h1 = jnp.maximum(h1 + b1_ref[...], 0.0)                         # (bt, 192) f32

    h2 = jnp.dot(h1.astype(jnp.bfloat16), w2_ref[...],
                 preferred_element_type=jnp.float32)
    h2 = jnp.maximum(h2 + b2_ref[...], 0.0)                         # (bt, 128) f32

    # --- Linear(96 -> 1) + Sigmoid as transpose + sublane reduction (no N=1 matmul),
    #     stored lane-dense with batch on the lane axis ---
    h2t = h2.T                                                      # (H2_PAD, bt), XLU
    logits = jnp.sum(h2t * w3_ref[...], axis=0, keepdims=True) + b3_ref[...]   # (1, bt)
    out_ref[0] = (1.0 / (1.0 + jnp.exp(-logits))).astype(out_ref.dtype)


def init_params(key):
    """Deterministic synthetic parameters (PyTorch-style uniform(-1/sqrt(fan_in))).

    Canonical layouts used here:
      conv_w: (K, F, C)   == PyTorch Conv2d weight (C, 1, K, F) transposed
      w*:     (in, out)   == PyTorch Linear weight (out, in) transposed
    (A real-checkpoint loader must apply those transposes.)
    """
    ks = jax.random.split(key, 8)

    def u(k, shape, fan_in):
        b = 1.0 / jnp.sqrt(jnp.float32(fan_in))
        return jax.random.uniform(k, shape, jnp.float32, -b, b)

    conv_fan = 1 * CONV_K * FEATURES_DIM
    return dict(
        conv_w=u(ks[0], (CONV_K, FEATURES_DIM, OUT_CHANNEL), conv_fan),
        conv_b=u(ks[1], (1, OUT_CHANNEL), conv_fan),
        w1=u(ks[2], (INPUT_DIM, H1), INPUT_DIM),     # rows 0..127 = CNN feats (cat order)
        b1=u(ks[3], (1, H1), INPUT_DIM),
        w2=u(ks[4], (H1, H2), H1),
        b2=u(ks[5], (1, H2), H1),
        w3=u(ks[6], (H2, CLASS_NUM), H2),
        b3=u(ks[7], (1, CLASS_NUM), H2),
    )


def prepare_params(params):
    """Pad / split / cast parameters into the kernel's padded bf16 layouts."""
    cw = params['conv_w'].reshape(KF, OUT_CHANNEL)
    cw = jnp.pad(cw, ((0, KF_PAD - KF), (0, 0))).astype(jnp.bfloat16)        # (256, 128)
    w1 = params['w1']
    w1_cnn = w1[:OUT_CHANNEL].astype(jnp.bfloat16)                            # (128, 192)
    w1_local = jnp.pad(w1[OUT_CHANNEL:],
                       ((0, LOCAL_PAD - LOCAL_DIM), (0, 0))).astype(jnp.bfloat16)  # (128,192)
    w2 = jnp.pad(params['w2'], ((0, 0), (0, H2_PAD - H2))).astype(jnp.bfloat16)    # (192,128)
    b2 = jnp.pad(params['b2'], ((0, 0), (0, H2_PAD - H2)))                    # (1, 128) f32
    w3 = jnp.pad(params['w3'], ((0, H2_PAD - H2), (0, 0)))                    # (128, 1) f32
    return dict(conv_w=cw, conv_b=params['conv_b'],
                w1_cnn=w1_cnn, w1_local=w1_local, b1=params['b1'],
                w2=w2, b2=b2, w3=w3, b3=params['b3'])


def prepare_inputs(all_features, local_features, b_tile):
    """im2col + lane/batch padding + bf16 cast (pure XLA, outside the kernel)."""
    B, _, S, F = all_features.shape
    x = all_features[:, 0, :, :].astype(jnp.float32)                 # (B, S, F)
    xpad = jnp.pad(x, ((0, 0), (PAD, PAD), (0, 0)))                  # (B, S+K-1, F)
    # patch row ordering is kh-major then f: index kh*F + f, matching conv_w.reshape.
    patches = jnp.concatenate([xpad[:, kh:kh + S, :] for kh in range(CONV_K)],
                              axis=-1)                               # (B, S, K*F)
    patches = jnp.pad(patches, ((0, 0), (0, 0), (0, KF_PAD - KF)))   # pad 170 -> 256

    local = local_features.reshape(B, -1).astype(jnp.float32)        # (B, 110)
    local = jnp.pad(local, ((0, 0), (0, LOCAL_PAD - LOCAL_DIM)))     # (B, 128)

    nt = pl.cdiv(B, b_tile)
    bp = nt * b_tile
    patches = jnp.pad(patches, ((0, bp - B), (0, 0), (0, 0))).astype(jnp.bfloat16)
    local = jnp.pad(local, ((0, bp - B), (0, 0))).astype(jnp.bfloat16)
    return patches, local, nt


def rlbind_forward(all_features, local_features, params, *, b_tile=B_TILE):
    """all_features: (B, 1, S, 10) NCHW; local_features: (B, 1, 11, 10) NCHW."""
    B, _, S, _ = all_features.shape
    patches, local, nt = prepare_inputs(all_features, local_features, b_tile)
    p = prepare_params(params)

    def resident(shape):  # full-array block, constant index map -> stays VMEM resident
        nd = len(shape)
        return pl.BlockSpec(shape, lambda i, _nd=nd: (0,) * _nd)

    in_specs = [
        pl.BlockSpec((b_tile, S, KF_PAD), lambda i: (i, 0, 0)),   # patches (batch-tiled)
        pl.BlockSpec((b_tile, LOCAL_PAD), lambda i: (i, 0)),      # local   (batch-tiled)
        resident((KF_PAD, OUT_CHANNEL)),                          # conv_w
        resident((1, OUT_CHANNEL)),                               # conv_b
        resident((OUT_CHANNEL, H1)),                              # w1_cnn
        resident((LOCAL_PAD, H1)),                                # w1_local
        resident((1, H1)),                                        # b1
        resident((H1, H2_PAD)),                                   # w2
        resident((1, H2_PAD)),                                    # b2
        resident((H2_PAD, 1)),                                    # w3
        resident((1, 1)),                                         # b3
    ]
    out_specs = pl.BlockSpec((1, 1, b_tile), lambda i: (i, 0, 0))

    args = (patches, local, p['conv_w'], p['conv_b'],
            p['w1_cnn'], p['w1_local'], p['b1'],
            p['w2'], p['b2'], p['w3'], p['b3'])

    bp = nt * b_tile
    flops = 2 * bp * (S * KF_PAD * OUT_CHANNEL
                      + (OUT_CHANNEL + LOCAL_PAD) * H1
                      + H1 * H2_PAD + H2_PAD)
    bytes_accessed = sum(int(a.size) * a.dtype.itemsize for a in args) + bp * 4

    out = pl.pallas_call(
        rlbind_kernel,
        out_shape=jax.ShapeDtypeStruct((nt, 1, b_tile), jnp.float32),
        grid=(nt,),
        in_specs=in_specs,
        out_specs=out_specs,
        compiler_params=pltpu.CompilerParams(dimension_semantics=("parallel",)),
        cost_estimate=pl.CostEstimate(flops=flops, transcendentals=bp,
                                      bytes_accessed=bytes_accessed),
    )(*args)

    return out.reshape(-1)[:B].reshape(B, CLASS_NUM)


def rlbind_reference(all_features, local_features, params):
    """Pure-JAX f32 reference of the PyTorch forward (for correctness checking)."""
    B, _, S, _ = all_features.shape
    x = all_features[:, 0, :, :].astype(jnp.float32)
    xpad = jnp.pad(x, ((0, 0), (PAD, PAD), (0, 0)))
    conv = jnp.zeros((B, S, OUT_CHANNEL), jnp.float32)
    for kh in range(CONV_K):
        conv = conv + jnp.einsum('bsf,fc->bsc', xpad[:, kh:kh + S], params['conv_w'][kh])
    conv = jnp.maximum(conv + params['conv_b'], 0.0)
    pooled = conv.max(axis=1)
    local = local_features.reshape(B, -1).astype(jnp.float32)
    feats = jnp.concatenate([pooled, local], axis=1)
    h1 = jnp.maximum(feats @ params['w1'] + params['b1'], 0.0)
    h2 = jnp.maximum(h1 @ params['w2'] + params['b2'], 0.0)
    return jax.nn.sigmoid(h2 @ params['w3'] + params['b3'])


if __name__ == "__main__":
    key = jax.random.PRNGKey(0)
    k_x, k_loc, k_par = jax.random.split(key, 3)

    B = 2
    all_features = jax.random.normal(k_x, (B, 1, SEQ_LEN, FEATURES_DIM), jnp.float32)
    local_features = jax.random.normal(k_loc, (B, 1, LOCAL_WINDOW, FEATURES_DIM),
                                       jnp.float32)
    params = init_params(k_par)

    out = rlbind_forward(all_features, local_features, params)
    jax.block_until_ready(out)
    assert out.shape == (B, CLASS_NUM)

    ref = rlbind_reference(all_features, local_features, params)
    assert jnp.max(jnp.abs(out - ref)) < 5e-2, "kernel output deviates from reference"

    print("KERNEL_OK")
</pallas_src>

<mosaic_0001>
module attributes {stable_mosaic.version = 11 : i64} {
  func.func @rlbind_kernel(%arg0: i32, %arg1: memref<128x16x256xbf16, #tpu.memory_space<vmem>>, %arg2: memref<128x128xbf16, #tpu.memory_space<vmem>>, %arg3: memref<256x128xbf16, #tpu.memory_space<vmem>>, %arg4: memref<1x128xf32, #tpu.memory_space<vmem>>, %arg5: memref<128x192xbf16, #tpu.memory_space<vmem>>, %arg6: memref<128x192xbf16, #tpu.memory_space<vmem>>, %arg7: memref<1x192xf32, #tpu.memory_space<vmem>>, %arg8: memref<192x128xbf16, #tpu.memory_space<vmem>>, %arg9: memref<1x128xf32, #tpu.memory_space<vmem>>, %arg10: memref<128x1xf32, #tpu.memory_space<vmem>>, %arg11: memref<1x1xf32, #tpu.memory_space<vmem>>, %arg12: memref<1x1x128xf32, #tpu.memory_space<vmem>>) attributes {dimension_semantics = [#tpu.dimension_semantics<parallel>], iteration_bounds = array<i64: 1>, scalar_prefetch = 0 : i64, scratch_operands = 0 : i64, tpu.core_type = #tpu.core_type<tc>, window_params = [{transform_indices = @transform_0, window_bounds = array<i64: 128, 16, 256>}, {transform_indices = @transform_1, window_bounds = array<i64: 128, 128>}, {pipeline_mode = #tpu.pipeline_mode<synchronous>, transform_indices = @transform_2, window_bounds = array<i64: 256, 128>}, {pipeline_mode = #tpu.pipeline_mode<synchronous>, transform_indices = @transform_3, window_bounds = array<i64: 1, 128>}, {pipeline_mode = #tpu.pipeline_mode<synchronous>, transform_indices = @transform_4, window_bounds = array<i64: 128, 192>}, {pipeline_mode = #tpu.pipeline_mode<synchronous>, transform_indices = @transform_5, window_bounds = array<i64: 128, 192>}, {pipeline_mode = #tpu.pipeline_mode<synchronous>, transform_indices = @transform_6, window_bounds = array<i64: 1, 192>}, {pipeline_mode = #tpu.pipeline_mode<synchronous>, transform_indices = @transform_7, window_bounds = array<i64: 192, 128>}, {pipeline_mode = #tpu.pipeline_mode<synchronous>, transform_indices = @transform_8, window_bounds = array<i64: 1, 128>}, {pipeline_mode = #tpu.pipeline_mode<synchronous>, transform_indices = @transform_9, window_bounds = array<i64: 128, 1>}, {pipeline_mode = #tpu.pipeline_mode<synchronous>, transform_indices = @transform_10, window_bounds = array<i64: 1, 1>}, {transform_indices = @transform_11, window_bounds = array<i64: 1, 1, 128>}]} {
    %c0 = arith.constant 0 : index
    %c0_0 = arith.constant 0 : index
    %c0_1 = arith.constant 0 : index
    %0 = vector.load %arg1[%c0, %c0_0, %c0_1] : memref<128x16x256xbf16, #tpu.memory_space<vmem>>, vector<128x16x256xbf16>
    %1 = vector.shape_cast %0 : vector<128x16x256xbf16> to vector<2048x256xbf16>
    %c0_2 = arith.constant 0 : index
    %c0_3 = arith.constant 0 : index
    %2 = vector.load %arg3[%c0_2, %c0_3] : memref<256x128xbf16, #tpu.memory_space<vmem>>, vector<256x128xbf16>
    %cst = arith.constant dense<0.000000e+00> : vector<2048x128xf32>
    %3 = tpu.matmul %1, %2, %cst {dimension_numbers = #tpu.dot_dimension_numbers<[1], [0], [0], [1], [0, 0, 1, 1], [], []>} : vector<2048x256xbf16>, vector<256x128xbf16>, vector<2048x128xf32> -> vector<2048x128xf32>
    %c0_4 = arith.constant 0 : index
    %c0_5 = arith.constant 0 : index
    %4 = vector.load %arg4[%c0_4, %c0_5] : memref<1x128xf32, #tpu.memory_space<vmem>>, vector<1x128xf32>
    %5 = vector.broadcast %4 : vector<1x128xf32> to vector<2048x128xf32>
    %6 = arith.addf %3, %5 : vector<2048x128xf32>
    %cst_6 = arith.constant 0.000000e+00 : f32
    %7 = vector.broadcast %cst_6 : f32 to vector<2048x128xf32>
    %8 = arith.maximumf %6, %7 : vector<2048x128xf32>
    %9 = vector.shape_cast %8 : vector<2048x128xf32> to vector<128x16x128xf32>
    %cst_7 = arith.constant dense<0xFF800000> : vector<128x128xf32>
    %10 = vector.multi_reduction <maximumf>, %9, %cst_7 [1] : vector<128x16x128xf32> to vector<128x128xf32>
    %11 = arith.truncf %10 : vector<128x128xf32> to vector<128x128xbf16>
    %c0_8 = arith.constant 0 : index
    %c0_9 = arith.constant 0 : index
    %12 = vector.load %arg5[%c0_8, %c0_9] : memref<128x192xbf16, #tpu.memory_space<vmem>>, vector<128x192xbf16>
    %cst_10 = arith.constant dense<0.000000e+00> : vector<128x192xf32>
    %13 = tpu.matmul %11, %12, %cst_10 {dimension_numbers = #tpu.dot_dimension_numbers<[1], [0], [0], [1], [0, 0, 1, 1], [], []>} : vector<128x128xbf16>, vector<128x192xbf16>, vector<128x192xf32> -> vector<128x192xf32>
    %c0_11 = arith.constant 0 : index
    %c0_12 = arith.constant 0 : index
    %14 = vector.load %arg2[%c0_11, %c0_12] : memref<128x128xbf16, #tpu.memory_space<vmem>>, vector<128x128xbf16>
    %c0_13 = arith.constant 0 : index
    %c0_14 = arith.constant 0 : index
    %15 = vector.load %arg6[%c0_13, %c0_14] : memref<128x192xbf16, #tpu.memory_space<vmem>>, vector<128x192xbf16>
    %cst_15 = arith.constant dense<0.000000e+00> : vector<128x192xf32>
    %16 = tpu.matmul %14, %15, %cst_15 {dimension_numbers = #tpu.dot_dimension_numbers<[1], [0], [0], [1], [0, 0, 1, 1], [], []>} : vector<128x128xbf16>, vector<128x192xbf16>, vector<128x192xf32> -> vector<128x192xf32>
    %17 = arith.addf %13, %16 : vector<128x192xf32>
    %c0_16 = arith.constant 0 : index
    %c0_17 = arith.constant 0 : index
    %18 = vector.load %arg7[%c0_16, %c0_17] : memref<1x192xf32, #tpu.memory_space<vmem>>, vector<1x192xf32>
    %19 = vector.broadcast %18 : vector<1x192xf32> to vector<128x192xf32>
    %20 = arith.addf %17, %19 : vector<128x192xf32>
    %cst_18 = arith.constant 0.000000e+00 : f32
    %21 = vector.broadcast %cst_18 : f32 to vector<128x192xf32>
    %22 = arith.maximumf %20, %21 : vector<128x192xf32>
    %23 = arith.truncf %22 : vector<128x192xf32> to vector<128x192xbf16>
    %c0_19 = arith.constant 0 : index
    %c0_20 = arith.constant 0 : index
    %24 = vector.load %arg8[%c0_19, %c0_20] : memref<192x128xbf16, #tpu.memory_space<vmem>>, vector<192x128xbf16>
    %cst_21 = arith.constant dense<0.000000e+00> : vector<128x128xf32>
    %25 = tpu.matmul %23, %24, %cst_21 {dimension_numbers = #tpu.dot_dimension_numbers<[1], [0], [0], [1], [0, 0, 1, 1], [], []>} : vector<128x192xbf16>, vector<192x128xbf16>, vector<128x128xf32> -> vector<128x128xf32>
    %c0_22 = arith.constant 0 : index
    %c0_23 = arith.constant 0 : index
    %26 = vector.load %arg9[%c0_22, %c0_23] : memref<1x128xf32, #tpu.memory_space<vmem>>, vector<1x128xf32>
    %27 = vector.broadcast %26 : vector<1x128xf32> to vector<128x128xf32>
    %28 = arith.addf %25, %27 : vector<128x128xf32>
    %cst_24 = arith.constant 0.000000e+00 : f32
    %29 = vector.broadcast %cst_24 : f32 to vector<128x128xf32>
    %30 = arith.maximumf %28, %29 : vector<128x128xf32>
    %31 = tpu.transpose %30, [1, 0] : vector<128x128xf32> -> vector<128x128xf32>
    %c0_25 = arith.constant 0 : index
    %c0_26 = arith.constant 0 : index
    %32 = vector.load %arg10[%c0_25, %c0_26] : memref<128x1xf32, #tpu.memory_space<vmem>>, vector<128x1xf32>
    %33 = vector.broadcast %32 : vector<128x1xf32> to vector<128x128xf32>
    %34 = arith.mulf %31, %33 : vector<128x128xf32>
    %cst_27 = arith.constant dense<0.000000e+00> : vector<128xf32>
    %35 = vector.multi_reduction <add>, %34, %cst_27 [0] : vector<128x128xf32> to vector<128xf32>
    %36 = vector.shape_cast %35 : vector<128xf32> to vector<1x128xf32>
    %c0_28 = arith.constant 0 : index
    %c0_29 = arith.constant 0 : index
    %37 = vector.load %arg11[%c0_28, %c0_29] : memref<1x1xf32, #tpu.memory_space<vmem>>, vector<1x1xf32>
    %38 = vector.broadcast %37 : vector<1x1xf32> to vector<1x128xf32>
    %39 = arith.addf %36, %38 : vector<1x128xf32>
    %cst_30 = arith.constant 0.000000e+00 : f32
    %40 = vector.broadcast %cst_30 : f32 to vector<1x128xf32>
    %41 = arith.subf %40, %39 : vector<1x128xf32>
    %42 = math.exp %41 : vector<1x128xf32>
    %cst_31 = arith.constant 1.000000e+00 : f32
    %43 = vector.broadcast %cst_31 : f32 to vector<1x128xf32>
    %44 = arith.addf %43, %42 : vector<1x128xf32>
    %cst_32 = arith.constant 1.000000e+00 : f32
    %45 = vector.broadcast %cst_32 : f32 to vector<1x128xf32>
    %46 = arith.divf %45, %44 : vector<1x128xf32>
    %c0_33 = arith.constant 0 : index
    %c0_34 = arith.constant 0 : index
    %c0_35 = arith.constant 0 : index
    %47 = vector.load %arg12[%c0_33, %c0_34, %c0_35] : memref<1x1x128xf32, #tpu.memory_space<vmem>>, vector<1x1x128xf32>
    %48 = vector.shape_cast %47 : vector<1x1x128xf32> to vector<1x128xf32>
    %49 = vector.shape_cast %46 : vector<1x128xf32> to vector<1x1x128xf32>
    tpu.vector_store %arg12[%c0_33, %c0_34, %c0_35], %49 {strides = array<i32>} : memref<1x1x128xf32, #tpu.memory_space<vmem>>, vector<1x1x128xf32>,
    return
  }
  func.func @transform_0(%arg0: i32) -> (i32, i32, i32) {
    %c0_i32 = arith.constant 0 : i32
    %c0_i32_0 = arith.constant 0 : i32
    %c0_i32_1 = arith.constant 0 : i32
    return %arg0, %c0_i32, %c0_i32_0 : i32, i32, i32
  }
  func.func @transform_1(%arg0: i32) -> (i32, i32) {
    %c0_i32 = arith.constant 0 : i32
    %c0_i32_0 = arith.constant 0 : i32
    return %arg0, %c0_i32 : i32, i32
  }
  func.func @transform_2(%arg0: i32) -> (i32, i32) {
    %c0_i32 = arith.constant 0 : i32
    %c0_i32_0 = arith.constant 0 : i32
    %c0_i32_1 = arith.constant 0 : i32
    return %c0_i32, %c0_i32_0 : i32, i32
  }
  func.func @transform_3(%arg0: i32) -> (i32, i32) {
    %c0_i32 = arith.constant 0 : i32
    %c0_i32_0 = arith.constant 0 : i32
    %c0_i32_1 = arith.constant 0 : i32
    return %c0_i32, %c0_i32_0 : i32, i32
  }
  func.func @transform_4(%arg0: i32) -> (i32, i32) {
    %c0_i32 = arith.constant 0 : i32
    %c0_i32_0 = arith.constant 0 : i32
    %c0_i32_1 = arith.constant 0 : i32
    return %c0_i32, %c0_i32_0 : i32, i32
  }
  func.func @transform_5(%arg0: i32) -> (i32, i32) {
    %c0_i32 = arith.constant 0 : i32
    %c0_i32_0 = arith.constant 0 : i32
    %c0_i32_1 = arith.constant 0 : i32
    return %c0_i32, %c0_i32_0 : i32, i32
  }
  func.func @transform_6(%arg0: i32) -> (i32, i32) {
    %c0_i32 = arith.constant 0 : i32
    %c0_i32_0 = arith.constant 0 : i32
    %c0_i32_1 = arith.constant 0 : i32
    return %c0_i32, %c0_i32_0 : i32, i32
  }
  func.func @transform_7(%arg0: i32) -> (i32, i32) {
    %c0_i32 = arith.constant 0 : i32
    %c0_i32_0 = arith.constant 0 : i32
    %c0_i32_1 = arith.constant 0 : i32
    return %c0_i32, %c0_i32_0 : i32, i32
  }
  func.func @transform_8(%arg0: i32) -> (i32, i32) {
    %c0_i32 = arith.constant 0 : i32
    %c0_i32_0 = arith.constant 0 : i32
    %c0_i32_1 = arith.constant 0 : i32
    return %c0_i32, %c0_i32_0 : i32, i32
  }
  func.func @transform_9(%arg0: i32) -> (i32, i32) {
    %c0_i32 = arith.constant 0 : i32
    %c0_i32_0 = arith.constant 0 : i32
    %c0_i32_1 = arith.constant 0 : i32
    return %c0_i32, %c0_i32_0 : i32, i32
  }
  func.func @transform_10(%arg0: i32) -> (i32, i32) {
    %c0_i32 = arith.constant 0 : i32
    %c0_i32_0 = arith.constant 0 : i32
    %c0_i32_1 = arith.constant 0 : i32
    return %c0_i32, %c0_i32_0 : i32, i32
  }
  func.func @transform_11(%arg0: i32) -> (i32, i32, i32) {
    %c0_i32 = arith.constant 0 : i32
    %c0_i32_0 = arith.constant 0 : i32
    %c0_i32_1 = arith.constant 0 : i32
    return %arg0, %c0_i32, %c0_i32_0 : i32, i32, i32
  }
}

</mosaic_0001>

<llo_original>
// kernel: tpu_custom_call.1
$region0: #{tpu_custom_call.1}
  #allocation0 [shape = 'u32[]', space=smem, size = 0x4, offset = 0x4, fixed_abs, tag = 'smem constant byte address 0x4 - core index']
  #allocation1 [shape = 'u32[144,128]{1,0:T(1,128)}', space=vmem, size = 0x12000, scoped, tag = 'internal scratch']
  #allocation2 [shape = 'f32[1,1]{1,0:T(1,128)S(1)}', space=vmem, size = 0x200, scoped, tag = 'scoped memory for tpu_custom_call.1']
  %s0 = inlined_call_operand.hbm [shape: bf16[128,16,256], index: 0, kind: input, shape index: {}]
  %s1 = inlined_call_operand.vmem [shape: bf16[128,128], index: 1, kind: input, shape index: {}]
  %s2 = inlined_call_operand.vmem [shape: bf16[256,128], index: 2, kind: input, shape index: {}]
  %s3 = inlined_call_operand.vmem [shape: f32[1,128], index: 3, kind: input, shape index: {}]
  %s4 = inlined_call_operand.vmem [shape: bf16[128,192], index: 4, kind: input, shape index: {}]
  %s5 = inlined_call_operand.vmem [shape: bf16[128,192], index: 5, kind: input, shape index: {}]
  %s6 = inlined_call_operand.vmem [shape: f32[1,192], index: 6, kind: input, shape index: {}]
  %s7 = inlined_call_operand.vmem [shape: bf16[192,128], index: 7, kind: input, shape index: {}]
  %s8 = inlined_call_operand.vmem [shape: f32[1,128], index: 8, kind: input, shape index: {}]
  %s9 = inlined_call_operand.vmem [shape: f32[128,1], index: 9, kind: input, shape index: {}]
  %s10 = inlined_call_operand.<no memory space> [shape: f32[1,1], index: 10, kind: input, shape index: {}]
  %s11 = inlined_call_operand.hbm [shape: f32[1,1,128], index: 11, kind: output, shape index: {}]
  %s12 = sld [smem:[#allocation0]]
  $region58: #{tpu_custom_call.1} parent=0
    _
  %s14 = ssub.s32 1, %s12
  %s15 = scalar_select 0, %s14, %s12
  %v16 = vstv %s10
  %17 = vst [vmem:[#allocation2] sm:$0x1] %v16
  $region1: #{tpu_custom_call.1} parent=0
    #allocation3 [shape = 'u8[1048576]{0}', space=vmem, size = 0x100000, scoped, tag = 'input window, operand 0, single buffered']
    #allocation4 [shape = 's32[1]{0}', space=sflag, size = 0x4, scoped, tag = 'scoped memory for tpu_custom_call.1']
    #allocation5 [shape = 's32[1]{0}', space=sflag, size = 0x4, scoped, tag = 'scoped memory for tpu_custom_call.1']
    #allocation6 [shape = 'u8[512]{0}', space=vmem, size = 0x400, scoped, tag = 'output window, operand 0, single buffered']
    %18 = vsyncpa [#allocation4], 0
    %19 = vsyncpa [#allocation5], 0
    // Predicated region
    $region2: #{tpu_custom_call.1} parent=1 // pred_check
      _
    $region3: #{tpu_custom_call.1} parent=1 // pred_check_branch
      %21 = sbr.rel (0) target = $region5
    $region4: #{tpu_custom_call.1} parent=1 // pred_region
      %s23 = ssub.s32 32768, 32768
      %24 = vsyncadd [#allocation4], %s23
      %s25 = sshll.u32 [#allocation3], 4
      %s26 = int_to_ptr.vmem [resolvable:$true] %s25
      %31 = dma.hbm_to_vmem [thread:$0]  %s0, 32768, %s26, [#allocation4], 128, 128, 8
    $region5: #{tpu_custom_call.1} parent=1 // pred_fallthru
      _
    // Predicated region
    $region6: #{tpu_custom_call.1} parent=1 // pred_check
      _
    $region7: #{tpu_custom_call.1} parent=1 // pred_check_branch
      %33 = sbr.rel (0) target = $region9
    $region8: #{tpu_custom_call.1} parent=1 // pred_region
      _
    $region9: #{tpu_custom_call.1} parent=1 // pred_fallthru
      _
    // Predicated region
    $region10: #{tpu_custom_call.1} parent=1 // pred_check
      _
    $region11: #{tpu_custom_call.1} parent=1 // pred_check_branch
      %35 = sbr.rel (0) target = $region13
    $region12: #{tpu_custom_call.1} parent=1 // pred_region
      _
    $region13: #{tpu_custom_call.1} parent=1 // pred_fallthru
      _
    // Predicated region
    $region14: #{tpu_custom_call.1} parent=1 // pred_check
      _
    $region15: #{tpu_custom_call.1} parent=1 // pred_check_branch
      %37 = sbr.rel (0) target = $region17
    $region16: #{tpu_custom_call.1} parent=1 // pred_region
      _
    $region17: #{tpu_custom_call.1} parent=1 // pred_fallthru
      _
    // Predicated region
    $region18: #{tpu_custom_call.1} parent=1 // pred_check
      _
    $region19: #{tpu_custom_call.1} parent=1 // pred_check_branch
      %39 = sbr.rel (0) target = $region21
    $region20: #{tpu_custom_call.1} parent=1 // pred_region
      _
    $region21: #{tpu_custom_call.1} parent=1 // pred_fallthru
      _
    // Predicated region
    $region22: #{tpu_custom_call.1} parent=1 // pred_check
      _
    $region23: #{tpu_custom_call.1} parent=1 // pred_check_branch
      %41 = sbr.rel (0) target = $region25
    $region24: #{tpu_custom_call.1} parent=1 // pred_region
      _
    $region25: #{tpu_custom_call.1} parent=1 // pred_fallthru
      _
    // Predicated region
    $region26: #{tpu_custom_call.1} parent=1 // pred_check
      _
    $region27: #{tpu_custom_call.1} parent=1 // pred_check_branch
      %43 = sbr.rel (0) target = $region29
    $region28: #{tpu_custom_call.1} parent=1 // pred_region
      _
    $region29: #{tpu_custom_call.1} parent=1 // pred_fallthru
      _
    // Predicated region
    $region30: #{tpu_custom_call.1} parent=1 // pred_check
      _
    $region31: #{tpu_custom_call.1} parent=1 // pred_check_branch
      %45 = sbr.rel (0) target = $region33
    $region32: #{tpu_custom_call.1} parent=1 // pred_region
      _
    $region33: #{tpu_custom_call.1} parent=1 // pred_fallthru
      _
    // Predicated region
    $region34: #{tpu_custom_call.1} parent=1 // pred_check
      _
    $region35: #{tpu_custom_call.1} parent=1 // pred_check_branch
      %47 = sbr.rel (0) target = $region37
    $region36: #{tpu_custom_call.1} parent=1 // pred_region
      _
    $region37: #{tpu_custom_call.1} parent=1 // pred_fallthru
      _
    // Predicated region
    $region38: #{tpu_custom_call.1} parent=1 // pred_check
      _
    $region39: #{tpu_custom_call.1} parent=1 // pred_check_branch
      %49 = sbr.rel (0) target = $region41
    $region40: #{tpu_custom_call.1} parent=1 // pred_region
      _
    $region41: #{tpu_custom_call.1} parent=1 // pred_fallthru
      _
    // Predicated region
    $region42: #{tpu_custom_call.1} parent=1 // pred_check
      _
    $region43: #{tpu_custom_call.1} parent=1 // pred_check_branch
      %51 = sbr.rel (0) target = $region45
    $region44: #{tpu_custom_call.1} parent=1 // pred_region
      _
    $region45: #{tpu_custom_call.1} parent=1 // pred_fallthru
      _
    // Predicated region
    $region46: #{tpu_custom_call.1} parent=1 // pred_check
      _
    $region47: #{tpu_custom_call.1} parent=1 // pred_check_branch
      %53 = sbr.rel (0) target = $region49
    $region48: #{tpu_custom_call.1} parent=1 // pred_region
      %54 = dma.done [#allocation4], 32768
    $region49: #{tpu_custom_call.1} parent=1 // pred_fallthru
      _
    %v56 = vld [vmem:[#allocation3] sm:$0xff]
    %v57 = vld [vmem:[#allocation3 + $0x8] sm:$0xff]
    %v58 = vld [vmem:[#allocation3 + $0x10] sm:$0xff]
    %v59 = vld [vmem:[#allocation3 + $0x18] sm:$0xff]
    %v60 = vld [vmem:[#allocation3 + $0x20] sm:$0xff]
    %v61 = vld [vmem:[#allocation3 + $0x28] sm:$0xff]
    %v62 = vld [vmem:[#allocation3 + $0x30] sm:$0xff]
    %v63 = vld [vmem:[#allocation3 + $0x38] sm:$0xff]
    %v64 = vld [vmem:[#allocation3 + $0x40] sm:$0xff]
    %v65 = vld [vmem:[#allocation3 + $0x48] sm:$0xff]
    %v66 = vld [vmem:[#allocation3 + $0x50] sm:$0xff]
    %v67 = vld [vmem:[#allocation3 + $0x58] sm:$0xff]
    %v68 = vld [vmem:[#allocation3 + $0x60] sm:$0xff]
    %v69 = vld [vmem:[#allocation3 + $0x68] sm:$0xff]
    %v70 = vld [vmem:[#allocation3 + $0x70] sm:$0xff]
    %v71 = vld [vmem:[#allocation3 + $0x78] sm:$0xff]
    %v72 = vld [vmem:[#allocation3 + $0x80] sm:$0xff]
    %v73 = vld [vmem:[#allocation3 + $0x88] sm:$0xff]
    %v74 = vld [vmem:[#allocation3 + $0x90] sm:$0xff]
    %v75 = vld [vmem:[#allocation3 + $0x98] sm:$0xff]
    %v76 = vld [vmem:[#allocation3 + $0xa0] sm:$0xff]
    %v77 = vld [vmem:[#allocation3 + $0xa8] sm:$0xff]
    %v78 = vld [vmem:[#allocation3 + $0xb0] sm:$0xff]
    %v79 = vld [vmem:[#allocation3 + $0xb8] sm:$0xff]
    %v80 = vld [vmem:[#allocation3 + $0xc0] sm:$0xff]
    %v81 = vld [vmem:[#allocation3 + $0xc8] sm:$0xff]
    %v82 = vld [vmem:[#allocation3 + $0xd0] sm:$0xff]
    %v83 = vld [vmem:[#allocation3 + $0xd8] sm:$0xff]
    %v84 = vld [vmem:[#allocation3 + $0xe0] sm:$0xff]
    %v85 = vld [vmem:[#allocation3 + $0xe8] sm:$0xff]
    %v86 = vld [vmem:[#allocation3 + $0xf0] sm:$0xff]
    %v87 = vld [vmem:[#allocation3 + $0xf8] sm:$0xff]
    %v88 = vld [vmem:[#allocation3 + $0x100] sm:$0xff]
    %v89 = vld [vmem:[#allocation3 + $0x108] sm:$0xff]
    %v90 = vld [vmem:[#allocation3 + $0x110] sm:$0xff]
    %v91 = vld [vmem:[#allocation3 + $0x118] sm:$0xff]
    %v92 = vld [vmem:[#allocation3 + $0x120] sm:$0xff]
    %v93 = vld [vmem:[#allocation3 + $0x128] sm:$0xff]
    %v94 = vld [vmem:[#allocation3 + $0x130] sm:$0xff]
    %v95 = vld [vmem:[#allocation3 + $0x138] sm:$0xff]
    %v96 = vld [vmem:[#allocation3 + $0x140] sm:$0xff]
    %v97 = vld [vmem:[#allocation3 + $0x148] sm:$0xff]
    %v98 = vld [vmem:[#allocation3 + $0x150] sm:$0xff]
    %v99 = vld [vmem:[#allocation3 + $0x158] sm:$0xff]
    %v100 = vld [vmem:[#allocation3 + $0x160] sm:$0xff]
    %v101 = vld [vmem:[#allocation3 + $0x168] sm:$0xff]
    %v102 = vld [vmem:[#allocation3 + $0x170] sm:$0xff]
    %v103 = vld [vmem:[#allocation3 + $0x178] sm:$0xff]
    %v104 = vld [vmem:[#allocation3 + $0x180] sm:$0xff]
    %v105 = vld [vmem:[#allocation3 + $0x188] sm:$0xff]
    %v106 = vld [vmem:[#allocation3 + $0x190] sm:$0xff]
    %v107 = vld [vmem:[#allocation3 + $0x198] sm:$0xff]
    %v108 = vld [vmem:[#allocation3 + $0x1a0] sm:$0xff]
    %v109 = vld [vmem:[#allocation3 + $0x1a8] sm:$0xff]
    %v110 = vld [vmem:[#allocation3 + $0x1b0] sm:$0xff]
    %v111 = vld [vmem:[#allocation3 + $0x1b8] sm:$0xff]
    %v112 = vld [vmem:[#allocation3 + $0x1c0] sm:$0xff]
    %v113 = vld [vmem:[#allocation3 + $0x1c8] sm:$0xff]
    %v114 = vld [vmem:[#allocation3 + $0x1d0] sm:$0xff]
    %v115 = vld [vmem:[#allocation3 + $0x1d8] sm:$0xff]
    %v116 = vld [vmem:[#allocation3 + $0x1e0] sm:$0xff]
    %v117 = vld [vmem:[#allocation3 + $0x1e8] sm:$0xff]
    %v118 = vld [vmem:[#allocation3 + $0x1f0] sm:$0xff]
    %v119 = vld [vmem:[#allocation3 + $0x1f8] sm:$0xff]
    %v120 = vld [vmem:[#allocation3 + $0x200] sm:$0xff]
    %v121 = vld [vmem:[#allocation3 + $0x208] sm:$0xff]
    %v122 = vld [vmem:[#allocation3 + $0x210] sm:$0xff]
    %v123 = vld [vmem:[#allocation3 + $0x218] sm:$0xff]
    %v124 = vld [vmem:[#allocation3 + $0x220] sm:$0xff]
    %v125 = vld [vmem:[#allocation3 + $0x228] sm:$0xff]
    %v126 = vld [vmem:[#allocation3 + $0x230] sm:$0xff]
    %v127 = vld [vmem:[#allocation3 + $0x238] sm:$0xff]
    %v128 = vld [vmem:[#allocation3 + $0x240] sm:$0xff]
    %v129 = vld [vmem:[#allocation3 + $0x248] sm:$0xff]
    %v130 = vld [vmem:[#allocation3 + $0x250] sm:$0xff]
    %v131 = vld [vmem:[#allocation3 + $0x258] sm:$0xff]
    %v132 = vld [vmem:[#allocation3 + $0x260] sm:$0xff]
    %v133 = vld [vmem:[#allocation3 + $0x268] sm:$0xff]
    %v134 = vld [vmem:[#allocation3 + $0x270] sm:$0xff]
    %v135 = vld [vmem:[#allocation3 + $0x278] sm:$0xff]
    %v136 = vld [vmem:[#allocation3 + $0x280] sm:$0xff]
    %v137 = vld [vmem:[#allocation3 + $0x288] sm:$0xff]
    %v138 = vld [vmem:[#allocation3 + $0x290] sm:$0xff]
    %v139 = vld [vmem:[#allocation3 + $0x298] sm:$0xff]
    %v140 = vld [vmem:[#allocation3 + $0x2a0] sm:$0xff]
    %v141 = vld [vmem:[#allocation3 + $0x2a8] sm:$0xff]
    %v142 = vld [vmem:[#allocation3 + $0x2b0] sm:$0xff]
    %v143 = vld [vmem:[#allocation3 + $0x2b8] sm:$0xff]
    %v144 = vld [vmem:[#allocation3 + $0x2c0] sm:$0xff]
    %v145 = vld [vmem:[#allocation3 + $0x2c8] sm:$0xff]
    %v146 = vld [vmem:[#allocation3 + $0x2d0] sm:$0xff]
    %v147 = vld [vmem:[#allocation3 + $0x2d8] sm:$0xff]
    %v148 = vld [vmem:[#allocation3 + $0x2e0] sm:$0xff]
    %v149 = vld [vmem:[#allocation3 + $0x2e8] sm:$0xff]
    %v150 = vld [vmem:[#allocation3 + $0x2f0] sm:$0xff]
    %v151 = vld [vmem:[#allocation3 + $0x2f8] sm:$0xff]
    %v152 = vld [vmem:[#allocation3 + $0x300] sm:$0xff]
    %v153 = vld [vmem:[#allocation3 + $0x308] sm:$0xff]
    %v154 = vld [vmem:[#allocation3 + $0x310] sm:$0xff]
    %v155 = vld [vmem:[#allocation3 + $0x318] sm:$0xff]
    %v156 = vld [vmem:[#allocation3 + $0x320] sm:$0xff]
    %v157 = vld [vmem:[#allocation3 + $0x328] sm:$0xff]
    %v158 = vld [vmem:[#allocation3 + $0x330] sm:$0xff]
    %v159 = vld [vmem:[#allocation3 + $0x338] sm:$0xff]
    %v160 = vld [vmem:[#allocation3 + $0x340] sm:$0xff]
    %v161 = vld [vmem:[#allocation3 + $0x348] sm:$0xff]
    %v162 = vld [vmem:[#allocation3 + $0x350] sm:$0xff]
    %v163 = vld [vmem:[#allocation3 + $0x358] sm:$0xff]
    %v164 = vld [vmem:[#allocation3 + $0x360] sm:$0xff]
    %v165 = vld [vmem:[#allocation3 + $0x368] sm:$0xff]
    %v166 = vld [vmem:[#allocation3 + $0x370] sm:$0xff]
    %v167 = vld [vmem:[#allocation3 + $0x378] sm:$0xff]
    %v168 = vld [vmem:[#allocation3 + $0x380] sm:$0xff]
    %v169 = vld [vmem:[#allocation3 + $0x388] sm:$0xff]
    %v170 = vld [vmem:[#allocation3 + $0x390] sm:$0xff]
    %v171 = vld [vmem:[#allocation3 + $0x398] sm:$0xff]
    %v172 = vld [vmem:[#allocation3 + $0x3a0] sm:$0xff]
    %v173 = vld [vmem:[#allocation3 + $0x3a8] sm:$0xff]
    %v174 = vld [vmem:[#allocation3 + $0x3b0] sm:$0xff]
    %v175 = vld [vmem:[#allocation3 + $0x3b8] sm:$0xff]
    %v176 = vld [vmem:[#allocation3 + $0x3c0] sm:$0xff]
    %v177 = vld [vmem:[#allocation3 + $0x3c8] sm:$0xff]
    %v178 = vld [vmem:[#allocation3 + $0x3d0] sm:$0xff]
    %v179 = vld [vmem:[#allocation3 + $0x3d8] sm:$0xff]
    %v180 = vld [vmem:[#allocation3 + $0x3e0] sm:$0xff]
    %v181 = vld [vmem:[#allocation3 + $0x3e8] sm:$0xff]
    %v182 = vld [vmem:[#allocation3 + $0x3f0] sm:$0xff]
    %v183 = vld [vmem:[#allocation3 + $0x3f8] sm:$0xff]
    %v184 = vld [vmem:[#allocation3 + $0x400] sm:$0xff]
    %v185 = vld [vmem:[#allocation3 + $0x408] sm:$0xff]
    %v186 = vld [vmem:[#allocation3 + $0x410] sm:$0xff]
    %v187 = vld [vmem:[#allocation3 + $0x418] sm:$0xff]
    %v188 = vld [vmem:[#allocation3 + $0x420] sm:$0xff]
    %v189 = vld [vmem:[#allocation3 + $0x428] sm:$0xff]
    %v190 = vld [vmem:[#allocation3 + $0x430] sm:$0xff]
    %v191 = vld [vmem:[#allocation3 + $0x438] sm:$0xff]
    %v192 = vld [vmem:[#allocation3 + $0x440] sm:$0xff]
    %v193 = vld [vmem:[#allocation3 + $0x448] sm:$0xff]
    %v194 = vld [vmem:[#allocation3 + $0x450] sm:$0xff]
    %v195 = vld [vmem:[#allocation3 + $0x458] sm:$0xff]
    %v196 = vld [vmem:[#allocation3 + $0x460] sm:$0xff]
    %v197 = vld [vmem:[#allocation3 + $0x468] sm:$0xff]
    %v198 = vld [vmem:[#allocation3 + $0x470] sm:$0xff]
    %v199 = vld [vmem:[#allocation3 + $0x478] sm:$0xff]
    %v200 = vld [vmem:[#allocation3 + $0x480] sm:$0xff]
    %v201 = vld [vmem:[#allocation3 + $0x488] sm:$0xff]
    %v202 = vld [vmem:[#allocation3 + $0x490] sm:$0xff]
    %v203 = vld [vmem:[#allocation3 + $0x498] sm:$0xff]
    %v204 = vld [vmem:[#allocation3 + $0x4a0] sm:$0xff]
    %v205 = vld [vmem:[#allocation3 + $0x4a8] sm:$0xff]
    %v206 = vld [vmem:[#allocation3 + $0x4b0] sm:$0xff]
    %v207 = vld [vmem:[#allocation3 + $0x4b8] sm:$0xff]
    %v208 = vld [vmem:[#allocation3 + $0x4c0] sm:$0xff]
    %v209 = vld [vmem:[#allocation3 + $0x4c8] sm:$0xff]
    %v210 = vld [vmem:[#allocation3 + $0x4d0] sm:$0xff]
    %v211 = vld [vmem:[#allocation3 + $0x4d8] sm:$0xff]
    %v212 = vld [vmem:[#allocation3 + $0x4e0] sm:$0xff]
    %v213 = vld [vmem:[#allocation3 + $0x4e8] sm:$0xff]
    %v214 = vld [vmem:[#allocation3 + $0x4f0] sm:$0xff]
    %v215 = vld [vmem:[#allocation3 + $0x4f8] sm:$0xff]
    %v216 = vld [vmem:[#allocation3 + $0x500] sm:$0xff]
    %v217 = vld [vmem:[#allocation3 + $0x508] sm:$0xff]
    %v218 = vld [vmem:[#allocation3 + $0x510] sm:$0xff]
    %v219 = vld [vmem:[#allocation3 + $0x518] sm:$0xff]
    %v220 = vld [vmem:[#allocation3 + $0x520] sm:$0xff]
    %v221 = vld [vmem:[#allocation3 + $0x528] sm:$0xff]
    %v222 = vld [vmem:[#allocation3 + $0x530] sm:$0xff]
    %v223 = vld [vmem:[#allocation3 + $0x538] sm:$0xff]
    %v224 = vld [vmem:[#allocation3 + $0x540] sm:$0xff]
    %v225 = vld [vmem:[#allocation3 + $0x548] sm:$0xff]
    %v226 = vld [vmem:[#allocation3 + $0x550] sm:$0xff]
    %v227 = vld [vmem:[#allocation3 + $0x558] sm:$0xff]
    %v228 = vld [vmem:[#allocation3 + $0x560] sm:$0xff]
    %v229 = vld [vmem:[#allocation3 + $0x568] sm:$0xff]
    %v230 = vld [vmem:[#allocation3 + $0x570] sm:$0xff]
    %v231 = vld [vmem:[#allocation3 + $0x578] sm:$0xff]
    %v232 = vld [vmem:[#allocation3 + $0x580] sm:$0xff]
    %v233 = vld [vmem:[#allocation3 + $0x588] sm:$0xff]
    %v234 = vld [vmem:[#allocation3 + $0x590] sm:$0xff]
    %v235 = vld [vmem:[#allocation3 + $0x598] sm:$0xff]
    %v236 = vld [vmem:[#allocation3 + $0x5a0] sm:$0xff]
    %v237 = vld [vmem:[#allocation3 + $0x5a8] sm:$0xff]
    %v238 = vld [vmem:[#allocation3 + $0x5b0] sm:$0xff]
    %v239 = vld [vmem:[#allocation3 + $0x5b8] sm:$0xff]
    %v240 = vld [vmem:[#allocation3 + $0x5c0] sm:$0xff]
    %v241 = vld [vmem:[#allocation3 + $0x5c8] sm:$0xff]
    %v242 = vld [vmem:[#allocation3 + $0x5d0] sm:$0xff]
    %v243 = vld [vmem:[#allocation3 + $0x5d8] sm:$0xff]
    %v244 = vld [vmem:[#allocation3 + $0x5e0] sm:$0xff]
    %v245 = vld [vmem:[#allocation3 + $0x5e8] sm:$0xff]
    %v246 = vld [vmem:[#allocation3 + $0x5f0] sm:$0xff]
    %v247 = vld [vmem:[#allocation3 + $0x5f8] sm:$0xff]
    %v248 = vld [vmem:[#allocation3 + $0x600] sm:$0xff]
    %v249 = vld [vmem:[#allocation3 + $0x608] sm:$0xff]
    %v250 = vld [vmem:[#allocation3 + $0x610] sm:$0xff]
    %v251 = vld [vmem:[#allocation3 + $0x618] sm:$0xff]
    %v252 = vld [vmem:[#allocation3 + $0x620] sm:$0xff]
    %v253 = vld [vmem:[#allocation3 + $0x628] sm:$0xff]
    %v254 = vld [vmem:[#allocation3 + $0x630] sm:$0xff]
    %v255 = vld [vmem:[#allocation3 + $0x638] sm:$0xff]
    %v256 = vld [vmem:[#allocation3 + $0x640] sm:$0xff]
    %v257 = vld [vmem:[#allocation3 + $0x648] sm:$0xff]
    %v258 = vld [vmem:[#allocation3 + $0x650] sm:$0xff]
    %v259 = vld [vmem:[#allocation3 + $0x658] sm:$0xff]
    %v260 = vld [vmem:[#allocation3 + $0x660] sm:$0xff]
    %v261 = vld [vmem:[#allocation3 + $0x668] sm:$0xff]
    %v262 = vld [vmem:[#allocation3 + $0x670] sm:$0xff]
    %v263 = vld [vmem:[#allocation3 + $0x678] sm:$0xff]
    %v264 = vld [vmem:[#allocation3 + $0x680] sm:$0xff]
    %v265 = vld [vmem:[#allocation3 + $0x688] sm:$0xff]
    %v266 = vld [vmem:[#allocation3 + $0x690] sm:$0xff]
    %v267 = vld [vmem:[#allocation3 + $0x698] sm:$0xff]
    %v268 = vld [vmem:[#allocation3 + $0x6a0] sm:$0xff]
    %v269 = vld [vmem:[#allocation3 + $0x6a8] sm:$0xff]
    %v270 = vld [vmem:[#allocation3 + $0x6b0] sm:$0xff]
    %v271 = vld [vmem:[#allocation3 + $0x6b8] sm:$0xff]
    %v272 = vld [vmem:[#allocation3 + $0x6c0] sm:$0xff]
    %v273 = vld [vmem:[#allocation3 + $0x6c8] sm:$0xff]
    %v274 = vld [vmem:[#allocation3 + $0x6d0] sm:$0xff]
    %v275 = vld [vmem:[#allocation3 + $0x6d8] sm:$0xff]
    %v276 = vld [vmem:[#allocation3 + $0x6e0] sm:$0xff]
    %v277 = vld [vmem:[#allocation3 + $0x6e8] sm:$0xff]
    %v278 = vld [vmem:[#allocation3 + $0x6f0] sm:$0xff]
    %v279 = vld [vmem:[#allocation3 + $0x6f8] sm:$0xff]
    %v280 = vld [vmem:[#allocation3 + $0x700] sm:$0xff]
    %v281 = vld [vmem:[#allocation3 + $0x708] sm:$0xff]
    %v282 = vld [vmem:[#allocation3 + $0x710] sm:$0xff]
    %v283 = vld [vmem:[#allocation3 + $0x718] sm:$0xff]
    %v284 = vld [vmem:[#allocation3 + $0x720] sm:$0xff]
    %v285 = vld [vmem:[#allocation3 + $0x728] sm:$0xff]
    %v286 = vld [vmem:[#allocation3 + $0x730] sm:$0xff]
    %v287 = vld [vmem:[#allocation3 + $0x738] sm:$0xff]
    %v288 = vld [vmem:[#allocation3 + $0x740] sm:$0xff]
    %v289 = vld [vmem:[#allocation3 + $0x748] sm:$0xff]
    %v290 = vld [vmem:[#allocation3 + $0x750] sm:$0xff]
    %v291 = vld [vmem:[#allocation3 + $0x758] sm:$0xff]
    %v292 = vld [vmem:[#allocation3 + $0x760] sm:$0xff]
    %v293 = vld [vmem:[#allocation3 + $0x768] sm:$0xff]
    %v294 = vld [vmem:[#allocation3 + $0x770] sm:$0xff]
    %v295 = vld [vmem:[#allocation3 + $0x778] sm:$0xff]
    %v296 = vld [vmem:[#allocation3 + $0x780] sm:$0xff]
    %v297 = vld [vmem:[#allocation3 + $0x788] sm:$0xff]
    %v298 = vld [vmem:[#allocation3 + $0x790] sm:$0xff]
    %v299 = vld [vmem:[#allocation3 + $0x798] sm:$0xff]
    %v300 = vld [vmem:[#allocation3 + $0x7a0] sm:$0xff]
    %v301 = vld [vmem:[#allocation3 + $0x7a8] sm:$0xff]
    %v302 = vld [vmem:[#allocation3 + $0x7b0] sm:$0xff]
    %v303 = vld [vmem:[#allocation3 + $0x7b8] sm:$0xff]
    %v304 = vld [vmem:[#allocation3 + $0x7c0] sm:$0xff]
    %v305 = vld [vmem:[#allocation3 + $0x7c8] sm:$0xff]
    %v306 = vld [vmem:[#allocation3 + $0x7d0] sm:$0xff]
    %v307 = vld [vmem:[#allocation3 + $0x7d8] sm:$0xff]
    %v308 = vld [vmem:[#allocation3 + $0x7e0] sm:$0xff]
    %v309 = vld [vmem:[#allocation3 + $0x7e8] sm:$0xff]
    %v310 = vld [vmem:[#allocation3 + $0x7f0] sm:$0xff]
    %v311 = vld [vmem:[#allocation3 + $0x7f8] sm:$0xff]
    %v312 = vld [vmem:[%s2] sm:$0xf]
    %v313 = vld [vmem:[%s2 + $0x4] sm:$0xf]
    %v314 = vld [vmem:[%s2 + $0x8] sm:$0xf]
    %v315 = vld [vmem:[%s2 + $0xc] sm:$0xf]
    %v316 = vld [vmem:[%s2 + $0x10] sm:$0xf]
    %v317 = vld [vmem:[%s2 + $0x14] sm:$0xf]
    %v318 = vld [vmem:[%s2 + $0x18] sm:$0xf]
    %v319 = vld [vmem:[%s2 + $0x1c] sm:$0xf]
    %v320 = vld [vmem:[%s2 + $0x20] sm:$0xf]
    %v321 = vld [vmem:[%s2 + $0x24] sm:$0xf]
    %v322 = vld [vmem:[%s2 + $0x28] sm:$0xf]
    %v323 = vld [vmem:[%s2 + $0x2c] sm:$0xf]
    %v324 = vld [vmem:[%s2 + $0x30] sm:$0xf]
    %v325 = vld [vmem:[%s2 + $0x34] sm:$0xf]
    %v326 = vld [vmem:[%s2 + $0x38] sm:$0xf]
    %v327 = vld [vmem:[%s2 + $0x3c] sm:$0xf]
    %v328 = vld [vmem:[%s2 + $0x40] sm:$0xf]
    %v329 = vld [vmem:[%s2 + $0x44] sm:$0xf]
    %v330 = vld [vmem:[%s2 + $0x48] sm:$0xf]
    %v331 = vld [vmem:[%s2 + $0x4c] sm:$0xf]
    %v332 = vld [vmem:[%s2 + $0x50] sm:$0xf]
    %v333 = vld [vmem:[%s2 + $0x54] sm:$0xf]
    %v334 = vld [vmem:[%s2 + $0x58] sm:$0xf]
    %v335 = vld [vmem:[%s2 + $0x5c] sm:$0xf]
    %v336 = vld [vmem:[%s2 + $0x60] sm:$0xf]
    %v337 = vld [vmem:[%s2 + $0x64] sm:$0xf]
    %v338 = vld [vmem:[%s2 + $0x68] sm:$0xf]
    %v339 = vld [vmem:[%s2 + $0x6c] sm:$0xf]
    %v340 = vld [vmem:[%s2 + $0x70] sm:$0xf]
    %v341 = vld [vmem:[%s2 + $0x74] sm:$0xf]
    %v342 = vld [vmem:[%s2 + $0x78] sm:$0xf]
    %v343 = vld [vmem:[%s2 + $0x7c] sm:$0xf]
    %v344 = vld [vmem:[%s3] sm:$0x1]
    %v346 = vlaneseq
    %v347 = vshrl.u32 %v346, 7
    %v348 = vsub.s32 0, %v347
    %v349 = vrot.slane %v344, %v348
    %v607 = vunpack.c.l.b16 %v56
    %v608 = vunpack.c.h.b16 %v56
    %v609 = vunpack.c.l.b16 %v57
    %v610 = vunpack.c.h.b16 %v57
    %v611 = vunpack.c.l.b16 %v58
    %v612 = vunpack.c.h.b16 %v58
    %v613 = vunpack.c.l.b16 %v59
    %v614 = vunpack.c.h.b16 %v59
    %v615 = vunpack.c.l.b16 %v60
    %v616 = vunpack.c.h.b16 %v60
    %v617 = vunpack.c.l.b16 %v61
    %v618 = vunpack.c.h.b16 %v61
    %v619 = vunpack.c.l.b16 %v62
    %v620 = vunpack.c.h.b16 %v62
    %v621 = vunpack.c.l.b16 %v63
    %v622 = vunpack.c.h.b16 %v63
    %v623 = vunpack.c.l.b16 %v64
    %v624 = vunpack.c.h.b16 %v64
    %v625 = vunpack.c.l.b16 %v65
    %v626 = vunpack.c.h.b16 %v65
    %v627 = vunpack.c.l.b16 %v66
    %v628 = vunpack.c.h.b16 %v66
    %v629 = vunpack.c.l.b16 %v67
    %v630 = vunpack.c.h.b16 %v67
    %v631 = vunpack.c.l.b16 %v68
    %v632 = vunpack.c.h.b16 %v68
    %v633 = vunpack.c.l.b16 %v69
    %v634 = vunpack.c.h.b16 %v69
    %v635 = vunpack.c.l.b16 %v70
    %v636 = vunpack.c.h.b16 %v70
    %v637 = vunpack.c.l.b16 %v71
    %v638 = vunpack.c.h.b16 %v71
    %v639 = vunpack.c.l.b16 %v72
    %v640 = vunpack.c.h.b16 %v72
    %v641 = vunpack.c.l.b16 %v73
    %v642 = vunpack.c.h.b16 %v73
    %v643 = vunpack.c.l.b16 %v74
    %v644 = vunpack.c.h.b16 %v74
    %v645 = vunpack.c.l.b16 %v75
    %v646 = vunpack.c.h.b16 %v75
    %v647 = vunpack.c.l.b16 %v76
    %v648 = vunpack.c.h.b16 %v76
    %v649 = vunpack.c.l.b16 %v77
    %v650 = vunpack.c.h.b16 %v77
    %v651 = vunpack.c.l.b16 %v78
    %v652 = vunpack.c.h.b16 %v78
    %v653 = vunpack.c.l.b16 %v79
    %v654 = vunpack.c.h.b16 %v79
    %v655 = vunpack.c.l.b16 %v80
    %v656 = vunpack.c.h.b16 %v80
    %v657 = vunpack.c.l.b16 %v81
    %v658 = vunpack.c.h.b16 %v81
    %v659 = vunpack.c.l.b16 %v82
    %v660 = vunpack.c.h.b16 %v82
    %v661 = vunpack.c.l.b16 %v83
    %v662 = vunpack.c.h.b16 %v83
    %v663 = vunpack.c.l.b16 %v84
    %v664 = vunpack.c.h.b16 %v84
    %v665 = vunpack.c.l.b16 %v85
    %v666 = vunpack.c.h.b16 %v85
    %v667 = vunpack.c.l.b16 %v86
    %v668 = vunpack.c.h.b16 %v86
    %v669 = vunpack.c.l.b16 %v87
    %v670 = vunpack.c.h.b16 %v87
    %v671 = vunpack.c.l.b16 %v88
    %v672 = vunpack.c.h.b16 %v88
    %v673 = vunpack.c.l.b16 %v89
    %v674 = vunpack.c.h.b16 %v89
    %v675 = vunpack.c.l.b16 %v90
    %v676 = vunpack.c.h.b16 %v90
    %v677 = vunpack.c.l.b16 %v91
    %v678 = vunpack.c.h.b16 %v91
    %v679 = vunpack.c.l.b16 %v92
    %v680 = vunpack.c.h.b16 %v92
    %v681 = vunpack.c.l.b16 %v93
    %v682 = vunpack.c.h.b16 %v93
    %v683 = vunpack.c.l.b16 %v94
    %v684 = vunpack.c.h.b16 %v94
    %v685 = vunpack.c.l.b16 %v95
    %v686 = vunpack.c.h.b16 %v95
    %v687 = vunpack.c.l.b16 %v96
    %v688 = vunpack.c.h.b16 %v96
    %v689 = vunpack.c.l.b16 %v97
    %v690 = vunpack.c.h.b16 %v97
    %v691 = vunpack.c.l.b16 %v98
    %v692 = vunpack.c.h.b16 %v98
    %v693 = vunpack.c.l.b16 %v99
    %v694 = vunpack.c.h.b16 %v99
    %v695 = vunpack.c.l.b16 %v100
    %v696 = vunpack.c.h.b16 %v100
    %v697 = vunpack.c.l.b16 %v101
    %v698 = vunpack.c.h.b16 %v101
    %v699 = vunpack.c.l.b16 %v102
    %v700 = vunpack.c.h.b16 %v102
    %v701 = vunpack.c.l.b16 %v103
    %v702 = vunpack.c.h.b16 %v103
    %v703 = vunpack.c.l.b16 %v104
    %v704 = vunpack.c.h.b16 %v104
    %v705 = vunpack.c.l.b16 %v105
    %v706 = vunpack.c.h.b16 %v105
    %v707 = vunpack.c.l.b16 %v106
    %v708 = vunpack.c.h.b16 %v106
    %v709 = vunpack.c.l.b16 %v107
    %v710 = vunpack.c.h.b16 %v107
    %v711 = vunpack.c.l.b16 %v108
    %v712 = vunpack.c.h.b16 %v108
    %v713 = vunpack.c.l.b16 %v109
    %v714 = vunpack.c.h.b16 %v109
    %v715 = vunpack.c.l.b16 %v110
    %v716 = vunpack.c.h.b16 %v110
    %v717 = vunpack.c.l.b16 %v111
    %v718 = vunpack.c.h.b16 %v111
    %v719 = vunpack.c.l.b16 %v112
    %v720 = vunpack.c.h.b16 %v112
    %v721 = vunpack.c.l.b16 %v113
    %v722 = vunpack.c.h.b16 %v113
    %v723 = vunpack.c.l.b16 %v114
    %v724 = vunpack.c.h.b16 %v114
    %v725 = vunpack.c.l.b16 %v115
    %v726 = vunpack.c.h.b16 %v115
    %v727 = vunpack.c.l.b16 %v116
    %v728 = vunpack.c.h.b16 %v116
    %v729 = vunpack.c.l.b16 %v117
    %v730 = vunpack.c.h.b16 %v117
    %v731 = vunpack.c.l.b16 %v118
    %v732 = vunpack.c.h.b16 %v118
    %v733 = vunpack.c.l.b16 %v119
    %v734 = vunpack.c.h.b16 %v119
    %v735 = vunpack.c.l.b16 %v120
    %v736 = vunpack.c.h.b16 %v120
    %v737 = vunpack.c.l.b16 %v121
    %v738 = vunpack.c.h.b16 %v121
    %v739 = vunpack.c.l.b16 %v122
    %v740 = vunpack.c.h.b16 %v122
    %v741 = vunpack.c.l.b16 %v123
    %v742 = vunpack.c.h.b16 %v123
    %v743 = vunpack.c.l.b16 %v124
    %v744 = vunpack.c.h.b16 %v124
    %v745 = vunpack.c.l.b16 %v125
    %v746 = vunpack.c.h.b16 %v125
    %v747 = vunpack.c.l.b16 %v126
    %v748 = vunpack.c.h.b16 %v126
    %v749 = vunpack.c.l.b16 %v127
    %v750 = vunpack.c.h.b16 %v127
    %v751 = vunpack.c.l.b16 %v128
    %v752 = vunpack.c.h.b16 %v128
    %v753 = vunpack.c.l.b16 %v129
    %v754 = vunpack.c.h.b16 %v129
    %v755 = vunpack.c.l.b16 %v130
    %v756 = vunpack.c.h.b16 %v130
    %v757 = vunpack.c.l.b16 %v131
    %v758 = vunpack.c.h.b16 %v131
    %v759 = vunpack.c.l.b16 %v132
    %v760 = vunpack.c.h.b16 %v132
    %v761 = vunpack.c.l.b16 %v133
    %v762 = vunpack.c.h.b16 %v133
    %v763 = vunpack.c.l.b16 %v134
    %v764 = vunpack.c.h.b16 %v134
    %v765 = vunpack.c.l.b16 %v135
    %v766 = vunpack.c.h.b16 %v135
    %v767 = vunpack.c.l.b16 %v136
    %v768 = vunpack.c.h.b16 %v136
    %v769 = vunpack.c.l.b16 %v137
    %v770 = vunpack.c.h.b16 %v137
    %v771 = vunpack.c.l.b16 %v138
    %v772 = vunpack.c.h.b16 %v138
    %v773 = vunpack.c.l.b16 %v139
    %v774 = vunpack.c.h.b16 %v139
    %v775 = vunpack.c.l.b16 %v140
    %v776 = vunpack.c.h.b16 %v140
    %v777 = vunpack.c.l.b16 %v141
    %v778 = vunpack.c.h.b16 %v141
    %v779 = vunpack.c.l.b16 %v142
    %v780 = vunpack.c.h.b16 %v142
    %v781 = vunpack.c.l.b16 %v143
    %v782 = vunpack.c.h.b16 %v143
    %v783 = vunpack.c.l.b16 %v144
    %v784 = vunpack.c.h.b16 %v144
    %v785 = vunpack.c.l.b16 %v145
    %v786 = vunpack.c.h.b16 %v145
    %v787 = vunpack.c.l.b16 %v146
    %v788 = vunpack.c.h.b16 %v146
    %v789 = vunpack.c.l.b16 %v147
    %v790 = vunpack.c.h.b16 %v147
    %v791 = vunpack.c.l.b16 %v148
    %v792 = vunpack.c.h.b16 %v148
    %v793 = vunpack.c.l.b16 %v149
    %v794 = vunpack.c.h.b16 %v149
    %v795 = vunpack.c.l.b16 %v150
    %v796 = vunpack.c.h.b16 %v150
    %v797 = vunpack.c.l.b16 %v151
    %v798 = vunpack.c.h.b16 %v151
    %v799 = vunpack.c.l.b16 %v152
    %v800 = vunpack.c.h.b16 %v152
    %v801 = vunpack.c.l.b16 %v153
    %v802 = vunpack.c.h.b16 %v153
    %v803 = vunpack.c.l.b16 %v154
    %v804 = vunpack.c.h.b16 %v154
    %v805 = vunpack.c.l.b16 %v155
    %v806 = vunpack.c.h.b16 %v155
    %v807 = vunpack.c.l.b16 %v156
    %v808 = vunpack.c.h.b16 %v156
    %v809 = vunpack.c.l.b16 %v157
    %v810 = vunpack.c.h.b16 %v157
    %v811 = vunpack.c.l.b16 %v158
    %v812 = vunpack.c.h.b16 %v158
    %v813 = vunpack.c.l.b16 %v159
    %v814 = vunpack.c.h.b16 %v159
    %v815 = vunpack.c.l.b16 %v160
    %v816 = vunpack.c.h.b16 %v160
    %v817 = vunpack.c.l.b16 %v161
    %v818 = vunpack.c.h.b16 %v161
    %v819 = vunpack.c.l.b16 %v162
    %v820 = vunpack.c.h.b16 %v162
    %v821 = vunpack.c.l.b16 %v163
    %v822 = vunpack.c.h.b16 %v163
    %v823 = vunpack.c.l.b16 %v164
    %v824 = vunpack.c.h.b16 %v164
    %v825 = vunpack.c.l.b16 %v165
    %v826 = vunpack.c.h.b16 %v165
    %v827 = vunpack.c.l.b16 %v166
    %v828 = vunpack.c.h.b16 %v166
    %v829 = vunpack.c.l.b16 %v167
    %v830 = vunpack.c.h.b16 %v167
    %v831 = vunpack.c.l.b16 %v168
    %v832 = vunpack.c.h.b16 %v168
    %v833 = vunpack.c.l.b16 %v169
    %v834 = vunpack.c.h.b16 %v169
    %v835 = vunpack.c.l.b16 %v170
    %v836 = vunpack.c.h.b16 %v170
    %v837 = vunpack.c.l.b16 %v171
    %v838 = vunpack.c.h.b16 %v171
    %v839 = vunpack.c.l.b16 %v172
    %v840 = vunpack.c.h.b16 %v172
    %v841 = vunpack.c.l.b16 %v173
    %v842 = vunpack.c.h.b16 %v173
    %v843 = vunpack.c.l.b16 %v174
    %v844 = vunpack.c.h.b16 %v174
    %v845 = vunpack.c.l.b16 %v175
    %v846 = vunpack.c.h.b16 %v175
    %v847 = vunpack.c.l.b16 %v176
    %v848 = vunpack.c.h.b16 %v176
    %v849 = vunpack.c.l.b16 %v177
    %v850 = vunpack.c.h.b16 %v177
    %v851 = vunpack.c.l.b16 %v178
    %v852 = vunpack.c.h.b16 %v178
    %v853 = vunpack.c.l.b16 %v179
    %v854 = vunpack.c.h.b16 %v179
    %v855 = vunpack.c.l.b16 %v180
    %v856 = vunpack.c.h.b16 %v180
    %v857 = vunpack.c.l.b16 %v181
    %v858 = vunpack.c.h.b16 %v181
    %v859 = vunpack.c.l.b16 %v182
    %v860 = vunpack.c.h.b16 %v182
    %v861 = vunpack.c.l.b16 %v183
    %v862 = vunpack.c.h.b16 %v183
    %v863 = vunpack.c.l.b16 %v184
    %v864 = vunpack.c.h.b16 %v184
    %v865 = vunpack.c.l.b16 %v185
    %v866 = vunpack.c.h.b16 %v185
    %v867 = vunpack.c.l.b16 %v186
    %v868 = vunpack.c.h.b16 %v186
    %v869 = vunpack.c.l.b16 %v187
    %v870 = vunpack.c.h.b16 %v187
    %v871 = vunpack.c.l.b16 %v188
    %v872 = vunpack.c.h.b16 %v188
    %v873 = vunpack.c.l.b16 %v189
    %v874 = vunpack.c.h.b16 %v189
    %v875 = vunpack.c.l.b16 %v190
    %v876 = vunpack.c.h.b16 %v190
    %v877 = vunpack.c.l.b16 %v191
    %v878 = vunpack.c.h.b16 %v191
    %v879 = vunpack.c.l.b16 %v192
    %v880 = vunpack.c.h.b16 %v192
    %v881 = vunpack.c.l.b16 %v193
    %v882 = vunpack.c.h.b16 %v193
    %v883 = vunpack.c.l.b16 %v194
    %v884 = vunpack.c.h.b16 %v194
    %v885 = vunpack.c.l.b16 %v195
    %v886 = vunpack.c.h.b16 %v195
    %v887 = vunpack.c.l.b16 %v196
    %v888 = vunpack.c.h.b16 %v196
    %v889 = vunpack.c.l.b16 %v197
    %v890 = vunpack.c.h.b16 %v197
    %v891 = vunpack.c.l.b16 %v198
    %v892 = vunpack.c.h.b16 %v198
    %v893 = vunpack.c.l.b16 %v199
    %v894 = vunpack.c.h.b16 %v199
    %v895 = vunpack.c.l.b16 %v200
    %v896 = vunpack.c.h.b16 %v200
    %v897 = vunpack.c.l.b16 %v201
    %v898 = vunpack.c.h.b16 %v201
    %v899 = vunpack.c.l.b16 %v202
    %v900 = vunpack.c.h.b16 %v202
    %v901 = vunpack.c.l.b16 %v203
    %v902 = vunpack.c.h.b16 %v203
    %v903 = vunpack.c.l.b16 %v204
    %v904 = vunpack.c.h.b16 %v204
    %v905 = vunpack.c.l.b16 %v205
    %v906 = vunpack.c.h.b16 %v205
    %v907 = vunpack.c.l.b16 %v206
    %v908 = vunpack.c.h.b16 %v206
    %v909 = vunpack.c.l.b16 %v207
    %v910 = vunpack.c.h.b16 %v207
    %v911 = vunpack.c.l.b16 %v208
    %v912 = vunpack.c.h.b16 %v208
    %v913 = vunpack.c.l.b16 %v209
    %v914 = vunpack.c.h.b16 %v209
    %v915 = vunpack.c.l.b16 %v210
    %v916 = vunpack.c.h.b16 %v210
    %v917 = vunpack.c.l.b16 %v211
    %v918 = vunpack.c.h.b16 %v211
    %v919 = vunpack.c.l.b16 %v212
    %v920 = vunpack.c.h.b16 %v212
    %v921 = vunpack.c.l.b16 %v213
    %v922 = vunpack.c.h.b16 %v213
    %v923 = vunpack.c.l.b16 %v214
    %v924 = vunpack.c.h.b16 %v214
    %v925 = vunpack.c.l.b16 %v215
    %v926 = vunpack.c.h.b16 %v215
    %v927 = vunpack.c.l.b16 %v216
    %v928 = vunpack.c.h.b16 %v216
    %v929 = vunpack.c.l.b16 %v217
    %v930 = vunpack.c.h.b16 %v217
    %v931 = vunpack.c.l.b16 %v218
    %v932 = vunpack.c.h.b16 %v218
    %v933 = vunpack.c.l.b16 %v219
    %v934 = vunpack.c.h.b16 %v219
    %v935 = vunpack.c.l.b16 %v220
    %v936 = vunpack.c.h.b16 %v220
    %v937 = vunpack.c.l.b16 %v221
    %v938 = vunpack.c.h.b16 %v221
    %v939 = vunpack.c.l.b16 %v222
    %v940 = vunpack.c.h.b16 %v222
    %v941 = vunpack.c.l.b16 %v223
    %v942 = vunpack.c.h.b16 %v223
    %v943 = vunpack.c.l.b16 %v224
    %v944 = vunpack.c.h.b16 %v224
    %v945 = vunpack.c.l.b16 %v225
    %v946 = vunpack.c.h.b16 %v225
    %v947 = vunpack.c.l.b16 %v226
    %v948 = vunpack.c.h.b16 %v226
    %v949 = vunpack.c.l.b16 %v227
    %v950 = vunpack.c.h.b16 %v227
    %v951 = vunpack.c.l.b16 %v228
    %v952 = vunpack.c.h.b16 %v228
    %v953 = vunpack.c.l.b16 %v229
    %v954 = vunpack.c.h.b16 %v229
    %v955 = vunpack.c.l.b16 %v230
    %v956 = vunpack.c.h.b16 %v230
    %v957 = vunpack.c.l.b16 %v231
    %v958 = vunpack.c.h.b16 %v231
    %v959 = vunpack.c.l.b16 %v232
    %v960 = vunpack.c.h.b16 %v232
    %v961 = vunpack.c.l.b16 %v233
    %v962 = vunpack.c.h.b16 %v233
    %v963 = vunpack.c.l.b16 %v234
    %v964 = vunpack.c.h.b16 %v234
    %v965 = vunpack.c.l.b16 %v235
    %v966 = vunpack.c.h.b16 %v235
    %v967 = vunpack.c.l.b16 %v236
    %v968 = vunpack.c.h.b16 %v236
    %v969 = vunpack.c.l.b16 %v237
    %v970 = vunpack.c.h.b16 %v237
    %v971 = vunpack.c.l.b16 %v238
    %v972 = vunpack.c.h.b16 %v238
    %v973 = vunpack.c.l.b16 %v239
    %v974 = vunpack.c.h.b16 %v239
    %v975 = vunpack.c.l.b16 %v240
    %v976 = vunpack.c.h.b16 %v240
    %v977 = vunpack.c.l.b16 %v241
    %v978 = vunpack.c.h.b16 %v241
    %v979 = vunpack.c.l.b16 %v242
    %v980 = vunpack.c.h.b16 %v242
    %v981 = vunpack.c.l.b16 %v243
    %v982 = vunpack.c.h.b16 %v243
    %v983 = vunpack.c.l.b16 %v244
    %v984 = vunpack.c.h.b16 %v244
    %v985 = vunpack.c.l.b16 %v245
    %v986 = vunpack.c.h.b16 %v245
    %v987 = vunpack.c.l.b16 %v246
    %v988 = vunpack.c.h.b16 %v246
    %v989 = vunpack.c.l.b16 %v247
    %v990 = vunpack.c.h.b16 %v247
    %v991 = vunpack.c.l.b16 %v248
    %v992 = vunpack.c.h.b16 %v248
    %v993 = vunpack.c.l.b16 %v249
    %v994 = vunpack.c.h.b16 %v249
    %v995 = vunpack.c.l.b16 %v250
    %v996 = vunpack.c.h.b16 %v250
    %v997 = vunpack.c.l.b16 %v251
    %v998 = vunpack.c.h.b16 %v251
    %v999 = vunpack.c.l.b16 %v252
    %v1000 = vunpack.c.h.b16 %v252
    %v1001 = vunpack.c.l.b16 %v253
    %v1002 = vunpack.c.h.b16 %v253
    %v1003 = vunpack.c.l.b16 %v254
    %v1004 = vunpack.c.h.b16 %v254
    %v1005 = vunpack.c.l.b16 %v255
    %v1006 = vunpack.c.h.b16 %v255
    %v1007 = vunpack.c.l.b16 %v256
    %v1008 = vunpack.c.h.b16 %v256
    %v1009 = vunpack.c.l.b16 %v257
    %v1010 = vunpack.c.h.b16 %v257
    %v1011 = vunpack.c.l.b16 %v258
    %v1012 = vunpack.c.h.b16 %v258
    %v1013 = vunpack.c.l.b16 %v259
    %v1014 = vunpack.c.h.b16 %v259
    %v1015 = vunpack.c.l.b16 %v260
    %v1016 = vunpack.c.h.b16 %v260
    %v1017 = vunpack.c.l.b16 %v261
    %v1018 = vunpack.c.h.b16 %v261
    %v1019 = vunpack.c.l.b16 %v262
    %v1020 = vunpack.c.h.b16 %v262
    %v1021 = vunpack.c.l.b16 %v263
    %v1022 = vunpack.c.h.b16 %v263
    %v1023 = vunpack.c.l.b16 %v264
    %v1024 = vunpack.c.h.b16 %v264
    %v1025 = vunpack.c.l.b16 %v265
    %v1026 = vunpack.c.h.b16 %v265
    %v1027 = vunpack.c.l.b16 %v266
    %v1028 = vunpack.c.h.b16 %v266
    %v1029 = vunpack.c.l.b16 %v267
    %v1030 = vunpack.c.h.b16 %v267
    %v1031 = vunpack.c.l.b16 %v268
    %v1032 = vunpack.c.h.b16 %v268
    %v1033 = vunpack.c.l.b16 %v269
    %v1034 = vunpack.c.h.b16 %v269
    %v1035 = vunpack.c.l.b16 %v270
    %v1036 = vunpack.c.h.b16 %v270
    %v1037 = vunpack.c.l.b16 %v271
    %v1038 = vunpack.c.h.b16 %v271
    %v1039 = vunpack.c.l.b16 %v272
    %v1040 = vunpack.c.h.b16 %v272
    %v1041 = vunpack.c.l.b16 %v273
    %v1042 = vunpack.c.h.b16 %v273
    %v1043 = vunpack.c.l.b16 %v274
    %v1044 = vunpack.c.h.b16 %v274
    %v1045 = vunpack.c.l.b16 %v275
    %v1046 = vunpack.c.h.b16 %v275
    %v1047 = vunpack.c.l.b16 %v276
    %v1048 = vunpack.c.h.b16 %v276
    %v1049 = vunpack.c.l.b16 %v277
    %v1050 = vunpack.c.h.b16 %v277
    %v1051 = vunpack.c.l.b16 %v278
    %v1052 = vunpack.c.h.b16 %v278
    %v1053 = vunpack.c.l.b16 %v279
    %v1054 = vunpack.c.h.b16 %v279
    %v1055 = vunpack.c.l.b16 %v280
    %v1056 = vunpack.c.h.b16 %v280
    %v1057 = vunpack.c.l.b16 %v281
    %v1058 = vunpack.c.h.b16 %v281
    %v1059 = vunpack.c.l.b16 %v282
    %v1060 = vunpack.c.h.b16 %v282
    %v1061 = vunpack.c.l.b16 %v283
    %v1062 = vunpack.c.h.b16 %v283
    %v1063 = vunpack.c.l.b16 %v284
    %v1064 = vunpack.c.h.b16 %v284
    %v1065 = vunpack.c.l.b16 %v285
    %v1066 = vunpack.c.h.b16 %v285
    %v1067 = vunpack.c.l.b16 %v286
    %v1068 = vunpack.c.h.b16 %v286
    %v1069 = vunpack.c.l.b16 %v287
    %v1070 = vunpack.c.h.b16 %v287
    %v1071 = vunpack.c.l.b16 %v288
    %v1072 = vunpack.c.h.b16 %v288
    %v1073 = vunpack.c.l.b16 %v289
    %v1074 = vunpack.c.h.b16 %v289
    %v1075 = vunpack.c.l.b16 %v290
    %v1076 = vunpack.c.h.b16 %v290
    %v1077 = vunpack.c.l.b16 %v291
    %v1078 = vunpack.c.h.b16 %v291
    %v1079 = vunpack.c.l.b16 %v292
    %v1080 = vunpack.c.h.b16 %v292
    %v1081 = vunpack.c.l.b16 %v293
    %v1082 = vunpack.c.h.b16 %v293
    %v1083 = vunpack.c.l.b16 %v294
    %v1084 = vunpack.c.h.b16 %v294
    %v1085 = vunpack.c.l.b16 %v295
    %v1086 = vunpack.c.h.b16 %v295
    %v1087 = vunpack.c.l.b16 %v296
    %v1088 = vunpack.c.h.b16 %v296
    %v1089 = vunpack.c.l.b16 %v297
    %v1090 = vunpack.c.h.b16 %v297
    %v1091 = vunpack.c.l.b16 %v298
    %v1092 = vunpack.c.h.b16 %v298
    %v1093 = vunpack.c.l.b16 %v299
    %v1094 = vunpack.c.h.b16 %v299
    %v1095 = vunpack.c.l.b16 %v300
    %v1096 = vunpack.c.h.b16 %v300
    %v1097 = vunpack.c.l.b16 %v301
    %v1098 = vunpack.c.h.b16 %v301
    %v1099 = vunpack.c.l.b16 %v302
    %v1100 = vunpack.c.h.b16 %v302
    %v1101 = vunpack.c.l.b16 %v303
    %v1102 = vunpack.c.h.b16 %v303
    %v1103 = vunpack.c.l.b16 %v304
    %v1104 = vunpack.c.h.b16 %v304
    %v1105 = vunpack.c.l.b16 %v305
    %v1106 = vunpack.c.h.b16 %v305
    %v1107 = vunpack.c.l.b16 %v306
    %v1108 = vunpack.c.h.b16 %v306
    %v1109 = vunpack.c.l.b16 %v307
    %v1110 = vunpack.c.h.b16 %v307
    %v1111 = vunpack.c.l.b16 %v308
    %v1112 = vunpack.c.h.b16 %v308
    %v1113 = vunpack.c.l.b16 %v309
    %v1114 = vunpack.c.h.b16 %v309
    %v1115 = vunpack.c.l.b16 %v310
    %v1116 = vunpack.c.h.b16 %v310
    %v1117 = vunpack.c.l.b16 %v311
    %v1118 = vunpack.c.h.b16 %v311
    %v1119 = vpack.c.b16 %v609, %v607
    %v1120 = vpack.c.b16 %v610, %v608
    %v1121 = vpack.c.b16 %v613, %v611
    %v1122 = vpack.c.b16 %v614, %v612
    %v1123 = vpack.c.b16 %v617, %v615
    %v1124 = vpack.c.b16 %v618, %v616
    %v1125 = vpack.c.b16 %v621, %v619
    %v1126 = vpack.c.b16 %v622, %v620
    %v1127 = vpack.c.b16 %v625, %v623
    %v1128 = vpack.c.b16 %v626, %v624
    %v1129 = vpack.c.b16 %v629, %v627
    %v1130 = vpack.c.b16 %v630, %v628
    %v1131 = vpack.c.b16 %v633, %v631
    %v1132 = vpack.c.b16 %v634, %v632
    %v1133 = vpack.c.b16 %v637, %v635
    %v1134 = vpack.c.b16 %v638, %v636
    %v1135 = vpack.c.b16 %v641, %v639
    %v1136 = vpack.c.b16 %v642, %v640
    %v1137 = vpack.c.b16 %v645, %v643
    %v1138 = vpack.c.b16 %v646, %v644
    %v1139 = vpack.c.b16 %v649, %v647
    %v1140 = vpack.c.b16 %v650, %v648
    %v1141 = vpack.c.b16 %v653, %v651
    %v1142 = vpack.c.b16 %v654, %v652
    %v1143 = vpack.c.b16 %v657, %v655
    %v1144 = vpack.c.b16 %v658, %v656
    %v1145 = vpack.c.b16 %v661, %v659
    %v1146 = vpack.c.b16 %v662, %v660
    %v1147 = vpack.c.b16 %v665, %v663
    %v1148 = vpack.c.b16 %v666, %v664
    %v1149 = vpack.c.b16 %v669, %v667
    %v1150 = vpack.c.b16 %v670, %v668
    %v1151 = vpack.c.b16 %v673, %v671
    %v1152 = vpack.c.b16 %v674, %v672
    %v1153 = vpack.c.b16 %v677, %v675
    %v1154 = vpack.c.b16 %v678, %v676
    %v1155 = vpack.c.b16 %v681, %v679
    %v1156 = vpack.c.b16 %v682, %v680
    %v1157 = vpack.c.b16 %v685, %v683
    %v1158 = vpack.c.b16 %v686, %v684
    %v1159 = vpack.c.b16 %v689, %v687
    %v1160 = vpack.c.b16 %v690, %v688
    %v1161 = vpack.c.b16 %v693, %v691
    %v1162 = vpack.c.b16 %v694, %v692
    %v1163 = vpack.c.b16 %v697, %v695
    %v1164 = vpack.c.b16 %v698, %v696
    %v1165 = vpack.c.b16 %v701, %v699
    %v1166 = vpack.c.b16 %v702, %v700
    %v1167 = vpack.c.b16 %v705, %v703
    %v1168 = vpack.c.b16 %v706, %v704
    %v1169 = vpack.c.b16 %v709, %v707
    %v1170 = vpack.c.b16 %v710, %v708
    %v1171 = vpack.c.b16 %v713, %v711
    %v1172 = vpack.c.b16 %v714, %v712
    %v1173 = vpack.c.b16 %v717, %v715
    %v1174 = vpack.c.b16 %v718, %v716
    %v1175 = vpack.c.b16 %v721, %v719
    %v1176 = vpack.c.b16 %v722, %v720
    %v1177 = vpack.c.b16 %v725, %v723
    %v1178 = vpack.c.b16 %v726, %v724
    %v1179 = vpack.c.b16 %v729, %v727
    %v1180 = vpack.c.b16 %v730, %v728
    %v1181 = vpack.c.b16 %v733, %v731
    %v1182 = vpack.c.b16 %v734, %v732
    %v1183 = vpack.c.b16 %v737, %v735
    %v1184 = vpack.c.b16 %v738, %v736
    %v1185 = vpack.c.b16 %v741, %v739
    %v1186 = vpack.c.b16 %v742, %v740
    %v1187 = vpack.c.b16 %v745, %v743
    %v1188 = vpack.c.b16 %v746, %v744
    %v1189 = vpack.c.b16 %v749, %v747
    %v1190 = vpack.c.b16 %v750, %v748
    %v1191 = vpack.c.b16 %v753, %v751
    %v1192 = vpack.c.b16 %v754, %v752
    %v1193 = vpack.c.b16 %v757, %v755
    %v1194 = vpack.c.b16 %v758, %v756
    %v1195 = vpack.c.b16 %v761, %v759
    %v1196 = vpack.c.b16 %v762, %v760
    %v1197 = vpack.c.b16 %v765, %v763
    %v1198 = vpack.c.b16 %v766, %v764
    %v1199 = vpack.c.b16 %v769, %v767
    %v1200 = vpack.c.b16 %v770, %v768
    %v1201 = vpack.c.b16 %v773, %v771
    %v1202 = vpack.c.b16 %v774, %v772
    %v1203 = vpack.c.b16 %v777, %v775
    %v1204 = vpack.c.b16 %v778, %v776
    %v1205 = vpack.c.b16 %v781, %v779
    %v1206 = vpack.c.b16 %v782, %v780
    %v1207 = vpack.c.b16 %v785, %v783
    %v1208 = vpack.c.b16 %v786, %v784
    %v1209 = vpack.c.b16 %v789, %v787
    %v1210 = vpack.c.b16 %v790, %v788
    %v1211 = vpack.c.b16 %v793, %v791
    %v1212 = vpack.c.b16 %v794, %v792
    %v1213 = vpack.c.b16 %v797, %v795
    %v1214 = vpack.c.b16 %v798, %v796
    %v1215 = vpack.c.b16 %v801, %v799
    %v1216 = vpack.c.b16 %v802, %v800
    %v1217 = vpack.c.b16 %v805, %v803
    %v1218 = vpack.c.b16 %v806, %v804
    %v1219 = vpack.c.b16 %v809, %v807
    %v1220 = vpack.c.b16 %v810, %v808
    %v1221 = vpack.c.b16 %v813, %v811
    %v1222 = vpack.c.b16 %v814, %v812
    %v1223 = vpack.c.b16 %v817, %v815
    %v1224 = vpack.c.b16 %v818, %v816
    %v1225 = vpack.c.b16 %v821, %v819
    %v1226 = vpack.c.b16 %v822, %v820
    %v1227 = vpack.c.b16 %v825, %v823
    %v1228 = vpack.c.b16 %v826, %v824
    %v1229 = vpack.c.b16 %v829, %v827
    %v1230 = vpack.c.b16 %v830, %v828
    %v1231 = vpack.c.b16 %v833, %v831
    %v1232 = vpack.c.b16 %v834, %v832
    %v1233 = vpack.c.b16 %v837, %v835
    %v1234 = vpack.c.b16 %v838, %v836
    %v1235 = vpack.c.b16 %v841, %v839
    %v1236 = vpack.c.b16 %v842, %v840
    %v1237 = vpack.c.b16 %v845, %v843
    %v1238 = vpack.c.b16 %v846, %v844
    %v1239 = vpack.c.b16 %v849, %v847
    %v1240 = vpack.c.b16 %v850, %v848
    %v1241 = vpack.c.b16 %v853, %v851
    %v1242 = vpack.c.b16 %v854, %v852
    %v1243 = vpack.c.b16 %v857, %v855
    %v1244 = vpack.c.b16 %v858, %v856
    %v1245 = vpack.c.b16 %v861, %v859
    %v1246 = vpack.c.b16 %v862, %v860
    %v1247 = vpack.c.b16 %v865, %v863
    %v1248 = vpack.c.b16 %v866, %v864
    %v1249 = vpack.c.b16 %v869, %v867
    %v1250 = vpack.c.b16 %v870, %v868
    %v1251 = vpack.c.b16 %v873, %v871
    %v1252 = vpack.c.b16 %v874, %v872
    %v1253 = vpack.c.b16 %v877, %v875
    %v1254 = vpack.c.b16 %v878, %v876
    %v1255 = vpack.c.b16 %v881, %v879
    %v1256 = vpack.c.b16 %v882, %v880
    %v1257 = vpack.c.b16 %v885, %v883
    %v1258 = vpack.c.b16 %v886, %v884
    %v1259 = vpack.c.b16 %v889, %v887
    %v1260 = vpack.c.b16 %v890, %v888
    %v1261 = vpack.c.b16 %v893, %v891
    %v1262 = vpack.c.b16 %v894, %v892
    %v1263 = vpack.c.b16 %v897, %v895
    %v1264 = vpack.c.b16 %v898, %v896
    %v1265 = vpack.c.b16 %v901, %v899
    %v1266 = vpack.c.b16 %v902, %v900
    %v1267 = vpack.c.b16 %v905, %v903
    %v1268 = vpack.c.b16 %v906, %v904
    %v1269 = vpack.c.b16 %v909, %v907
    %v1270 = vpack.c.b16 %v910, %v908
    %v1271 = vpack.c.b16 %v913, %v911
    %v1272 = vpack.c.b16 %v914, %v912
    %v1273 = vpack.c.b16 %v917, %v915
    %v1274 = vpack.c.b16 %v918, %v916
    %v1275 = vpack.c.b16 %v921, %v919
    %v1276 = vpack.c.b16 %v922, %v920
    %v1277 = vpack.c.b16 %v925, %v923
    %v1278 = vpack.c.b16 %v926, %v924
    %v1279 = vpack.c.b16 %v929, %v927
    %v1280 = vpack.c.b16 %v930, %v928
    %v1281 = vpack.c.b16 %v933, %v931
    %v1282 = vpack.c.b16 %v934, %v932
    %v1283 = vpack.c.b16 %v937, %v935
    %v1284 = vpack.c.b16 %v938, %v936
    %v1285 = vpack.c.b16 %v941, %v939
    %v1286 = vpack.c.b16 %v942, %v940
    %v1287 = vpack.c.b16 %v945, %v943
    %v1288 = vpack.c.b16 %v946, %v944
    %v1289 = vpack.c.b16 %v949, %v947
    %v1290 = vpack.c.b16 %v950, %v948
    %v1291 = vpack.c.b16 %v953, %v951
    %v1292 = vpack.c.b16 %v954, %v952
    %v1293 = vpack.c.b16 %v957, %v955
    %v1294 = vpack.c.b16 %v958, %v956
    %v1295 = vpack.c.b16 %v961, %v959
    %v1296 = vpack.c.b16 %v962, %v960
    %v1297 = vpack.c.b16 %v965, %v963
    %v1298 = vpack.c.b16 %v966, %v964
    %v1299 = vpack.c.b16 %v969, %v967
    %v1300 = vpack.c.b16 %v970, %v968
    %v1301 = vpack.c.b16 %v973, %v971
    %v1302 = vpack.c.b16 %v974, %v972
    %v1303 = vpack.c.b16 %v977, %v975
    %v1304 = vpack.c.b16 %v978, %v976
    %v1305 = vpack.c.b16 %v981, %v979
    %v1306 = vpack.c.b16 %v982, %v980
    %v1307 = vpack.c.b16 %v985, %v983
    %v1308 = vpack.c.b16 %v986, %v984
    %v1309 = vpack.c.b16 %v989, %v987
    %v1310 = vpack.c.b16 %v990, %v988
    %v1311 = vpack.c.b16 %v993, %v991
    %v1312 = vpack.c.b16 %v994, %v992
    %v1313 = vpack.c.b16 %v997, %v995
    %v1314 = vpack.c.b16 %v998, %v996
    %v1315 = vpack.c.b16 %v1001, %v999
    %v1316 = vpack.c.b16 %v1002, %v1000
    %v1317 = vpack.c.b16 %v1005, %v1003
    %v1318 = vpack.c.b16 %v1006, %v1004
    %v1319 = vpack.c.b16 %v1009, %v1007
    %v1320 = vpack.c.b16 %v1010, %v1008
    %v1321 = vpack.c.b16 %v1013, %v1011
    %v1322 = vpack.c.b16 %v1014, %v1012
    %v1323 = vpack.c.b16 %v1017, %v1015
    %v1324 = vpack.c.b16 %v1018, %v1016
    %v1325 = vpack.c.b16 %v1021, %v1019
    %v1326 = vpack.c.b16 %v1022, %v1020
    %v1327 = vpack.c.b16 %v1025, %v1023
    %v1328 = vpack.c.b16 %v1026, %v1024
    %v1329 = vpack.c.b16 %v1029, %v1027
    %v1330 = vpack.c.b16 %v1030, %v1028
    %v1331 = vpack.c.b16 %v1033, %v1031
    %v1332 = vpack.c.b16 %v1034, %v1032
    %v1333 = vpack.c.b16 %v1037, %v1035
    %v1334 = vpack.c.b16 %v1038, %v1036
    %v1335 = vpack.c.b16 %v1041, %v1039
    %v1336 = vpack.c.b16 %v1042, %v1040
    %v1337 = vpack.c.b16 %v1045, %v1043
    %v1338 = vpack.c.b16 %v1046, %v1044
    %v1339 = vpack.c.b16 %v1049, %v1047
    %v1340 = vpack.c.b16 %v1050, %v1048
    %v1341 = vpack.c.b16 %v1053, %v1051
    %v1342 = vpack.c.b16 %v1054, %v1052
    %v1343 = vpack.c.b16 %v1057, %v1055
    %v1344 = vpack.c.b16 %v1058, %v1056
    %v1345 = vpack.c.b16 %v1061, %v1059
    %v1346 = vpack.c.b16 %v1062, %v1060
    %v1347 = vpack.c.b16 %v1065, %v1063
    %v1348 = vpack.c.b16 %v1066, %v1064
    %v1349 = vpack.c.b16 %v1069, %v1067
    %v1350 = vpack.c.b16 %v1070, %v1068
    %v1351 = vpack.c.b16 %v1073, %v1071
    %v1352 = vpack.c.b16 %v1074, %v1072
    %v1353 = vpack.c.b16 %v1077, %v1075
    %v1354 = vpack.c.b16 %v1078, %v1076
    %v1355 = vpack.c.b16 %v1081, %v1079
    %v1356 = vpack.c.b16 %v1082, %v1080
    %v1357 = vpack.c.b16 %v1085, %v1083
    %v1358 = vpack.c.b16 %v1086, %v1084
    %v1359 = vpack.c.b16 %v1089, %v1087
    %v1360 = vpack.c.b16 %v1090, %v1088
    %v1361 = vpack.c.b16 %v1093, %v1091
    %v1362 = vpack.c.b16 %v1094, %v1092
    %v1363 = vpack.c.b16 %v1097, %v1095
    %v1364 = vpack.c.b16 %v1098, %v1096
    %v1365 = vpack.c.b16 %v1101, %v1099
    %v1366 = vpack.c.b16 %v1102, %v1100
    %v1367 = vpack.c.b16 %v1105, %v1103
    %v1368 = vpack.c.b16 %v1106, %v1104
    %v1369 = vpack.c.b16 %v1109, %v1107
    %v1370 = vpack.c.b16 %v1110, %v1108
    %v1371 = vpack.c.b16 %v1113, %v1111
    %v1372 = vpack.c.b16 %v1114, %v1112
    %v1373 = vpack.c.b16 %v1117, %v1115
    %v1374 = vpack.c.b16 %v1118, %v1116
    %v1663 = vunpack.c.l.b16 %v312
    %v1664 = vunpack.c.l.b16 %v313
    %v1665 = vunpack.c.l.b16 %v314
    %v1666 = vunpack.c.l.b16 %v315
    %v1667 = vunpack.c.l.b16 %v316
    %v1668 = vunpack.c.l.b16 %v317
    %v1669 = vunpack.c.l.b16 %v318
    %v1670 = vunpack.c.l.b16 %v319
    %v1671 = vunpack.c.l.b16 %v320
    %v1672 = vunpack.c.l.b16 %v321
    %v1673 = vunpack.c.l.b16 %v322
    %v1674 = vunpack.c.l.b16 %v323
    %v1675 = vunpack.c.l.b16 %v324
    %v1676 = vunpack.c.l.b16 %v325
    %v1677 = vunpack.c.l.b16 %v326
    %v1678 = vunpack.c.l.b16 %v327
    %v1679 = vunpack.c.l.b16 %v328
    %v1680 = vunpack.c.l.b16 %v329
    %v1681 = vunpack.c.l.b16 %v330
    %v1682 = vunpack.c.l.b16 %v331
    %v1683 = vunpack.c.l.b16 %v332
    %v1684 = vunpack.c.l.b16 %v333
    %v1685 = vunpack.c.l.b16 %v334
    %v1686 = vunpack.c.l.b16 %v335
    %v1687 = vunpack.c.l.b16 %v336
    %v1688 = vunpack.c.l.b16 %v337
    %v1689 = vunpack.c.l.b16 %v338
    %v1690 = vunpack.c.l.b16 %v339
    %v1691 = vunpack.c.l.b16 %v340
    %v1692 = vunpack.c.l.b16 %v341
    %v1693 = vunpack.c.l.b16 %v342
    %v1694 = vunpack.c.l.b16 %v343
    %v1695 = vpack.c.b16 %v1664, %v1663
    %v1696 = vpack.c.b16 %v1666, %v1665
    %v1697 = vpack.c.b16 %v1668, %v1667
    %v1698 = vpack.c.b16 %v1670, %v1669
    %v1699 = vpack.c.b16 %v1672, %v1671
    %v1700 = vpack.c.b16 %v1674, %v1673
    %v1701 = vpack.c.b16 %v1676, %v1675
    %v1702 = vpack.c.b16 %v1678, %v1677
    %v1703 = vpack.c.b16 %v1680, %v1679
    %v1704 = vpack.c.b16 %v1682, %v1681
    %v1705 = vpack.c.b16 %v1684, %v1683
    %v1706 = vpack.c.b16 %v1686, %v1685
    %v1707 = vpack.c.b16 %v1688, %v1687
    %v1708 = vpack.c.b16 %v1690, %v1689
    %v1709 = vpack.c.b16 %v1692, %v1691
    %v1710 = vpack.c.b16 %v1694, %v1693
    %1727 = vmatprep.subr.bf16.mxu0 0
    %1728 = vmatpush1.bf16.msra.mxu0 %v1695
    %1729 = vmatprep.subr.bf16.mxu0 0
    %1730 = vmatpush1.bf16.msra.mxu0 %v1696
    %1731 = vmatprep.subr.bf16.mxu0 0
    %1732 = vmatpush1.bf16.msra.mxu0 %v1697
    %1733 = vmatprep.subr.bf16.mxu0 0
    %1734 = vmatpush1.bf16.msra.mxu0 %v1698
    %1735 = vmatprep.subr.bf16.mxu0 0
    %1736 = vmatpush1.bf16.msra.mxu0 %v1699
    %1737 = vmatprep.subr.bf16.mxu0 0
    %1738 = vmatpush1.bf16.msra.mxu0 %v1700
    %1739 = vmatprep.subr.bf16.mxu0 0
    %1740 = vmatpush1.bf16.msra.mxu0 %v1701
    %1741 = vmatprep.subr.bf16.mxu0 0
    %1742 = vmatpush1.bf16.msra.mxu0 %v1702
    %1743 = vmatprep.subr.bf16.mxu0 0
    %1744 = vmatpush1.bf16.msra.mxu0 %v1703
    %1745 = vmatprep.subr.bf16.mxu0 0
    %1746 = vmatpush1.bf16.msra.mxu0 %v1704
    %1747 = vmatprep.subr.bf16.mxu0 0
    %1748 = vmatpush1.bf16.msra.mxu0 %v1705
    %1749 = vmatprep.subr.bf16.mxu0 0
    %1750 = vmatpush1.bf16.msra.mxu0 %v1706
    %1751 = vmatprep.subr.bf16.mxu0 0
    %1752 = vmatpush1.bf16.msra.mxu0 %v1707
    %1753 = vmatprep.subr.bf16.mxu0 0
    %1754 = vmatpush1.bf16.msra.mxu0 %v1708
    %1755 = vmatprep.subr.bf16.mxu0 0
    %1756 = vmatpush1.bf16.msra.mxu0 %v1709
    %1757 = vmatprep.subr.bf16.mxu0 0
    %1758 = vmatpush1.bf16.msra.mxu0 %v1710
    %1759 = vmatprep.mubr.bf16.mxu0 %v1120
    %1760 = vmatmul.mubr.bf16.gmra.mrb[0].mxu0 %v1119
    %v1761 = vpop.f32.mrb[0].mxu0
    %v1762 = vadd.f32 %v349, %v1761
    %v1763 = vpop.f32.mrb[0].mxu0
    %v1764 = vpop.f32.mrb[0].mxu0
    %v1765 = vadd.f32 %v349, %v1764
    %v1766 = vpop.f32.mrb[0].mxu0
    %1767 = vmatprep.mubr.bf16.mxu0 %v1122
    %1768 = vmatmul.mubr.bf16.gmra.mrb[0].mxu0 %v1121
    %v1769 = vpop.f32.mrb[0].mxu0
    %v1770 = vadd.f32 %v349, %v1769
    %v1771 = vpop.f32.mrb[0].mxu0
    %v1772 = vpop.f32.mrb[0].mxu0
    %v1773 = vadd.f32 %v349, %v1772
    %v1774 = vpop.f32.mrb[0].mxu0
    %1775 = vmatprep.mubr.bf16.mxu0 %v1124
    %1776 = vmatmul.mubr.bf16.gmra.mrb[0].mxu0 %v1123
    %v1777 = vpop.f32.mrb[0].mxu0
    %v1778 = vadd.f32 %v349, %v1777
    %v1779 = vpop.f32.mrb[0].mxu0
    %v1780 = vpop.f32.mrb[0].mxu0
    %v1781 = vadd.f32 %v349, %v1780
    %v1782 = vpop.f32.mrb[0].mxu0
    %1783 = vmatprep.mubr.bf16.mxu0 %v1126
    %1784 = vmatmul.mubr.bf16.gmra.mrb[0].mxu0 %v1125
    %v1785 = vpop.f32.mrb[0].mxu0
    %v1786 = vadd.f32 %v349, %v1785
    %v1787 = vpop.f32.mrb[0].mxu0
    %v1788 = vpop.f32.mrb[0].mxu0
    %v1789 = vadd.f32 %v349, %v1788
    %v1790 = vpop.f32.mrb[0].mxu0
    %1791 = vmatprep.mubr.bf16.mxu0 %v1128
    %1792 = vmatmul.mubr.bf16.gmra.mrb[0].mxu0 %v1127
    %v1793 = vpop.f32.mrb[0].mxu0
    %v1794 = vadd.f32 %v349, %v1793
    %v1795 = vpop.f32.mrb[0].mxu0
    %v1796 = vpop.f32.mrb[0].mxu0
    %v1797 = vadd.f32 %v349, %v1796
    %v1798 = vpop.f32.mrb[0].mxu0
    %1799 = vmatprep.mubr.bf16.mxu0 %v1130
    %1800 = vmatmul.mubr.bf16.gmra.mrb[0].mxu0 %v1129
    %v1801 = vpop.f32.mrb[0].mxu0
    %v1802 = vadd.f32 %v349, %v1801
    %v1803 = vpop.f32.mrb[0].mxu0
    %v1804 = vpop.f32.mrb[0].mxu0
    %v1805 = vadd.f32 %v349, %v1804
    %v1806 = vpop.f32.mrb[0].mxu0
    %1807 = vmatprep.mubr.bf16.mxu0 %v1132
    %1808 = vmatmul.mubr.bf16.gmra.mrb[0].mxu0 %v1131
    %v1809 = vpop.f32.mrb[0].mxu0
    %v1810 = vadd.f32 %v349, %v1809
    %v1811 = vpop.f32.mrb[0].mxu0
    %v1812 = vpop.f32.mrb[0].mxu0
    %v1813 = vadd.f32 %v349, %v1812
    %v1814 = vpop.f32.mrb[0].mxu0
    %1815 = vmatprep.mubr.bf16.mxu0 %v1134
    %1816 = vmatmul.mubr.bf16.gmra.mrb[0].mxu0 %v1133
    %v1817 = vpop.f32.mrb[0].mxu0
    %v1818 = vadd.f32 %v349, %v1817
    %v1819 = vpop.f32.mrb[0].mxu0
    %v1820 = vpop.f32.mrb[0].mxu0
    %v1821 = vadd.f32 %v349, %v1820
    %v1822 = vpop.f32.mrb[0].mxu0
    %1823 = vmatprep.mubr.bf16.mxu0 %v1136
    %1824 = vmatmul.mubr.bf16.gmra.mrb[0].mxu0 %v1135
    %v1825 = vpop.f32.mrb[0].mxu0
    %v1826 = vadd.f32 %v349, %v1825
    %v1827 = vpop.f32.mrb[0].mxu0
    %v1828 = vpop.f32.mrb[0].mxu0
    %v1829 = vadd.f32 %v349, %v1828
    %v1830 = vpop.f32.mrb[0].mxu0
    %1831 = vmatprep.mubr.bf16.mxu0 %v1138
    %1832 = vmatmul.mubr.bf16.gmra.mrb[0].mxu0 %v1137
    %v1833 = vpop.f32.mrb[0].mxu0
    %v1834 = vadd.f32 %v349, %v1833
    %v1835 = vpop.f32.mrb[0].mxu0
    %v1836 = vpop.f32.mrb[0].mxu0
    %v1837 = vadd.f32 %v349, %v1836
    %v1838 = vpop.f32.mrb[0].mxu0
    %1839 = vmatprep.mubr.bf16.mxu0 %v1140
    %1840 = vmatmul.mubr.bf16.gmra.mrb[0].mxu0 %v1139
    %v1841 = vpop.f32.mrb[0].mxu0
    %v1842 = vadd.f32 %v349, %v1841
    %v1843 = vpop.f32.mrb[0].mxu0
    %v1844 = vpop.f32.mrb[0].mxu0
    %v1845 = vadd.f32 %v349, %v1844
    %v1846 = vpop.f32.mrb[0].mxu0
    %1847 = vmatprep.mubr.bf16.mxu0 %v1142
    %1848 = vmatmul.mubr.bf16.gmra.mrb[0].mxu0 %v1141
    %v1849 = vpop.f32.mrb[0].mxu0
    %v1850 = vadd.f32 %v349, %v1849
    %v1851 = vpop.f32.mrb[0].mxu0
    %v1852 = vpop.f32.mrb[0].mxu0
    %v1853 = vadd.f32 %v349, %v1852
    %v1854 = vpop.f32.mrb[0].mxu0
    %1855 = vmatprep.mubr.bf16.mxu0 %v1144
    %1856 = vmatmul.mubr.bf16.gmra.mrb[0].mxu0 %v1143
    %v1857 = vpop.f32.mrb[0].mxu0
    %v1858 = vadd.f32 %v349, %v1857
    %v1859 = vpop.f32.mrb[0].mxu0
    %v1860 = vpop.f32.mrb[0].mxu0
    %v1861 = vadd.f32 %v349, %v1860
    %v1862 = vpop.f32.mrb[0].mxu0
    %1863 = vmatprep.mubr.bf16.mxu0 %v1146
    %1864 = vmatmul.mubr.bf16.gmra.mrb[0].mxu0 %v1145
    %v1865 = vpop.f32.mrb[0].mxu0
    %v1866 = vadd.f32 %v349, %v1865
    %v1867 = vpop.f32.mrb[0].mxu0
    %v1868 = vpop.f32.mrb[0].mxu0
    %v1869 = vadd.f32 %v349, %v1868
    %v1870 = vpop.f32.mrb[0].mxu0
    %1871 = vmatprep.mubr.bf16.mxu0 %v1148
    %1872 = vmatmul.mubr.bf16.gmra.mrb[0].mxu0 %v1147
    %v1873 = vpop.f32.mrb[0].mxu0
    %v1874 = vadd.f32 %v349, %v1873
    %v1875 = vpop.f32.mrb[0].mxu0
    %v1876 = vpop.f32.mrb[0].mxu0
    %v1877 = vadd.f32 %v349, %v1876
    %v1878 = vpop.f32.mrb[0].mxu0
    %1879 = vmatprep.mubr.bf16.mxu0 %v1150
    %1880 = vmatmul.mubr.bf16.gmra.mrb[0].mxu0 %v1149
    %v1881 = vpop.f32.mrb[0].mxu0
    %v1882 = vadd.f32 %v349, %v1881
    %v1883 = vpop.f32.mrb[0].mxu0
    %v1884 = vpop.f32.mrb[0].mxu0
    %v1885 = vadd.f32 %v349, %v1884
    %v1886 = vpop.f32.mrb[0].mxu0
    %1887 = vmatprep.mubr.bf16.mxu0 %v1152
    %1888 = vmatmul.mubr.bf16.gmra.mrb[0].mxu0 %v1151
    %v1889 = vpop.f32.mrb[0].mxu0
    %v1890 = vadd.f32 %v349, %v1889
    %v1891 = vpop.f32.mrb[0].mxu0
    %v1892 = vpop.f32.mrb[0].mxu0
    %v1893 = vadd.f32 %v349, %v1892
    %v1894 = vpop.f32.mrb[0].mxu0
    %1895 = vmatprep.mubr.bf16.mxu0 %v1154
    %1896 = vmatmul.mubr.bf16.gmra.mrb[0].mxu0 %v1153
    %v1897 = vpop.f32.mrb[0].mxu0
    %v1898 = vadd.f32 %v349, %v1897
    %v1899 = vpop.f32.mrb[0].mxu0
    %v1900 = vpop.f32.mrb[0].mxu0
    %v1901 = vadd.f32 %v349, %v1900
    %v1902 = vpop.f32.mrb[0].mxu0
    %1903 = vmatprep.mubr.bf16.mxu0 %v1156
    %1904 = vmatmul.mubr.bf16.gmra.mrb[0].mxu0 %v1155
    %v1905 = vpop.f32.mrb[0].mxu0
    %v1906 = vadd.f32 %v349, %v1905
    %v1907 = vpop.f32.mrb[0].mxu0
    %v1908 = vpop.f32.mrb[0].mxu0
    %v1909 = vadd.f32 %v349, %v1908
    %v1910 = vpop.f32.mrb[0].mxu0
    %1911 = vmatprep.mubr.bf16.mxu0 %v1158
    %1912 = vmatmul.mubr.bf16.gmra.mrb[0].mxu0 %v1157
    %v1913 = vpop.f32.mrb[0].mxu0
    %v1914 = vadd.f32 %v349, %v1913
    %v1915 = vpop.f32.mrb[0].mxu0
    %v1916 = vpop.f32.mrb[0].mxu0
    %v1917 = vadd.f32 %v349, %v1916
    %v1918 = vpop.f32.mrb[0].mxu0
    %1919 = vmatprep.mubr.bf16.mxu0 %v1160
    %1920 = vmatmul.mubr.bf16.gmra.mrb[0].mxu0 %v1159
    %v1921 = vpop.f32.mrb[0].mxu0
    %v1922 = vadd.f32 %v349, %v1921
    %v1923 = vpop.f32.mrb[0].mxu0
    %v1924 = vpop.f32.mrb[0].mxu0
    %v1925 = vadd.f32 %v349, %v1924
    %v1926 = vpop.f32.mrb[0].mxu0
    %1927 = vmatprep.mubr.bf16.mxu0 %v1162
    %1928 = vmatmul.mubr.bf16.gmra.mrb[0].mxu0 %v1161
    %v1929 = vpop.f32.mrb[0].mxu0
    %v1930 = vadd.f32 %v349, %v1929
    %v1931 = vpop.f32.mrb[0].mxu0
    %v1932 = vpop.f32.mrb[0].mxu0
    %v1933 = vadd.f32 %v349, %v1932
    %v1934 = vpop.f32.mrb[0].mxu0
    %1935 = vmatprep.mubr.bf16.mxu0 %v1164
    %1936 = vmatmul.mubr.bf16.gmra.mrb[0].mxu0 %v1163
    %v1937 = vpop.f32.mrb[0].mxu0
    %v1938 = vadd.f32 %v349, %v1937
    %v1939 = vpop.f32.mrb[0].mxu0
    %v1940 = vpop.f32.mrb[0].mxu0
    %v1941 = vadd.f32 %v349, %v1940
    %v1942 = vpop.f32.mrb[0].mxu0
    %1943 = vmatprep.mubr.bf16.mxu0 %v1166
    %1944 = vmatmul.mubr.bf16.gmra.mrb[0].mxu0 %v1165
    %v1945 = vpop.f32.mrb[0].mxu0
    %v1946 = vadd.f32 %v349, %v1945
    %v1947 = vpop.f32.mrb[0].mxu0
    %v1948 = vpop.f32.mrb[0].mxu0
    %v1949 = vadd.f32 %v349, %v1948
    %v1950 = vpop.f32.mrb[0].mxu0
    %1951 = vmatprep.mubr.bf16.mxu0 %v1168
    %1952 = vmatmul.mubr.bf16.gmra.mrb[0].mxu0 %v1167
    %v1953 = vpop.f32.mrb[0].mxu0
    %v1954 = vadd.f32 %v349, %v1953
    %v1955 = vpop.f32.mrb[0].mxu0
    %v1956 = vpop.f32.mrb[0].mxu0
    %v1957 = vadd.f32 %v349, %v1956
    %v1958 = vpop.f32.mrb[0].mxu0
    %1959 = vmatprep.mubr.bf16.mxu0 %v1170
    %1960 = vmatmul.mubr.bf16.gmra.mrb[0].mxu0 %v1169
    %v1961 = vpop.f32.mrb[0].mxu0
    %v1962 = vadd.f32 %v349, %v1961
    %v1963 = vpop.f32.mrb[0].mxu0
    %v1964 = vpop.f32.mrb[0].mxu0
    %v1965 = vadd.f32 %v349, %v1964
    %v1966 = vpop.f32.mrb[0].mxu0
    %1967 = vmatprep.mubr.bf16.mxu0 %v1172
    %1968 = vmatmul.mubr.bf16.gmra.mrb[0].mxu0 %v1171
    %v1969 = vpop.f32.mrb[0].mxu0
    %v1970 = vadd.f32 %v349, %v1969
    %v1971 = vpop.f32.mrb[0].mxu0
    %v1972 = vpop.f32.mrb[0].mxu0
    %v1973 = vadd.f32 %v349, %v1972
    %v1974 = vpop.f32.mrb[0].mxu0
    %1975 = vmatprep.mubr.bf16.mxu0 %v1174
    %1976 = vmatmul.mubr.bf16.gmra.mrb[0].mxu0 %v1173
    %v1977 = vpop.f32.mrb[0].mxu0
    %v1978 = vadd.f32 %v349, %v1977
    %v1979 = vpop.f32.mrb[0].mxu0
    %v1980 = vpop.f32.mrb[0].mxu0
    %v1981 = vadd.f32 %v349, %v1980
    %v1982 = vpop.f32.mrb[0].mxu0
    %1983 = vmatprep.mubr.bf16.mxu0 %v1176
    %1984 = vmatmul.mubr.bf16.gmra.mrb[0].mxu0 %v1175
    %v1985 = vpop.f32.mrb[0].mxu0
    %v1986 = vadd.f32 %v349, %v1985
    %v1987 = vpop.f32.mrb[0].mxu0
    %v1988 = vpop.f32.mrb[0].mxu0
    %v1989 = vadd.f32 %v349, %v1988
    %v1990 = vpop.f32.mrb[0].mxu0
    %1991 = vmatprep.mubr.bf16.mxu0 %v1178
    %1992 = vmatmul.mubr.bf16.gmra.mrb[0].mxu0 %v1177
    %v1993 = vpop.f32.mrb[0].mxu0
    %v1994 = vadd.f32 %v349, %v1993
    %v1995 = vpop.f32.mrb[0].mxu0
    %v1996 = vpop.f32.mrb[0].mxu0
    %v1997 = vadd.f32 %v349, %v1996
    %v1998 = vpop.f32.mrb[0].mxu0
    %1999 = vmatprep.mubr.bf16.mxu0 %v1180
    %2000 = vmatmul.mubr.bf16.gmra.mrb[0].mxu0 %v1179
    %v2001 = vpop.f32.mrb[0].mxu0
    %v2002 = vadd.f32 %v349, %v2001
    %v2003 = vpop.f32.mrb[0].mxu0
    %v2004 = vpop.f32.mrb[0].mxu0
    %v2005 = vadd.f32 %v349, %v2004
    %v2006 = vpop.f32.mrb[0].mxu0
    %2007 = vmatprep.mubr.bf16.mxu0 %v1182
    %2008 = vmatmul.mubr.bf16.gmra.mrb[0].mxu0 %v1181
    %v2009 = vpop.f32.mrb[0].mxu0
    %v2010 = vadd.f32 %v349, %v2009
    %v2011 = vpop.f32.mrb[0].mxu0
    %v2012 = vpop.f32.mrb[0].mxu0
    %v2013 = vadd.f32 %v349, %v2012
    %v2014 = vpop.f32.mrb[0].mxu0
    %2015 = vmatprep.mubr.bf16.mxu0 %v1184
    %2016 = vmatmul.mubr.bf16.gmra.mrb[0].mxu0 %v1183
    %v2017 = vpop.f32.mrb[0].mxu0
    %v2018 = vadd.f32 %v349, %v2017
    %v2019 = vpop.f32.mrb[0].mxu0
    %v2020 = vpop.f32.mrb[0].mxu0
    %v2021 = vadd.f32 %v349, %v2020
    %v2022 = vpop.f32.mrb[0].mxu0
    %2023 = vmatprep.mubr.bf16.mxu0 %v1186
    %2024 = vmatmul.mubr.bf16.gmra.mrb[0].mxu0 %v1185
    %v2025 = vpop.f32.mrb[0].mxu0
    %v2026 = vadd.f32 %v349, %v2025
    %v2027 = vpop.f32.mrb[0].mxu0
    %v2028 = vpop.f32.mrb[0].mxu0
    %v2029 = vadd.f32 %v349, %v2028
    %v2030 = vpop.f32.mrb[0].mxu0
    %2031 = vmatprep.mubr.bf16.mxu0 %v1188
    %2032 = vmatmul.mubr.bf16.gmra.mrb[0].mxu0 %v1187
    %v2033 = vpop.f32.mrb[0].mxu0
    %v2034 = vadd.f32 %v349, %v2033
    %v2035 = vpop.f32.mrb[0].mxu0
    %v2036 = vpop.f32.mrb[0].mxu0
    %v2037 = vadd.f32 %v349, %v2036
    %v2038 = vpop.f32.mrb[0].mxu0
    %2039 = vmatprep.mubr.bf16.mxu0 %v1190
    %2040 = vmatmul.mubr.bf16.gmra.mrb[0].mxu0 %v1189
    %v2041 = vpop.f32.mrb[0].mxu0
    %v2042 = vadd.f32 %v349, %v2041
    %v2043 = vpop.f32.mrb[0].mxu0
    %v2044 = vpop.f32.mrb[0].mxu0
    %v2045 = vadd.f32 %v349, %v2044
    %v2046 = vpop.f32.mrb[0].mxu0
    %2047 = vmatprep.mubr.bf16.mxu0 %v1192
    %2048 = vmatmul.mubr.bf16.gmra.mrb[0].mxu0 %v1191
    %v2049 = vpop.f32.mrb[0].mxu0
    %v2050 = vadd.f32 %v349, %v2049
    %v2051 = vpop.f32.mrb[0].mxu0
    %v2052 = vpop.f32.mrb[0].mxu0
    %v2053 = vadd.f32 %v349, %v2052
    %v2054 = vpop.f32.mrb[0].mxu0
    %2055 = vmatprep.mubr.bf16.mxu0 %v1194
    %2056 = vmatmul.mubr.bf16.gmra.mrb[0].mxu0 %v1193
    %v2057 = vpop.f32.mrb[0].mxu0
    %v2058 = vadd.f32 %v349, %v2057
    %v2059 = vpop.f32.mrb[0].mxu0
    %v2060 = vpop.f32.mrb[0].mxu0
    %v2061 = vadd.f32 %v349, %v2060
    %v2062 = vpop.f32.mrb[0].mxu0
    %2063 = vmatprep.mubr.bf16.mxu0 %v1196
    %2064 = vmatmul.mubr.bf16.gmra.mrb[0].mxu0 %v1195
    %v2065 = vpop.f32.mrb[0].mxu0
    %v2066 = vadd.f32 %v349, %v2065
    %v2067 = vpop.f32.mrb[0].mxu0
    %v2068 = vpop.f32.mrb[0].mxu0
    %v2069 = vadd.f32 %v349, %v2068
    %v2070 = vpop.f32.mrb[0].mxu0
    %2071 = vmatprep.mubr.bf16.mxu0 %v1198
    %2072 = vmatmul.mubr.bf16.gmra.mrb[0].mxu0 %v1197
    %v2073 = vpop.f32.mrb[0].mxu0
    %v2074 = vadd.f32 %v349, %v2073
    %v2075 = vpop.f32.mrb[0].mxu0
    %v2076 = vpop.f32.mrb[0].mxu0
    %v2077 = vadd.f32 %v349, %v2076
    %v2078 = vpop.f32.mrb[0].mxu0
    %2079 = vmatprep.mubr.bf16.mxu0 %v1200
    %2080 = vmatmul.mubr.bf16.gmra.mrb[0].mxu0 %v1199
    %v2081 = vpop.f32.mrb[0].mxu0
    %v2082 = vadd.f32 %v349, %v2081
    %v2083 = vpop.f32.mrb[0].mxu0
    %v2084 = vpop.f32.mrb[0].mxu0
    %v2085 = vadd.f32 %v349, %v2084
    %v2086 = vpop.f32.mrb[0].mxu0
    %2087 = vmatprep.mubr.bf16.mxu0 %v1202
    %2088 = vmatmul.mubr.bf16.gmra.mrb[0].mxu0 %v1201
    %v2089 = vpop.f32.mrb[0].mxu0
    %v2090 = vadd.f32 %v349, %v2089
    %v2091 = vpop.f32.mrb[0].mxu0
    %v2092 = vpop.f32.mrb[0].mxu0
    %v2093 = vadd.f32 %v349, %v2092
    %v2094 = vpop.f32.mrb[0].mxu0
    %2095 = vmatprep.mubr.bf16.mxu0 %v1204
    %2096 = vmatmul.mubr.bf16.gmra.mrb[0].mxu0 %v1203
    %v2097 = vpop.f32.mrb[0].mxu0
    %v2098 = vadd.f32 %v349, %v2097
    %v2099 = vpop.f32.mrb[0].mxu0
    %v2100 = vpop.f32.mrb[0].mxu0
    %v2101 = vadd.f32 %v349, %v2100
    %v2102 = vpop.f32.mrb[0].mxu0
    %2103 = vmatprep.mubr.bf16.mxu0 %v1206
    %2104 = vmatmul.mubr.bf16.gmra.mrb[0].mxu0 %v1205
    %v2105 = vpop.f32.mrb[0].mxu0
    %v2106 = vadd.f32 %v349, %v2105
    %v2107 = vpop.f32.mrb[0].mxu0
    %v2108 = vpop.f32.mrb[0].mxu0
    %v2109 = vadd.f32 %v349, %v2108
    %v2110 = vpop.f32.mrb[0].mxu0
    %2111 = vmatprep.mubr.bf16.mxu0 %v1208
    %2112 = vmatmul.mubr.bf16.gmra.mrb[0].mxu0 %v1207
    %v2113 = vpop.f32.mrb[0].mxu0
    %v2114 = vadd.f32 %v349, %v2113
    %v2115 = vpop.f32.mrb[0].mxu0
    %v2116 = vpop.f32.mrb[0].mxu0
    %v2117 = vadd.f32 %v349, %v2116
    %v2118 = vpop.f32.mrb[0].mxu0
    %2119 = vmatprep.mubr.bf16.mxu0 %v1210
    %2120 = vmatmul.mubr.bf16.gmra.mrb[0].mxu0 %v1209
    %v2121 = vpop.f32.mrb[0].mxu0
    %v2122 = vadd.f32 %v349, %v2121
    %v2123 = vpop.f32.mrb[0].mxu0
    %v2124 = vpop.f32.mrb[0].mxu0
    %v2125 = vadd.f32 %v349, %v2124
    %v2126 = vpop.f32.mrb[0].mxu0
    %2127 = vmatprep.mubr.bf16.mxu0 %v1212
    %2128 = vmatmul.mubr.bf16.gmra.mrb[0].mxu0 %v1211
    %v2129 = vpop.f32.mrb[0].mxu0
    %v2130 = vadd.f32 %v349, %v2129
    %v2131 = vpop.f32.mrb[0].mxu0
    %v2132 = vpop.f32.mrb[0].mxu0
    %v2133 = vadd.f32 %v349, %v2132
    %v2134 = vpop.f32.mrb[0].mxu0
    %2135 = vmatprep.mubr.bf16.mxu0 %v1214
    %2136 = vmatmul.mubr.bf16.gmra.mrb[0].mxu0 %v1213
    %v2137 = vpop.f32.mrb[0].mxu0
    %v2138 = vadd.f32 %v349, %v2137
    %v2139 = vpop.f32.mrb[0].mxu0
    %v2140 = vpop.f32.mrb[0].mxu0
    %v2141 = vadd.f32 %v349, %v2140
    %v2142 = vpop.f32.mrb[0].mxu0
    %2143 = vmatprep.mubr.bf16.mxu0 %v1216
    %2144 = vmatmul.mubr.bf16.gmra.mrb[0].mxu0 %v1215
    %v2145 = vpop.f32.mrb[0].mxu0
    %v2146 = vadd.f32 %v349, %v2145
    %v2147 = vpop.f32.mrb[0].mxu0
    %v2148 = vpop.f32.mrb[0].mxu0
    %v2149 = vadd.f32 %v349, %v2148
    %v2150 = vpop.f32.mrb[0].mxu0
    %2151 = vmatprep.mubr.bf16.mxu0 %v1218
    %2152 = vmatmul.mubr.bf16.gmra.mrb[0].mxu0 %v1217
    %v2153 = vpop.f32.mrb[0].mxu0
    %v2154 = vadd.f32 %v349, %v2153
    %v2155 = vpop.f32.mrb[0].mxu0
    %v2156 = vpop.f32.mrb[0].mxu0
    %v2157 = vadd.f32 %v349, %v2156
    %v2158 = vpop.f32.mrb[0].mxu0
    %2159 = vmatprep.mubr.bf16.mxu0 %v1220
    %2160 = vmatmul.mubr.bf16.gmra.mrb[0].mxu0 %v1219
    %v2161 = vpop.f32.mrb[0].mxu0
    %v2162 = vadd.f32 %v349, %v2161
    %v2163 = vpop.f32.mrb[0].mxu0
    %v2164 = vpop.f32.mrb[0].mxu0
    %v2165 = vadd.f32 %v349, %v2164
    %v2166 = vpop.f32.mrb[0].mxu0
    %2167 = vmatprep.mubr.bf16.mxu0 %v1222
    %2168 = vmatmul.mubr.bf16.gmra.mrb[0].mxu0 %v1221
    %v2169 = vpop.f32.mrb[0].mxu0
    %v2170 = vadd.f32 %v349, %v2169
    %v2171 = vpop.f32.mrb[0].mxu0
    %v2172 = vpop.f32.mrb[0].mxu0
    %v2173 = vadd.f32 %v349, %v2172
    %v2174 = vpop.f32.mrb[0].mxu0
    %2175 = vmatprep.mubr.bf16.mxu0 %v1224
    %2176 = vmatmul.mubr.bf16.gmra.mrb[0].mxu0 %v1223
    %v2177 = vpop.f32.mrb[0].mxu0
    %v2178 = vadd.f32 %v349, %v2177
    %v2179 = vpop.f32.mrb[0].mxu0
    %v2180 = vpop.f32.mrb[0].mxu0
    %v2181 = vadd.f32 %v349, %v2180
    %v2182 = vpop.f32.mrb[0].mxu0
    %2183 = vmatprep.mubr.bf16.mxu0 %v1226
    %2184 = vmatmul.mubr.bf16.gmra.mrb[0].mxu0 %v1225
    %v2185 = vpop.f32.mrb[0].mxu0
    %v2186 = vadd.f32 %v349, %v2185
    %v2187 = vpop.f32.mrb[0].mxu0
    %v2188 = vpop.f32.mrb[0].mxu0
    %v2189 = vadd.f32 %v349, %v2188
    %v2190 = vpop.f32.mrb[0].mxu0
    %2191 = vmatprep.mubr.bf16.mxu0 %v1228
    %2192 = vmatmul.mubr.bf16.gmra.mrb[0].mxu0 %v1227
    %v2193 = vpop.f32.mrb[0].mxu0
    %v2194 = vadd.f32 %v349, %v2193
    %v2195 = vpop.f32.mrb[0].mxu0
    %v2196 = vpop.f32.mrb[0].mxu0
    %v2197 = vadd.f32 %v349, %v2196
    %v2198 = vpop.f32.mrb[0].mxu0
    %2199 = vmatprep.mubr.bf16.mxu0 %v1230
    %2200 = vmatmul.mubr.bf16.gmra.mrb[0].mxu0 %v1229
    %v2201 = vpop.f32.mrb[0].mxu0
    %v2202 = vadd.f32 %v349, %v2201
    %v2203 = vpop.f32.mrb[0].mxu0
    %v2204 = vpop.f32.mrb[0].mxu0
    %v2205 = vadd.f32 %v349, %v2204
    %v2206 = vpop.f32.mrb[0].mxu0
    %2207 = vmatprep.mubr.bf16.mxu0 %v1232
    %2208 = vmatmul.mubr.bf16.gmra.mrb[0].mxu0 %v1231
    %v2209 = vpop.f32.mrb[0].mxu0
    %v2210 = vadd.f32 %v349, %v2209
    %v2211 = vpop.f32.mrb[0].mxu0
    %v2212 = vpop.f32.mrb[0].mxu0
    %v2213 = vadd.f32 %v349, %v2212
    %v2214 = vpop.f32.mrb[0].mxu0
    %2215 = vmatprep.mubr.bf16.mxu0 %v1234
    %2216 = vmatmul.mubr.bf16.gmra.mrb[0].mxu0 %v1233
    %v2217 = vpop.f32.mrb[0].mxu0
    %v2218 = vadd.f32 %v349, %v2217
    %v2219 = vpop.f32.mrb[0].mxu0
    %v2220 = vpop.f32.mrb[0].mxu0
    %v2221 = vadd.f32 %v349, %v2220
    %v2222 = vpop.f32.mrb[0].mxu0
    %2223 = vmatprep.mubr.bf16.mxu0 %v1236
    %2224 = vmatmul.mubr.bf16.gmra.mrb[0].mxu0 %v1235
    %v2225 = vpop.f32.mrb[0].mxu0
    %v2226 = vadd.f32 %v349, %v2225
    %v2227 = vpop.f32.mrb[0].mxu0
    %v2228 = vpop.f32.mrb[0].mxu0
    %v2229 = vadd.f32 %v349, %v2228
    %v2230 = vpop.f32.mrb[0].mxu0
    %2231 = vmatprep.mubr.bf16.mxu0 %v1238
    %2232 = vmatmul.mubr.bf16.gmra.mrb[0].mxu0 %v1237
    %v2233 = vpop.f32.mrb[0].mxu0
    %v2234 = vadd.f32 %v349, %v2233
    %v2235 = vpop.f32.mrb[0].mxu0
    %v2236 = vpop.f32.mrb[0].mxu0
    %v2237 = vadd.f32 %v349, %v2236
    %v2238 = vpop.f32.mrb[0].mxu0
    %2239 = vmatprep.mubr.bf16.mxu0 %v1240
    %2240 = vmatmul.mubr.bf16.gmra.mrb[0].mxu0 %v1239
    %v2241 = vpop.f32.mrb[0].mxu0
    %v2242 = vadd.f32 %v349, %v2241
    %v2243 = vpop.f32.mrb[0].mxu0
    %v2244 = vpop.f32.mrb[0].mxu0
    %v2245 = vadd.f32 %v349, %v2244
    %v2246 = vpop.f32.mrb[0].mxu0
    %2247 = vmatprep.mubr.bf16.mxu0 %v1242
    %2248 = vmatmul.mubr.bf16.gmra.mrb[0].mxu0 %v1241
    %v2249 = vpop.f32.mrb[0].mxu0
    %v2250 = vadd.f32 %v349, %v2249
    %v2251 = vpop.f32.mrb[0].mxu0
    %v2252 = vpop.f32.mrb[0].mxu0
    %v2253 = vadd.f32 %v349, %v2252
    %v2254 = vpop.f32.mrb[0].mxu0
    %2255 = vmatprep.mubr.bf16.mxu0 %v1244
    %2256 = vmatmul.mubr.bf16.gmra.mrb[0].mxu0 %v1243
    %v2257 = vpop.f32.mrb[0].mxu0
    %v2258 = vadd.f32 %v349, %v2257
    %v2259 = vpop.f32.mrb[0].mxu0
    %v2260 = vpop.f32.mrb[0].mxu0
    %v2261 = vadd.f32 %v349, %v2260
    %v2262 = vpop.f32.mrb[0].mxu0
    %2263 = vmatprep.mubr.bf16.mxu0 %v1246
    %2264 = vmatmul.mubr.bf16.gmra.mrb[0].mxu0 %v1245
    %v2265 = vpop.f32.mrb[0].mxu0
    %v2266 = vadd.f32 %v349, %v2265
    %v2267 = vpop.f32.mrb[0].mxu0
    %v2268 = vpop.f32.mrb[0].mxu0
    %v2269 = vadd.f32 %v349, %v2268
    %v2270 = vpop.f32.mrb[0].mxu0
    %2271 = vmatprep.mubr.bf16.mxu0 %v1248
    %2272 = vmatmul.mubr.bf16.gmra.mrb[0].mxu0 %v1247
    %v2273 = vpop.f32.mrb[0].mxu0
    %v2274 = vadd.f32 %v349, %v2273
    %v2275 = vpop.f32.mrb[0].mxu0
    %v2276 = vpop.f32.mrb[0].mxu0
    %v2277 = vadd.f32 %v349, %v2276
    %v2278 = vpop.f32.mrb[0].mxu0
    %2279 = vmatprep.mubr.bf16.mxu0 %v1250
    %2280 = vmatmul.mubr.bf16.gmra.mrb[0].mxu0 %v1249
    %v2281 = vpop.f32.mrb[0].mxu0
    %v2282 = vadd.f32 %v349, %v2281
    %v2283 = vpop.f32.mrb[0].mxu0
    %v2284 = vpop.f32.mrb[0].mxu0
    %v2285 = vadd.f32 %v349, %v2284
    %v2286 = vpop.f32.mrb[0].mxu0
    %2287 = vmatprep.mubr.bf16.mxu0 %v1252
    %2288 = vmatmul.mubr.bf16.gmra.mrb[0].mxu0 %v1251
    %v2289 = vpop.f32.mrb[0].mxu0
    %v2290 = vadd.f32 %v349, %v2289
    %v2291 = vpop.f32.mrb[0].mxu0
    %v2292 = vpop.f32.mrb[0].mxu0
    %v2293 = vadd.f32 %v349, %v2292
    %v2294 = vpop.f32.mrb[0].mxu0
    %2295 = vmatprep.mubr.bf16.mxu0 %v1254
    %2296 = vmatmul.mubr.bf16.gmra.mrb[0].mxu0 %v1253
    %v2297 = vpop.f32.mrb[0].mxu0
    %v2298 = vadd.f32 %v349, %v2297
    %v2299 = vpop.f32.mrb[0].mxu0
    %v2300 = vpop.f32.mrb[0].mxu0
    %v2301 = vadd.f32 %v349, %v2300
    %v2302 = vpop.f32.mrb[0].mxu0
    %2303 = vmatprep.mubr.bf16.mxu0 %v1256
    %2304 = vmatmul.mubr.bf16.gmra.mrb[0].mxu0 %v1255
    %v2305 = vpop.f32.mrb[0].mxu0
    %v2306 = vadd.f32 %v349, %v2305
    %v2307 = vpop.f32.mrb[0].mxu0
    %v2308 = vpop.f32.mrb[0].mxu0
    %v2309 = vadd.f32 %v349, %v2308
    %v2310 = vpop.f32.mrb[0].mxu0
    %2311 = vmatprep.mubr.bf16.mxu0 %v1258
    %2312 = vmatmul.mubr.bf16.gmra.mrb[0].mxu0 %v1257
    %v2313 = vpop.f32.mrb[0].mxu0
    %v2314 = vadd.f32 %v349, %v2313
    %v2315 = vpop.f32.mrb[0].mxu0
    %v2316 = vpop.f32.mrb[0].mxu0
    %v2317 = vadd.f32 %v349, %v2316
    %v2318 = vpop.f32.mrb[0].mxu0
    %2319 = vmatprep.mubr.bf16.mxu0 %v1260
    %2320 = vmatmul.mubr.bf16.gmra.mrb[0].mxu0 %v1259
    %v2321 = vpop.f32.mrb[0].mxu0
    %v2322 = vadd.f32 %v349, %v2321
    %v2323 = vpop.f32.mrb[0].mxu0
    %v2324 = vpop.f32.mrb[0].mxu0
    %v2325 = vadd.f32 %v349, %v2324
    %v2326 = vpop.f32.mrb[0].mxu0
    %2327 = vmatprep.mubr.bf16.mxu0 %v1262
    %2328 = vmatmul.mubr.bf16.gmra.mrb[0].mxu0 %v1261
    %v2329 = vpop.f32.mrb[0].mxu0
    %v2330 = vadd.f32 %v349, %v2329
    %v2331 = vpop.f32.mrb[0].mxu0
    %v2332 = vpop.f32.mrb[0].mxu0
    %v2333 = vadd.f32 %v349, %v2332
    %v2334 = vpop.f32.mrb[0].mxu0
    %2335 = vmatprep.mubr.bf16.mxu0 %v1264
    %2336 = vmatmul.mubr.bf16.gmra.mrb[0].mxu0 %v1263
    %v2337 = vpop.f32.mrb[0].mxu0
    %v2338 = vadd.f32 %v349, %v2337
    %v2339 = vpop.f32.mrb[0].mxu0
    %v2340 = vpop.f32.mrb[0].mxu0
    %v2341 = vadd.f32 %v349, %v2340
    %v2342 = vpop.f32.mrb[0].mxu0
    %2343 = vmatprep.mubr.bf16.mxu0 %v1266
    %2344 = vmatmul.mubr.bf16.gmra.mrb[0].mxu0 %v1265
    %v2345 = vpop.f32.mrb[0].mxu0
    %v2346 = vadd.f32 %v349, %v2345
    %v2347 = vpop.f32.mrb[0].mxu0
    %v2348 = vpop.f32.mrb[0].mxu0
    %v2349 = vadd.f32 %v349, %v2348
    %v2350 = vpop.f32.mrb[0].mxu0
    %2351 = vmatprep.mubr.bf16.mxu0 %v1268
    %2352 = vmatmul.mubr.bf16.gmra.mrb[0].mxu0 %v1267
    %v2353 = vpop.f32.mrb[0].mxu0
    %v2354 = vadd.f32 %v349, %v2353
    %v2355 = vpop.f32.mrb[0].mxu0
    %v2356 = vpop.f32.mrb[0].mxu0
    %v2357 = vadd.f32 %v349, %v2356
    %v2358 = vpop.f32.mrb[0].mxu0
    %2359 = vmatprep.mubr.bf16.mxu0 %v1270
    %2360 = vmatmul.mubr.bf16.gmra.mrb[0].mxu0 %v1269
    %v2361 = vpop.f32.mrb[0].mxu0
    %v2362 = vadd.f32 %v349, %v2361
    %v2363 = vpop.f32.mrb[0].mxu0
    %v2364 = vpop.f32.mrb[0].mxu0
    %v2365 = vadd.f32 %v349, %v2364
    %v2366 = vpop.f32.mrb[0].mxu0
    %2367 = vmatprep.mubr.bf16.mxu0 %v1272
    %2368 = vmatmul.mubr.bf16.gmra.mrb[0].mxu0 %v1271
    %v2369 = vpop.f32.mrb[0].mxu0
    %v2370 = vadd.f32 %v349, %v2369
    %v2371 = vpop.f32.mrb[0].mxu0
    %v2372 = vpop.f32.mrb[0].mxu0
    %v2373 = vadd.f32 %v349, %v2372
    %v2374 = vpop.f32.mrb[0].mxu0
    %2375 = vmatprep.mubr.bf16.mxu0 %v1274
    %2376 = vmatmul.mubr.bf16.gmra.mrb[0].mxu0 %v1273
    %v2377 = vpop.f32.mrb[0].mxu0
    %v2378 = vadd.f32 %v349, %v2377
    %v2379 = vpop.f32.mrb[0].mxu0
    %v2380 = vpop.f32.mrb[0].mxu0
    %v2381 = vadd.f32 %v349, %v2380
    %v2382 = vpop.f32.mrb[0].mxu0
    %2383 = vmatprep.mubr.bf16.mxu0 %v1276
    %2384 = vmatmul.mubr.bf16.gmra.mrb[0].mxu0 %v1275
    %v2385 = vpop.f32.mrb[0].mxu0
    %v2386 = vadd.f32 %v349, %v2385
    %v2387 = vpop.f32.mrb[0].mxu0
    %v2388 = vpop.f32.mrb[0].mxu0
    %v2389 = vadd.f32 %v349, %v2388
    %v2390 = vpop.f32.mrb[0].mxu0
    %2391 = vmatprep.mubr.bf16.mxu0 %v1278
    %2392 = vmatmul.mubr.bf16.gmra.mrb[0].mxu0 %v1277
    %v2393 = vpop.f32.mrb[0].mxu0
    %v2394 = vadd.f32 %v349, %v2393
    %v2395 = vpop.f32.mrb[0].mxu0
    %v2396 = vpop.f32.mrb[0].mxu0
    %v2397 = vadd.f32 %v349, %v2396
    %v2398 = vpop.f32.mrb[0].mxu0
    %2399 = vmatprep.mubr.bf16.mxu0 %v1280
    %2400 = vmatmul.mubr.bf16.gmra.mrb[0].mxu0 %v1279
    %v2401 = vpop.f32.mrb[0].mxu0
    %v2402 = vadd.f32 %v349, %v2401
    %v2403 = vpop.f32.mrb[0].mxu0
    %v2404 = vpop.f32.mrb[0].mxu0
    %v2405 = vadd.f32 %v349, %v2404
    %v2406 = vpop.f32.mrb[0].mxu0
    %2407 = vmatprep.mubr.bf16.mxu0 %v1282
    %2408 = vmatmul.mubr.bf16.gmra.mrb[0].mxu0 %v1281
    %v2409 = vpop.f32.mrb[0].mxu0
    %v2410 = vadd.f32 %v349, %v2409
    %v2411 = vpop.f32.mrb[0].mxu0
    %v2412 = vpop.f32.mrb[0].mxu0
    %v2413 = vadd.f32 %v349, %v2412
    %v2414 = vpop.f32.mrb[0].mxu0
    %2415 = vmatprep.mubr.bf16.mxu0 %v1284
    %2416 = vmatmul.mubr.bf16.gmra.mrb[0].mxu0 %v1283
    %v2417 = vpop.f32.mrb[0].mxu0
    %v2418 = vadd.f32 %v349, %v2417
    %v2419 = vpop.f32.mrb[0].mxu0
    %v2420 = vpop.f32.mrb[0].mxu0
    %v2421 = vadd.f32 %v349, %v2420
    %v2422 = vpop.f32.mrb[0].mxu0
    %2423 = vmatprep.mubr.bf16.mxu0 %v1286
    %2424 = vmatmul.mubr.bf16.gmra.mrb[0].mxu0 %v1285
    %v2425 = vpop.f32.mrb[0].mxu0
    %v2426 = vadd.f32 %v349, %v2425
    %v2427 = vpop.f32.mrb[0].mxu0
    %v2428 = vpop.f32.mrb[0].mxu0
    %v2429 = vadd.f32 %v349, %v2428
    %v2430 = vpop.f32.mrb[0].mxu0
    %2431 = vmatprep.mubr.bf16.mxu0 %v1288
    %2432 = vmatmul.mubr.bf16.gmra.mrb[0].mxu0 %v1287
    %v2433 = vpop.f32.mrb[0].mxu0
    %v2434 = vadd.f32 %v349, %v2433
    %v2435 = vpop.f32.mrb[0].mxu0
    %v2436 = vpop.f32.mrb[0].mxu0
    %v2437 = vadd.f32 %v349, %v2436
    %v2438 = vpop.f32.mrb[0].mxu0
    %2439 = vmatprep.mubr.bf16.mxu0 %v1290
    %2440 = vmatmul.mubr.bf16.gmra.mrb[0].mxu0 %v1289
    %v2441 = vpop.f32.mrb[0].mxu0
    %v2442 = vadd.f32 %v349, %v2441
    %v2443 = vpop.f32.mrb[0].mxu0
    %v2444 = vpop.f32.mrb[0].mxu0
    %v2445 = vadd.f32 %v349, %v2444
    %v2446 = vpop.f32.mrb[0].mxu0
    %2447 = vmatprep.mubr.bf16.mxu0 %v1292
    %2448 = vmatmul.mubr.bf16.gmra.mrb[0].mxu0 %v1291
    %v2449 = vpop.f32.mrb[0].mxu0
    %v2450 = vadd.f32 %v349, %v2449
    %v2451 = vpop.f32.mrb[0].mxu0
    %v2452 = vpop.f32.mrb[0].mxu0
    %v2453 = vadd.f32 %v349, %v2452
    %v2454 = vpop.f32.mrb[0].mxu0
    %2455 = vmatprep.mubr.bf16.mxu0 %v1294
    %2456 = vmatmul.mubr.bf16.gmra.mrb[0].mxu0 %v1293
    %v2457 = vpop.f32.mrb[0].mxu0
    %v2458 = vadd.f32 %v349, %v2457
    %v2459 = vpop.f32.mrb[0].mxu0
    %v2460 = vpop.f32.mrb[0].mxu0
    %v2461 = vadd.f32 %v349, %v2460
    %v2462 = vpop.f32.mrb[0].mxu0
    %2463 = vmatprep.mubr.bf16.mxu0 %v1296
    %2464 = vmatmul.mubr.bf16.gmra.mrb[0].mxu0 %v1295
    %v2465 = vpop.f32.mrb[0].mxu0
    %v2466 = vadd.f32 %v349, %v2465
    %v2467 = vpop.f32.mrb[0].mxu0
    %v2468 = vpop.f32.mrb[0].mxu0
    %v2469 = vadd.f32 %v349, %v2468
    %v2470 = vpop.f32.mrb[0].mxu0
    %2471 = vmatprep.mubr.bf16.mxu0 %v1298
    %2472 = vmatmul.mubr.bf16.gmra.mrb[0].mxu0 %v1297
    %v2473 = vpop.f32.mrb[0].mxu0
    %v2474 = vadd.f32 %v349, %v2473
    %v2475 = vpop.f32.mrb[0].mxu0
    %v2476 = vpop.f32.mrb[0].mxu0
    %v2477 = vadd.f32 %v349, %v2476
    %v2478 = vpop.f32.mrb[0].mxu0
    %2479 = vmatprep.mubr.bf16.mxu0 %v1300
    %2480 = vmatmul.mubr.bf16.gmra.mrb[0].mxu0 %v1299
    %v2481 = vpop.f32.mrb[0].mxu0
    %v2482 = vadd.f32 %v349, %v2481
    %v2483 = vpop.f32.mrb[0].mxu0
    %v2484 = vpop.f32.mrb[0].mxu0
    %v2485 = vadd.f32 %v349, %v2484
    %v2486 = vpop.f32.mrb[0].mxu0
    %2487 = vmatprep.mubr.bf16.mxu0 %v1302
    %2488 = vmatmul.mubr.bf16.gmra.mrb[0].mxu0 %v1301
    %v2489 = vpop.f32.mrb[0].mxu0
    %v2490 = vadd.f32 %v349, %v2489
    %v2491 = vpop.f32.mrb[0].mxu0
    %v2492 = vpop.f32.mrb[0].mxu0
    %v2493 = vadd.f32 %v349, %v2492
    %v2494 = vpop.f32.mrb[0].mxu0
    %2495 = vmatprep.mubr.bf16.mxu0 %v1304
    %2496 = vmatmul.mubr.bf16.gmra.mrb[0].mxu0 %v1303
    %v2497 = vpop.f32.mrb[0].mxu0
    %v2498 = vadd.f32 %v349, %v2497
    %v2499 = vpop.f32.mrb[0].mxu0
    %v2500 = vpop.f32.mrb[0].mxu0
    %v2501 = vadd.f32 %v349, %v2500
    %v2502 = vpop.f32.mrb[0].mxu0
    %2503 = vmatprep.mubr.bf16.mxu0 %v1306
    %2504 = vmatmul.mubr.bf16.gmra.mrb[0].mxu0 %v1305
    %v2505 = vpop.f32.mrb[0].mxu0
    %v2506 = vadd.f32 %v349, %v2505
    %v2507 = vpop.f32.mrb[0].mxu0
    %v2508 = vpop.f32.mrb[0].mxu0
    %v2509 = vadd.f32 %v349, %v2508
    %v2510 = vpop.f32.mrb[0].mxu0
    %2511 = vmatprep.mubr.bf16.mxu0 %v1308
    %2512 = vmatmul.mubr.bf16.gmra.mrb[0].mxu0 %v1307
    %v2513 = vpop.f32.mrb[0].mxu0
    %v2514 = vadd.f32 %v349, %v2513
    %v2515 = vpop.f32.mrb[0].mxu0
    %v2516 = vpop.f32.mrb[0].mxu0
    %v2517 = vadd.f32 %v349, %v2516
    %v2518 = vpop.f32.mrb[0].mxu0
    %2519 = vmatprep.mubr.bf16.mxu0 %v1310
    %2520 = vmatmul.mubr.bf16.gmra.mrb[0].mxu0 %v1309
    %v2521 = vpop.f32.mrb[0].mxu0
    %v2522 = vadd.f32 %v349, %v2521
    %v2523 = vpop.f32.mrb[0].mxu0
    %v2524 = vpop.f32.mrb[0].mxu0
    %v2525 = vadd.f32 %v349, %v2524
    %v2526 = vpop.f32.mrb[0].mxu0
    %2527 = vmatprep.mubr.bf16.mxu0 %v1312
    %2528 = vmatmul.mubr.bf16.gmra.mrb[0].mxu0 %v1311
    %v2529 = vpop.f32.mrb[0].mxu0
    %v2530 = vadd.f32 %v349, %v2529
    %v2531 = vpop.f32.mrb[0].mxu0
    %v2532 = vpop.f32.mrb[0].mxu0
    %v2533 = vadd.f32 %v349, %v2532
    %v2534 = vpop.f32.mrb[0].mxu0
    %2535 = vmatprep.mubr.bf16.mxu0 %v1314
    %2536 = vmatmul.mubr.bf16.gmra.mrb[0].mxu0 %v1313
    %v2537 = vpop.f32.mrb[0].mxu0
    %v2538 = vadd.f32 %v349, %v2537
    %v2539 = vpop.f32.mrb[0].mxu0
    %v2540 = vpop.f32.mrb[0].mxu0
    %v2541 = vadd.f32 %v349, %v2540
    %v2542 = vpop.f32.mrb[0].mxu0
    %2543 = vmatprep.mubr.bf16.mxu0 %v1316
    %2544 = vmatmul.mubr.bf16.gmra.mrb[0].mxu0 %v1315
    %v2545 = vpop.f32.mrb[0].mxu0
    %v2546 = vadd.f32 %v349, %v2545
    %v2547 = vpop.f32.mrb[0].mxu0
    %v2548 = vpop.f32.mrb[0].mxu0
    %v2549 = vadd.f32 %v349, %v2548
    %v2550 = vpop.f32.mrb[0].mxu0
    %2551 = vmatprep.mubr.bf16.mxu0 %v1318
    %2552 = vmatmul.mubr.bf16.gmra.mrb[0].mxu0 %v1317
    %v2553 = vpop.f32.mrb[0].mxu0
    %v2554 = vadd.f32 %v349, %v2553
    %v2555 = vpop.f32.mrb[0].mxu0
    %v2556 = vpop.f32.mrb[0].mxu0
    %v2557 = vadd.f32 %v349, %v2556
    %v2558 = vpop.f32.mrb[0].mxu0
    %2559 = vmatprep.mubr.bf16.mxu0 %v1320
    %2560 = vmatmul.mubr.bf16.gmra.mrb[0].mxu0 %v1319
    %v2561 = vpop.f32.mrb[0].mxu0
    %v2562 = vadd.f32 %v349, %v2561
    %v2563 = vpop.f32.mrb[0].mxu0
    %v2564 = vpop.f32.mrb[0].mxu0
    %v2565 = vadd.f32 %v349, %v2564
    %v2566 = vpop.f32.mrb[0].mxu0
    %2567 = vmatprep.mubr.bf16.mxu0 %v1322
    %2568 = vmatmul.mubr.bf16.gmra.mrb[0].mxu0 %v1321
    %v2569 = vpop.f32.mrb[0].mxu0
    %v2570 = vadd.f32 %v349, %v2569
    %v2571 = vpop.f32.mrb[0].mxu0
    %v2572 = vpop.f32.mrb[0].mxu0
    %v2573 = vadd.f32 %v349, %v2572
    %v2574 = vpop.f32.mrb[0].mxu0
    %2575 = vmatprep.mubr.bf16.mxu0 %v1324
    %2576 = vmatmul.mubr.bf16.gmra.mrb[0].mxu0 %v1323
    %v2577 = vpop.f32.mrb[0].mxu0
    %v2578 = vadd.f32 %v349, %v2577
    %v2579 = vpop.f32.mrb[0].mxu0
    %v2580 = vpop.f32.mrb[0].mxu0
    %v2581 = vadd.f32 %v349, %v2580
    %v2582 = vpop.f32.mrb[0].mxu0
    %2583 = vmatprep.mubr.bf16.mxu0 %v1326
    %2584 = vmatmul.mubr.bf16.gmra.mrb[0].mxu0 %v1325
    %v2585 = vpop.f32.mrb[0].mxu0
    %v2586 = vadd.f32 %v349, %v2585
    %v2587 = vpop.f32.mrb[0].mxu0
    %v2588 = vpop.f32.mrb[0].mxu0
    %v2589 = vadd.f32 %v349, %v2588
    %v2590 = vpop.f32.mrb[0].mxu0
    %2591 = vmatprep.mubr.bf16.mxu0 %v1328
    %2592 = vmatmul.mubr.bf16.gmra.mrb[0].mxu0 %v1327
    %v2593 = vpop.f32.mrb[0].mxu0
    %v2594 = vadd.f32 %v349, %v2593
    %v2595 = vpop.f32.mrb[0].mxu0
    %v2596 = vpop.f32.mrb[0].mxu0
    %v2597 = vadd.f32 %v349, %v2596
    %v2598 = vpop.f32.mrb[0].mxu0
    %2599 = vmatprep.mubr.bf16.mxu0 %v1330
    %2600 = vmatmul.mubr.bf16.gmra.mrb[0].mxu0 %v1329
    %v2601 = vpop.f32.mrb[0].mxu0
    %v2602 = vadd.f32 %v349, %v2601
    %v2603 = vpop.f32.mrb[0].mxu0
    %v2604 = vpop.f32.mrb[0].mxu0
    %v2605 = vadd.f32 %v349, %v2604
    %v2606 = vpop.f32.mrb[0].mxu0
    %2607 = vmatprep.mubr.bf16.mxu0 %v1332
    %2608 = vmatmul.mubr.bf16.gmra.mrb[0].mxu0 %v1331
    %v2609 = vpop.f32.mrb[0].mxu0
    %v2610 = vadd.f32 %v349, %v2609
    %v2611 = vpop.f32.mrb[0].mxu0
    %v2612 = vpop.f32.mrb[0].mxu0
    %v2613 = vadd.f32 %v349, %v2612
    %v2614 = vpop.f32.mrb[0].mxu0
    %2615 = vmatprep.mubr.bf16.mxu0 %v1334
    %2616 = vmatmul.mubr.bf16.gmra.mrb[0].mxu0 %v1333
    %v2617 = vpop.f32.mrb[0].mxu0
    %v2618 = vadd.f32 %v349, %v2617
    %v2619 = vpop.f32.mrb[0].mxu0
    %v2620 = vpop.f32.mrb[0].mxu0
    %v2621 = vadd.f32 %v349, %v2620
    %v2622 = vpop.f32.mrb[0].mxu0
    %2623 = vmatprep.mubr.bf16.mxu0 %v1336
    %2624 = vmatmul.mubr.bf16.gmra.mrb[0].mxu0 %v1335
    %v2625 = vpop.f32.mrb[0].mxu0
    %v2626 = vadd.f32 %v349, %v2625
    %v2627 = vpop.f32.mrb[0].mxu0
    %v2628 = vpop.f32.mrb[0].mxu0
    %v2629 = vadd.f32 %v349, %v2628
    %v2630 = vpop.f32.mrb[0].mxu0
    %2631 = vmatprep.mubr.bf16.mxu0 %v1338
    %2632 = vmatmul.mubr.bf16.gmra.mrb[0].mxu0 %v1337
    %v2633 = vpop.f32.mrb[0].mxu0
    %v2634 = vadd.f32 %v349, %v2633
    %v2635 = vpop.f32.mrb[0].mxu0
    %v2636 = vpop.f32.mrb[0].mxu0
    %v2637 = vadd.f32 %v349, %v2636
    %v2638 = vpop.f32.mrb[0].mxu0
    %2639 = vmatprep.mubr.bf16.mxu0 %v1340
    %2640 = vmatmul.mubr.bf16.gmra.mrb[0].mxu0 %v1339
    %v2641 = vpop.f32.mrb[0].mxu0
    %v2642 = vadd.f32 %v349, %v2641
    %v2643 = vpop.f32.mrb[0].mxu0
    %v2644 = vpop.f32.mrb[0].mxu0
    %v2645 = vadd.f32 %v349, %v2644
    %v2646 = vpop.f32.mrb[0].mxu0
    %2647 = vmatprep.mubr.bf16.mxu0 %v1342
    %2648 = vmatmul.mubr.bf16.gmra.mrb[0].mxu0 %v1341
    %v2649 = vpop.f32.mrb[0].mxu0
    %v2650 = vadd.f32 %v349, %v2649
    %v2651 = vpop.f32.mrb[0].mxu0
    %v2652 = vpop.f32.mrb[0].mxu0
    %v2653 = vadd.f32 %v349, %v2652
    %v2654 = vpop.f32.mrb[0].mxu0
    %2655 = vmatprep.mubr.bf16.mxu0 %v1344
    %2656 = vmatmul.mubr.bf16.gmra.mrb[0].mxu0 %v1343
    %v2657 = vpop.f32.mrb[0].mxu0
    %v2658 = vadd.f32 %v349, %v2657
    %v2659 = vpop.f32.mrb[0].mxu0
    %v2660 = vpop.f32.mrb[0].mxu0
    %v2661 = vadd.f32 %v349, %v2660
    %v2662 = vpop.f32.mrb[0].mxu0
    %2663 = vmatprep.mubr.bf16.mxu0 %v1346
    %2664 = vmatmul.mubr.bf16.gmra.mrb[0].mxu0 %v1345
    %v2665 = vpop.f32.mrb[0].mxu0
    %v2666 = vadd.f32 %v349, %v2665
    %v2667 = vpop.f32.mrb[0].mxu0
    %v2668 = vpop.f32.mrb[0].mxu0
    %v2669 = vadd.f32 %v349, %v2668
    %v2670 = vpop.f32.mrb[0].mxu0
    %2671 = vmatprep.mubr.bf16.mxu0 %v1348
    %2672 = vmatmul.mubr.bf16.gmra.mrb[0].mxu0 %v1347
    %v2673 = vpop.f32.mrb[0].mxu0
    %v2674 = vadd.f32 %v349, %v2673
    %v2675 = vpop.f32.mrb[0].mxu0
    %v2676 = vpop.f32.mrb[0].mxu0
    %v2677 = vadd.f32 %v349, %v2676
    %v2678 = vpop.f32.mrb[0].mxu0
    %2679 = vmatprep.mubr.bf16.mxu0 %v1350
    %2680 = vmatmul.mubr.bf16.gmra.mrb[0].mxu0 %v1349
    %v2681 = vpop.f32.mrb[0].mxu0
    %v2682 = vadd.f32 %v349, %v2681
    %v2683 = vpop.f32.mrb[0].mxu0
    %v2684 = vpop.f32.mrb[0].mxu0
    %v2685 = vadd.f32 %v349, %v2684
    %v2686 = vpop.f32.mrb[0].mxu0
    %2687 = vmatprep.mubr.bf16.mxu0 %v1352
    %2688 = vmatmul.mubr.bf16.gmra.mrb[0].mxu0 %v1351
    %v2689 = vpop.f32.mrb[0].mxu0
    %v2690 = vadd.f32 %v349, %v2689
    %v2691 = vpop.f32.mrb[0].mxu0
    %v2692 = vpop.f32.mrb[0].mxu0
    %v2693 = vadd.f32 %v349, %v2692
    %v2694 = vpop.f32.mrb[0].mxu0
    %2695 = vmatprep.mubr.bf16.mxu0 %v1354
    %2696 = vmatmul.mubr.bf16.gmra.mrb[0].mxu0 %v1353
    %v2697 = vpop.f32.mrb[0].mxu0
    %v2698 = vadd.f32 %v349, %v2697
    %v2699 = vpop.f32.mrb[0].mxu0
    %v2700 = vpop.f32.mrb[0].mxu0
    %v2701 = vadd.f32 %v349, %v2700
    %v2702 = vpop.f32.mrb[0].mxu0
    %2703 = vmatprep.mubr.bf16.mxu0 %v1356
    %2704 = vmatmul.mubr.bf16.gmra.mrb[0].mxu0 %v1355
    %v2705 = vpop.f32.mrb[0].mxu0
    %v2706 = vadd.f32 %v349, %v2705
    %v2707 = vpop.f32.mrb[0].mxu0
    %v2708 = vpop.f32.mrb[0].mxu0
    %v2709 = vadd.f32 %v349, %v2708
    %v2710 = vpop.f32.mrb[0].mxu0
    %2711 = vmatprep.mubr.bf16.mxu0 %v1358
    %2712 = vmatmul.mubr.bf16.gmra.mrb[0].mxu0 %v1357
    %v2713 = vpop.f32.mrb[0].mxu0
    %v2714 = vadd.f32 %v349, %v2713
    %v2715 = vpop.f32.mrb[0].mxu0
    %v2716 = vpop.f32.mrb[0].mxu0
    %v2717 = vadd.f32 %v349, %v2716
    %v2718 = vpop.f32.mrb[0].mxu0
    %2719 = vmatprep.mubr.bf16.mxu0 %v1360
    %2720 = vmatmul.mubr.bf16.gmra.mrb[0].mxu0 %v1359
    %v2721 = vpop.f32.mrb[0].mxu0
    %v2722 = vadd.f32 %v349, %v2721
    %v2723 = vpop.f32.mrb[0].mxu0
    %v2724 = vpop.f32.mrb[0].mxu0
    %v2725 = vadd.f32 %v349, %v2724
    %v2726 = vpop.f32.mrb[0].mxu0
    %2727 = vmatprep.mubr.bf16.mxu0 %v1362
    %2728 = vmatmul.mubr.bf16.gmra.mrb[0].mxu0 %v1361
    %v2729 = vpop.f32.mrb[0].mxu0
    %v2730 = vadd.f32 %v349, %v2729
    %v2731 = vpop.f32.mrb[0].mxu0
    %v2732 = vpop.f32.mrb[0].mxu0
    %v2733 = vadd.f32 %v349, %v2732
    %v2734 = vpop.f32.mrb[0].mxu0
    %2735 = vmatprep.mubr.bf16.mxu0 %v1364
    %2736 = vmatmul.mubr.bf16.gmra.mrb[0].mxu0 %v1363
    %v2737 = vpop.f32.mrb[0].mxu0
    %v2738 = vadd.f32 %v349, %v2737
    %v2739 = vpop.f32.mrb[0].mxu0
    %v2740 = vpop.f32.mrb[0].mxu0
    %v2741 = vadd.f32 %v349, %v2740
    %v2742 = vpop.f32.mrb[0].mxu0
    %2743 = vmatprep.mubr.bf16.mxu0 %v1366
    %2744 = vmatmul.mubr.bf16.gmra.mrb[0].mxu0 %v1365
    %v2745 = vpop.f32.mrb[0].mxu0
    %v2746 = vadd.f32 %v349, %v2745
    %v2747 = vpop.f32.mrb[0].mxu0
    %v2748 = vpop.f32.mrb[0].mxu0
    %v2749 = vadd.f32 %v349, %v2748
    %v2750 = vpop.f32.mrb[0].mxu0
    %2751 = vmatprep.mubr.bf16.mxu0 %v1368
    %2752 = vmatmul.mubr.bf16.gmra.mrb[0].mxu0 %v1367
    %v2753 = vpop.f32.mrb[0].mxu0
    %v2754 = vadd.f32 %v349, %v2753
    %v2755 = vpop.f32.mrb[0].mxu0
    %v2756 = vpop.f32.mrb[0].mxu0
    %v2757 = vadd.f32 %v349, %v2756
    %v2758 = vpop.f32.mrb[0].mxu0
    %2759 = vmatprep.mubr.bf16.mxu0 %v1370
    %2760 = vmatmul.mubr.bf16.gmra.mrb[0].mxu0 %v1369
    %v2761 = vpop.f32.mrb[0].mxu0
    %v2762 = vadd.f32 %v349, %v2761
    %v2763 = vpop.f32.mrb[0].mxu0
    %v2764 = vpop.f32.mrb[0].mxu0
    %v2765 = vadd.f32 %v349, %v2764
    %v2766 = vpop.f32.mrb[0].mxu0
    %2767 = vmatprep.mubr.bf16.mxu0 %v1372
    %2768 = vmatmul.mubr.bf16.gmra.mrb[0].mxu0 %v1371
    %v2769 = vpop.f32.mrb[0].mxu0
    %v2770 = vadd.f32 %v349, %v2769
    %v2771 = vpop.f32.mrb[0].mxu0
    %v2772 = vpop.f32.mrb[0].mxu0
    %v2773 = vadd.f32 %v349, %v2772
    %v2774 = vpop.f32.mrb[0].mxu0
    %2775 = vmatprep.mubr.bf16.mxu0 %v1374
    %2776 = vmatmul.mubr.bf16.gmra.mrb[0].mxu0 %v1373
    %v2777 = vpop.f32.mrb[0].mxu0
    %v2778 = vadd.f32 %v349, %v2777
    %v2779 = vpop.f32.mrb[0].mxu0
    %v2780 = vpop.f32.mrb[0].mxu0
    %v2781 = vadd.f32 %v349, %v2780
    %v2782 = vpop.f32.mrb[0].mxu0
    %2783 = vdwg.mxu0
    %v2784 = vmax.f32 %v1762, 0.0
    %v2785 = vmax.f32 %v1765, 0.0
    %v2786 = vmax.f32 %v1770, 0.0
    %v2787 = vmax.f32 %v1773, 0.0
    %v2788 = vmax.f32 %v1778, 0.0
    %v2789 = vmax.f32 %v1781, 0.0
    %v2790 = vmax.f32 %v1786, 0.0
    %v2791 = vmax.f32 %v1789, 0.0
    %v2792 = vmax.f32 %v1794, 0.0
    %v2793 = vmax.f32 %v1797, 0.0
    %v2794 = vmax.f32 %v1802, 0.0
    %v2795 = vmax.f32 %v1805, 0.0
    %v2796 = vmax.f32 %v1810, 0.0
    %v2797 = vmax.f32 %v1813, 0.0
    %v2798 = vmax.f32 %v1818, 0.0
    %v2799 = vmax.f32 %v1821, 0.0
    %v2800 = vmax.f32 %v1826, 0.0
    %v2801 = vmax.f32 %v1829, 0.0
    %v2802 = vmax.f32 %v1834, 0.0
    %v2803 = vmax.f32 %v1837, 0.0
    %v2804 = vmax.f32 %v1842, 0.0
    %v2805 = vmax.f32 %v1845, 0.0
    %v2806 = vmax.f32 %v1850, 0.0
    %v2807 = vmax.f32 %v1853, 0.0
    %v2808 = vmax.f32 %v1858, 0.0
    %v2809 = vmax.f32 %v1861, 0.0
    %v2810 = vmax.f32 %v1866, 0.0
    %v2811 = vmax.f32 %v1869, 0.0
    %v2812 = vmax.f32 %v1874, 0.0
    %v2813 = vmax.f32 %v1877, 0.0
    %v2814 = vmax.f32 %v1882, 0.0
    %v2815 = vmax.f32 %v1885, 0.0
    %v2816 = vmax.f32 %v1890, 0.0
    %v2817 = vmax.f32 %v1893, 0.0
    %v2818 = vmax.f32 %v1898, 0.0
    %v2819 = vmax.f32 %v1901, 0.0
    %v2820 = vmax.f32 %v1906, 0.0
    %v2821 = vmax.f32 %v1909, 0.0
    %v2822 = vmax.f32 %v1914, 0.0
    %v2823 = vmax.f32 %v1917, 0.0
    %v2824 = vmax.f32 %v1922, 0.0
    %v2825 = vmax.f32 %v1925, 0.0
    %v2826 = vmax.f32 %v1930, 0.0
    %v2827 = vmax.f32 %v1933, 0.0
    %v2828 = vmax.f32 %v1938, 0.0
    %v2829 = vmax.f32 %v1941, 0.0
    %v2830 = vmax.f32 %v1946, 0.0
    %v2831 = vmax.f32 %v1949, 0.0
    %v2832 = vmax.f32 %v1954, 0.0
    %v2833 = vmax.f32 %v1957, 0.0
    %v2834 = vmax.f32 %v1962, 0.0
    %v2835 = vmax.f32 %v1965, 0.0
    %v2836 = vmax.f32 %v1970, 0.0
    %v2837 = vmax.f32 %v1973, 0.0
    %v2838 = vmax.f32 %v1978, 0.0
    %v2839 = vmax.f32 %v1981, 0.0
    %v2840 = vmax.f32 %v1986, 0.0
    %v2841 = vmax.f32 %v1989, 0.0
    %v2842 = vmax.f32 %v1994, 0.0
    %v2843 = vmax.f32 %v1997, 0.0
    %v2844 = vmax.f32 %v2002, 0.0
    %v2845 = vmax.f32 %v2005, 0.0
    %v2846 = vmax.f32 %v2010, 0.0
    %v2847 = vmax.f32 %v2013, 0.0
    %v2848 = vmax.f32 %v2018, 0.0
    %v2849 = vmax.f32 %v2021, 0.0
    %v2850 = vmax.f32 %v2026, 0.0
    %v2851 = vmax.f32 %v2029, 0.0
    %v2852 = vmax.f32 %v2034, 0.0
    %v2853 = vmax.f32 %v2037, 0.0
    %v2854 = vmax.f32 %v2042, 0.0
    %v2855 = vmax.f32 %v2045, 0.0
    %v2856 = vmax.f32 %v2050, 0.0
    %v2857 = vmax.f32 %v2053, 0.0
    %v2858 = vmax.f32 %v2058, 0.0
    %v2859 = vmax.f32 %v2061, 0.0
    %v2860 = vmax.f32 %v2066, 0.0
    %v2861 = vmax.f32 %v2069, 0.0
    %v2862 = vmax.f32 %v2074, 0.0
    %v2863 = vmax.f32 %v2077, 0.0
    %v2864 = vmax.f32 %v2082, 0.0
    %v2865 = vmax.f32 %v2085, 0.0
    %v2866 = vmax.f32 %v2090, 0.0
    %v2867 = vmax.f32 %v2093, 0.0
    %v2868 = vmax.f32 %v2098, 0.0
    %v2869 = vmax.f32 %v2101, 0.0
    %v2870 = vmax.f32 %v2106, 0.0
    %v2871 = vmax.f32 %v2109, 0.0
    %v2872 = vmax.f32 %v2114, 0.0
    %v2873 = vmax.f32 %v2117, 0.0
    %v2874 = vmax.f32 %v2122, 0.0
    %v2875 = vmax.f32 %v2125, 0.0
    %v2876 = vmax.f32 %v2130, 0.0
    %v2877 = vmax.f32 %v2133, 0.0
    %v2878 = vmax.f32 %v2138, 0.0
    %v2879 = vmax.f32 %v2141, 0.0
    %v2880 = vmax.f32 %v2146, 0.0
    %v2881 = vmax.f32 %v2149, 0.0
    %v2882 = vmax.f32 %v2154, 0.0
    %v2883 = vmax.f32 %v2157, 0.0
    %v2884 = vmax.f32 %v2162, 0.0
    %v2885 = vmax.f32 %v2165, 0.0
    %v2886 = vmax.f32 %v2170, 0.0
    %v2887 = vmax.f32 %v2173, 0.0
    %v2888 = vmax.f32 %v2178, 0.0
    %v2889 = vmax.f32 %v2181, 0.0
    %v2890 = vmax.f32 %v2186, 0.0
    %v2891 = vmax.f32 %v2189, 0.0
    %v2892 = vmax.f32 %v2194, 0.0
    %v2893 = vmax.f32 %v2197, 0.0
    %v2894 = vmax.f32 %v2202, 0.0
    %v2895 = vmax.f32 %v2205, 0.0
    %v2896 = vmax.f32 %v2210, 0.0
    %v2897 = vmax.f32 %v2213, 0.0
    %v2898 = vmax.f32 %v2218, 0.0
    %v2899 = vmax.f32 %v2221, 0.0
    %v2900 = vmax.f32 %v2226, 0.0
    %v2901 = vmax.f32 %v2229, 0.0
    %v2902 = vmax.f32 %v2234, 0.0
    %v2903 = vmax.f32 %v2237, 0.0
    %v2904 = vmax.f32 %v2242, 0.0
    %v2905 = vmax.f32 %v2245, 0.0
    %v2906 = vmax.f32 %v2250, 0.0
    %v2907 = vmax.f32 %v2253, 0.0
    %v2908 = vmax.f32 %v2258, 0.0
    %v2909 = vmax.f32 %v2261, 0.0
    %v2910 = vmax.f32 %v2266, 0.0
    %v2911 = vmax.f32 %v2269, 0.0
    %v2912 = vmax.f32 %v2274, 0.0
    %v2913 = vmax.f32 %v2277, 0.0
    %v2914 = vmax.f32 %v2282, 0.0
    %v2915 = vmax.f32 %v2285, 0.0
    %v2916 = vmax.f32 %v2290, 0.0
    %v2917 = vmax.f32 %v2293, 0.0
    %v2918 = vmax.f32 %v2298, 0.0
    %v2919 = vmax.f32 %v2301, 0.0
    %v2920 = vmax.f32 %v2306, 0.0
    %v2921 = vmax.f32 %v2309, 0.0
    %v2922 = vmax.f32 %v2314, 0.0
    %v2923 = vmax.f32 %v2317, 0.0
    %v2924 = vmax.f32 %v2322, 0.0
    %v2925 = vmax.f32 %v2325, 0.0
    %v2926 = vmax.f32 %v2330, 0.0
    %v2927 = vmax.f32 %v2333, 0.0
    %v2928 = vmax.f32 %v2338, 0.0
    %v2929 = vmax.f32 %v2341, 0.0
    %v2930 = vmax.f32 %v2346, 0.0
    %v2931 = vmax.f32 %v2349, 0.0
    %v2932 = vmax.f32 %v2354, 0.0
    %v2933 = vmax.f32 %v2357, 0.0
    %v2934 = vmax.f32 %v2362, 0.0
    %v2935 = vmax.f32 %v2365, 0.0
    %v2936 = vmax.f32 %v2370, 0.0
    %v2937 = vmax.f32 %v2373, 0.0
    %v2938 = vmax.f32 %v2378, 0.0
    %v2939 = vmax.f32 %v2381, 0.0
    %v2940 = vmax.f32 %v2386, 0.0
    %v2941 = vmax.f32 %v2389, 0.0
    %v2942 = vmax.f32 %v2394, 0.0
    %v2943 = vmax.f32 %v2397, 0.0
    %v2944 = vmax.f32 %v2402, 0.0
    %v2945 = vmax.f32 %v2405, 0.0
    %v2946 = vmax.f32 %v2410, 0.0
    %v2947 = vmax.f32 %v2413, 0.0
    %v2948 = vmax.f32 %v2418, 0.0
    %v2949 = vmax.f32 %v2421, 0.0
    %v2950 = vmax.f32 %v2426, 0.0
    %v2951 = vmax.f32 %v2429, 0.0
    %v2952 = vmax.f32 %v2434, 0.0
    %v2953 = vmax.f32 %v2437, 0.0
    %v2954 = vmax.f32 %v2442, 0.0
    %v2955 = vmax.f32 %v2445, 0.0
    %v2956 = vmax.f32 %v2450, 0.0
    %v2957 = vmax.f32 %v2453, 0.0
    %v2958 = vmax.f32 %v2458, 0.0
    %v2959 = vmax.f32 %v2461, 0.0
    %v2960 = vmax.f32 %v2466, 0.0
    %v2961 = vmax.f32 %v2469, 0.0
    %v2962 = vmax.f32 %v2474, 0.0
    %v2963 = vmax.f32 %v2477, 0.0
    %v2964 = vmax.f32 %v2482, 0.0
    %v2965 = vmax.f32 %v2485, 0.0
    %v2966 = vmax.f32 %v2490, 0.0
    %v2967 = vmax.f32 %v2493, 0.0
    %v2968 = vmax.f32 %v2498, 0.0
    %v2969 = vmax.f32 %v2501, 0.0
    %v2970 = vmax.f32 %v2506, 0.0
    %v2971 = vmax.f32 %v2509, 0.0
    %v2972 = vmax.f32 %v2514, 0.0
    %v2973 = vmax.f32 %v2517, 0.0
    %v2974 = vmax.f32 %v2522, 0.0
    %v2975 = vmax.f32 %v2525, 0.0
    %v2976 = vmax.f32 %v2530, 0.0
    %v2977 = vmax.f32 %v2533, 0.0
    %v2978 = vmax.f32 %v2538, 0.0
    %v2979 = vmax.f32 %v2541, 0.0
    %v2980 = vmax.f32 %v2546, 0.0
    %v2981 = vmax.f32 %v2549, 0.0
    %v2982 = vmax.f32 %v2554, 0.0
    %v2983 = vmax.f32 %v2557, 0.0
    %v2984 = vmax.f32 %v2562, 0.0
    %v2985 = vmax.f32 %v2565, 0.0
    %v2986 = vmax.f32 %v2570, 0.0
    %v2987 = vmax.f32 %v2573, 0.0
    %v2988 = vmax.f32 %v2578, 0.0
    %v2989 = vmax.f32 %v2581, 0.0
    %v2990 = vmax.f32 %v2586, 0.0
    %v2991 = vmax.f32 %v2589, 0.0
    %v2992 = vmax.f32 %v2594, 0.0
    %v2993 = vmax.f32 %v2597, 0.0
    %v2994 = vmax.f32 %v2602, 0.0
    %v2995 = vmax.f32 %v2605, 0.0
    %v2996 = vmax.f32 %v2610, 0.0
    %v2997 = vmax.f32 %v2613, 0.0
    %v2998 = vmax.f32 %v2618, 0.0
    %v2999 = vmax.f32 %v2621, 0.0
    %v3000 = vmax.f32 %v2626, 0.0
    %v3001 = vmax.f32 %v2629, 0.0
    %v3002 = vmax.f32 %v2634, 0.0
    %v3003 = vmax.f32 %v2637, 0.0
    %v3004 = vmax.f32 %v2642, 0.0
    %v3005 = vmax.f32 %v2645, 0.0
    %v3006 = vmax.f32 %v2650, 0.0
    %v3007 = vmax.f32 %v2653, 0.0
    %v3008 = vmax.f32 %v2658, 0.0
    %v3009 = vmax.f32 %v2661, 0.0
    %v3010 = vmax.f32 %v2666, 0.0
    %v3011 = vmax.f32 %v2669, 0.0
    %v3012 = vmax.f32 %v2674, 0.0
    %v3013 = vmax.f32 %v2677, 0.0
    %v3014 = vmax.f32 %v2682, 0.0
    %v3015 = vmax.f32 %v2685, 0.0
    %v3016 = vmax.f32 %v2690, 0.0
    %v3017 = vmax.f32 %v2693, 0.0
    %v3018 = vmax.f32 %v2698, 0.0
    %v3019 = vmax.f32 %v2701, 0.0
    %v3020 = vmax.f32 %v2706, 0.0
    %v3021 = vmax.f32 %v2709, 0.0
    %v3022 = vmax.f32 %v2714, 0.0
    %v3023 = vmax.f32 %v2717, 0.0
    %v3024 = vmax.f32 %v2722, 0.0
    %v3025 = vmax.f32 %v2725, 0.0
    %v3026 = vmax.f32 %v2730, 0.0
    %v3027 = vmax.f32 %v2733, 0.0
    %v3028 = vmax.f32 %v2738, 0.0
    %v3029 = vmax.f32 %v2741, 0.0
    %v3030 = vmax.f32 %v2746, 0.0
    %v3031 = vmax.f32 %v2749, 0.0
    %v3032 = vmax.f32 %v2754, 0.0
    %v3033 = vmax.f32 %v2757, 0.0
    %v3034 = vmax.f32 %v2762, 0.0
    %v3035 = vmax.f32 %v2765, 0.0
    %v3036 = vmax.f32 %v2770, 0.0
    %v3037 = vmax.f32 %v2773, 0.0
    %v3038 = vmax.f32 %v2778, 0.0
    %v3039 = vmax.f32 %v2781, 0.0
    %v3040 = vmax.f32 %v2784, %v2785
    %v3041 = vrot.slane %v3040, 4
    %v3042 = vmax.f32 %v3040, %v3041
    %v3043 = vrot.slane %v3042, 2
    %v3044 = vmax.f32 %v3042, %v3043
    %v3045 = vrot.slane %v3044, 1
    %v3046 = vmax.f32 %v3044, %v3045
    %v3047 = vmax.f32 %v2786, %v2787
    %v3048 = vrot.slane %v3047, 4
    %v3049 = vmax.f32 %v3047, %v3048
    %v3050 = vrot.slane %v3049, 2
    %v3051 = vmax.f32 %v3049, %v3050
    %v3052 = vrot.slane %v3051, 1
    %v3053 = vmax.f32 %v3051, %v3052
    %v3054 = vmax.f32 %v2788, %v2789
    %v3055 = vrot.slane %v3054, 4
    %v3056 = vmax.f32 %v3054, %v3055
    %v3057 = vrot.slane %v3056, 2
    %v3058 = vmax.f32 %v3056, %v3057
    %v3059 = vrot.slane %v3058, 1
    %v3060 = vmax.f32 %v3058, %v3059
    %v3061 = vmax.f32 %v2790, %v2791
    %v3062 = vrot.slane %v3061, 4
    %v3063 = vmax.f32 %v3061, %v3062
    %v3064 = vrot.slane %v3063, 2
    %v3065 = vmax.f32 %v3063, %v3064
    %v3066 = vrot.slane %v3065, 1
    %v3067 = vmax.f32 %v3065, %v3066
    %v3068 = vmax.f32 %v2792, %v2793
    %v3069 = vrot.slane %v3068, 4
    %v3070 = vmax.f32 %v3068, %v3069
    %v3071 = vrot.slane %v3070, 2
    %v3072 = vmax.f32 %v3070, %v3071
    %v3073 = vrot.slane %v3072, 1
    %v3074 = vmax.f32 %v3072, %v3073
    %v3075 = vmax.f32 %v2794, %v2795
    %v3076 = vrot.slane %v3075, 4
    %v3077 = vmax.f32 %v3075, %v3076
    %v3078 = vrot.slane %v3077, 2
    %v3079 = vmax.f32 %v3077, %v3078
    %v3080 = vrot.slane %v3079, 1
    %v3081 = vmax.f32 %v3079, %v3080
    %v3082 = vmax.f32 %v2796, %v2797
    %v3083 = vrot.slane %v3082, 4
    %v3084 = vmax.f32 %v3082, %v3083
    %v3085 = vrot.slane %v3084, 2
    %v3086 = vmax.f32 %v3084, %v3085
    %v3087 = vrot.slane %v3086, 1
    %v3088 = vmax.f32 %v3086, %v3087
    %v3089 = vmax.f32 %v2798, %v2799
    %v3090 = vrot.slane %v3089, 4
    %v3091 = vmax.f32 %v3089, %v3090
    %v3092 = vrot.slane %v3091, 2
    %v3093 = vmax.f32 %v3091, %v3092
    %v3094 = vrot.slane %v3093, 1
    %v3095 = vmax.f32 %v3093, %v3094
    %v3096 = vmax.f32 %v2800, %v2801
    %v3097 = vrot.slane %v3096, 4
    %v3098 = vmax.f32 %v3096, %v3097
    %v3099 = vrot.slane %v3098, 2
    %v3100 = vmax.f32 %v3098, %v3099
    %v3101 = vrot.slane %v3100, 1
    %v3102 = vmax.f32 %v3100, %v3101
    %v3103 = vmax.f32 %v2802, %v2803
    %v3104 = vrot.slane %v3103, 4
    %v3105 = vmax.f32 %v3103, %v3104
    %v3106 = vrot.slane %v3105, 2
    %v3107 = vmax.f32 %v3105, %v3106
    %v3108 = vrot.slane %v3107, 1
    %v3109 = vmax.f32 %v3107, %v3108
    %v3110 = vmax.f32 %v2804, %v2805
    %v3111 = vrot.slane %v3110, 4
    %v3112 = vmax.f32 %v3110, %v3111
    %v3113 = vrot.slane %v3112, 2
    %v3114 = vmax.f32 %v3112, %v3113
    %v3115 = vrot.slane %v3114, 1
    %v3116 = vmax.f32 %v3114, %v3115
    %v3117 = vmax.f32 %v2806, %v2807
    %v3118 = vrot.slane %v3117, 4
    %v3119 = vmax.f32 %v3117, %v3118
    %v3120 = vrot.slane %v3119, 2
    %v3121 = vmax.f32 %v3119, %v3120
    %v3122 = vrot.slane %v3121, 1
    %v3123 = vmax.f32 %v3121, %v3122
    %v3124 = vmax.f32 %v2808, %v2809
    %v3125 = vrot.slane %v3124, 4
    %v3126 = vmax.f32 %v3124, %v3125
    %v3127 = vrot.slane %v3126, 2
    %v3128 = vmax.f32 %v3126, %v3127
    %v3129 = vrot.slane %v3128, 1
    %v3130 = vmax.f32 %v3128, %v3129
    %v3131 = vmax.f32 %v2810, %v2811
    %v3132 = vrot.slane %v3131, 4
    %v3133 = vmax.f32 %v3131, %v3132
    %v3134 = vrot.slane %v3133, 2
    %v3135 = vmax.f32 %v3133, %v3134
    %v3136 = vrot.slane %v3135, 1
    %v3137 = vmax.f32 %v3135, %v3136
    %v3138 = vmax.f32 %v2812, %v2813
    %v3139 = vrot.slane %v3138, 4
    %v3140 = vmax.f32 %v3138, %v3139
    %v3141 = vrot.slane %v3140, 2
    %v3142 = vmax.f32 %v3140, %v3141
    %v3143 = vrot.slane %v3142, 1
    %v3144 = vmax.f32 %v3142, %v3143
    %v3145 = vmax.f32 %v2814, %v2815
    %v3146 = vrot.slane %v3145, 4
    %v3147 = vmax.f32 %v3145, %v3146
    %v3148 = vrot.slane %v3147, 2
    %v3149 = vmax.f32 %v3147, %v3148
    %v3150 = vrot.slane %v3149, 1
    %v3151 = vmax.f32 %v3149, %v3150
    %v3152 = vmax.f32 %v2816, %v2817
    %v3153 = vrot.slane %v3152, 4
    %v3154 = vmax.f32 %v3152, %v3153
    %v3155 = vrot.slane %v3154, 2
    %v3156 = vmax.f32 %v3154, %v3155
    %v3157 = vrot.slane %v3156, 1
    %v3158 = vmax.f32 %v3156, %v3157
    %v3159 = vmax.f32 %v2818, %v2819
    %v3160 = vrot.slane %v3159, 4
    %v3161 = vmax.f32 %v3159, %v3160
    %v3162 = vrot.slane %v3161, 2
    %v3163 = vmax.f32 %v3161, %v3162
    %v3164 = vrot.slane %v3163, 1
    %v3165 = vmax.f32 %v3163, %v3164
    %v3166 = vmax.f32 %v2820, %v2821
    %v3167 = vrot.slane %v3166, 4
    %v3168 = vmax.f32 %v3166, %v3167
    %v3169 = vrot.slane %v3168, 2
    %v3170 = vmax.f32 %v3168, %v3169
    %v3171 = vrot.slane %v3170, 1
    %v3172 = vmax.f32 %v3170, %v3171
    %v3173 = vmax.f32 %v2822, %v2823
    %v3174 = vrot.slane %v3173, 4
    %v3175 = vmax.f32 %v3173, %v3174
    %v3176 = vrot.slane %v3175, 2
    %v3177 = vmax.f32 %v3175, %v3176
    %v3178 = vrot.slane %v3177, 1
    %v3179 = vmax.f32 %v3177, %v3178
    %v3180 = vmax.f32 %v2824, %v2825
    %v3181 = vrot.slane %v3180, 4
    %v3182 = vmax.f32 %v3180, %v3181
    %v3183 = vrot.slane %v3182, 2
    %v3184 = vmax.f32 %v3182, %v3183
    %v3185 = vrot.slane %v3184, 1
    %v3186 = vmax.f32 %v3184, %v3185
    %v3187 = vmax.f32 %v2826, %v2827
    %v3188 = vrot.slane %v3187, 4
    %v3189 = vmax.f32 %v3187, %v3188
    %v3190 = vrot.slane %v3189, 2
    %v3191 = vmax.f32 %v3189, %v3190
    %v3192 = vrot.slane %v3191, 1
    %v3193 = vmax.f32 %v3191, %v3192
    %v3194 = vmax.f32 %v2828, %v2829
    %v3195 = vrot.slane %v3194, 4
    %v3196 = vmax.f32 %v3194, %v3195
    %v3197 = vrot.slane %v3196, 2
    %v3198 = vmax.f32 %v3196, %v3197
    %v3199 = vrot.slane %v3198, 1
    %v3200 = vmax.f32 %v3198, %v3199
    %v3201 = vmax.f32 %v2830, %v2831
    %v3202 = vrot.slane %v3201, 4
    %v3203 = vmax.f32 %v3201, %v3202
    %v3204 = vrot.slane %v3203, 2
    %v3205 = vmax.f32 %v3203, %v3204
    %v3206 = vrot.slane %v3205, 1
    %v3207 = vmax.f32 %v3205, %v3206
    %v3208 = vmax.f32 %v2832, %v2833
    %v3209 = vrot.slane %v3208, 4
    %v3210 = vmax.f32 %v3208, %v3209
    %v3211 = vrot.slane %v3210, 2
    %v3212 = vmax.f32 %v3210, %v3211
    %v3213 = vrot.slane %v3212, 1
    %v3214 = vmax.f32 %v3212, %v3213
    %v3215 = vmax.f32 %v2834, %v2835
    %v3216 = vrot.slane %v3215, 4
    %v3217 = vmax.f32 %v3215, %v3216
    %v3218 = vrot.slane %v3217, 2
    %v3219 = vmax.f32 %v3217, %v3218
    %v3220 = vrot.slane %v3219, 1
    %v3221 = vmax.f32 %v3219, %v3220
    %v3222 = vmax.f32 %v2836, %v2837
    %v3223 = vrot.slane %v3222, 4
    %v3224 = vmax.f32 %v3222, %v3223
    %v3225 = vrot.slane %v3224, 2
    %v3226 = vmax.f32 %v3224, %v3225
    %v3227 = vrot.slane %v3226, 1
    %v3228 = vmax.f32 %v3226, %v3227
    %v3229 = vmax.f32 %v2838, %v2839
    %v3230 = vrot.slane %v3229, 4
    %v3231 = vmax.f32 %v3229, %v3230
    %v3232 = vrot.slane %v3231, 2
    %v3233 = vmax.f32 %v3231, %v3232
    %v3234 = vrot.slane %v3233, 1
    %v3235 = vmax.f32 %v3233, %v3234
    %v3236 = vmax.f32 %v2840, %v2841
    %v3237 = vrot.slane %v3236, 4
    %v3238 = vmax.f32 %v3236, %v3237
    %v3239 = vrot.slane %v3238, 2
    %v3240 = vmax.f32 %v3238, %v3239
    %v3241 = vrot.slane %v3240, 1
    %v3242 = vmax.f32 %v3240, %v3241
    %v3243 = vmax.f32 %v2842, %v2843
    %v3244 = vrot.slane %v3243, 4
    %v3245 = vmax.f32 %v3243, %v3244
    %v3246 = vrot.slane %v3245, 2
    %v3247 = vmax.f32 %v3245, %v3246
    %v3248 = vrot.slane %v3247, 1
    %v3249 = vmax.f32 %v3247, %v3248
    %v3250 = vmax.f32 %v2844, %v2845
    %v3251 = vrot.slane %v3250, 4
    %v3252 = vmax.f32 %v3250, %v3251
    %v3253 = vrot.slane %v3252, 2
    %v3254 = vmax.f32 %v3252, %v3253
    %v3255 = vrot.slane %v3254, 1
    %v3256 = vmax.f32 %v3254, %v3255
    %v3257 = vmax.f32 %v2846, %v2847
    %v3258 = vrot.slane %v3257, 4
    %v3259 = vmax.f32 %v3257, %v3258
    %v3260 = vrot.slane %v3259, 2
    %v3261 = vmax.f32 %v3259, %v3260
    %v3262 = vrot.slane %v3261, 1
    %v3263 = vmax.f32 %v3261, %v3262
    %v3264 = vmax.f32 %v2848, %v2849
    %v3265 = vrot.slane %v3264, 4
    %v3266 = vmax.f32 %v3264, %v3265
    %v3267 = vrot.slane %v3266, 2
    %v3268 = vmax.f32 %v3266, %v3267
    %v3269 = vrot.slane %v3268, 1
    %v3270 = vmax.f32 %v3268, %v3269
    %v3271 = vmax.f32 %v2850, %v2851
    %v3272 = vrot.slane %v3271, 4
    %v3273 = vmax.f32 %v3271, %v3272
    %v3274 = vrot.slane %v3273, 2
    %v3275 = vmax.f32 %v3273, %v3274
    %v3276 = vrot.slane %v3275, 1
    %v3277 = vmax.f32 %v3275, %v3276
    %v3278 = vmax.f32 %v2852, %v2853
    %v3279 = vrot.slane %v3278, 4
    %v3280 = vmax.f32 %v3278, %v3279
    %v3281 = vrot.slane %v3280, 2
    %v3282 = vmax.f32 %v3280, %v3281
    %v3283 = vrot.slane %v3282, 1
    %v3284 = vmax.f32 %v3282, %v3283
    %v3285 = vmax.f32 %v2854, %v2855
    %v3286 = vrot.slane %v3285, 4
    %v3287 = vmax.f32 %v3285, %v3286
    %v3288 = vrot.slane %v3287, 2
    %v3289 = vmax.f32 %v3287, %v3288
    %v3290 = vrot.slane %v3289, 1
    %v3291 = vmax.f32 %v3289, %v3290
    %v3292 = vmax.f32 %v2856, %v2857
    %v3293 = vrot.slane %v3292, 4
    %v3294 = vmax.f32 %v3292, %v3293
    %v3295 = vrot.slane %v3294, 2
    %v3296 = vmax.f32 %v3294, %v3295
    %v3297 = vrot.slane %v3296, 1
    %v3298 = vmax.f32 %v3296, %v3297
    %v3299 = vmax.f32 %v2858, %v2859
    %v3300 = vrot.slane %v3299, 4
    %v3301 = vmax.f32 %v3299, %v3300
    %v3302 = vrot.slane %v3301, 2
    %v3303 = vmax.f32 %v3301, %v3302
    %v3304 = vrot.slane %v3303, 1
    %v3305 = vmax.f32 %v3303, %v3304
    %v3306 = vmax.f32 %v2860, %v2861
    %v3307 = vrot.slane %v3306, 4
    %v3308 = vmax.f32 %v3306, %v3307
    %v3309 = vrot.slane %v3308, 2
    %v3310 = vmax.f32 %v3308, %v3309
    %v3311 = vrot.slane %v3310, 1
    %v3312 = vmax.f32 %v3310, %v3311
    %v3313 = vmax.f32 %v2862, %v2863
    %v3314 = vrot.slane %v3313, 4
    %v3315 = vmax.f32 %v3313, %v3314
    %v3316 = vrot.slane %v3315, 2
    %v3317 = vmax.f32 %v3315, %v3316
    %v3318 = vrot.slane %v3317, 1
    %v3319 = vmax.f32 %v3317, %v3318
    %v3320 = vmax.f32 %v2864, %v2865
    %v3321 = vrot.slane %v3320, 4
    %v3322 = vmax.f32 %v3320, %v3321
    %v3323 = vrot.slane %v3322, 2
    %v3324 = vmax.f32 %v3322, %v3323
    %v3325 = vrot.slane %v3324, 1
    %v3326 = vmax.f32 %v3324, %v3325
    %v3327 = vmax.f32 %v2866, %v2867
    %v3328 = vrot.slane %v3327, 4
    %v3329 = vmax.f32 %v3327, %v3328
    %v3330 = vrot.slane %v3329, 2
    %v3331 = vmax.f32 %v3329, %v3330
    %v3332 = vrot.slane %v3331, 1
    %v3333 = vmax.f32 %v3331, %v3332
    %v3334 = vmax.f32 %v2868, %v2869
    %v3335 = vrot.slane %v3334, 4
    %v3336 = vmax.f32 %v3334, %v3335
    %v3337 = vrot.slane %v3336, 2
    %v3338 = vmax.f32 %v3336, %v3337
    %v3339 = vrot.slane %v3338, 1
    %v3340 = vmax.f32 %v3338, %v3339
    %v3341 = vmax.f32 %v2870, %v2871
    %v3342 = vrot.slane %v3341, 4
    %v3343 = vmax.f32 %v3341, %v3342
    %v3344 = vrot.slane %v3343, 2
    %v3345 = vmax.f32 %v3343, %v3344
    %v3346 = vrot.slane %v3345, 1
    %v3347 = vmax.f32 %v3345, %v3346
    %v3348 = vmax.f32 %v2872, %v2873
    %v3349 = vrot.slane %v3348, 4
    %v3350 = vmax.f32 %v3348, %v3349
    %v3351 = vrot.slane %v3350, 2
    %v3352 = vmax.f32 %v3350, %v3351
    %v3353 = vrot.slane %v3352, 1
    %v3354 = vmax.f32 %v3352, %v3353
    %v3355 = vmax.f32 %v2874, %v2875
    %v3356 = vrot.slane %v3355, 4
    %v3357 = vmax.f32 %v3355, %v3356
    %v3358 = vrot.slane %v3357, 2
    %v3359 = vmax.f32 %v3357, %v3358
    %v3360 = vrot.slane %v3359, 1
    %v3361 = vmax.f32 %v3359, %v3360
    %v3362 = vmax.f32 %v2876, %v2877
    %v3363 = vrot.slane %v3362, 4
    %v3364 = vmax.f32 %v3362, %v3363
    %v3365 = vrot.slane %v3364, 2
    %v3366 = vmax.f32 %v3364, %v3365
    %v3367 = vrot.slane %v3366, 1
    %v3368 = vmax.f32 %v3366, %v3367
    %v3369 = vmax.f32 %v2878, %v2879
    %v3370 = vrot.slane %v3369, 4
    %v3371 = vmax.f32 %v3369, %v3370
    %v3372 = vrot.slane %v3371, 2
    %v3373 = vmax.f32 %v3371, %v3372
    %v3374 = vrot.slane %v3373, 1
    %v3375 = vmax.f32 %v3373, %v3374
    %v3376 = vmax.f32 %v2880, %v2881
    %v3377 = vrot.slane %v3376, 4
    %v3378 = vmax.f32 %v3376, %v3377
    %v3379 = vrot.slane %v3378, 2
    %v3380 = vmax.f32 %v3378, %v3379
    %v3381 = vrot.slane %v3380, 1
    %v3382 = vmax.f32 %v3380, %v3381
    %v3383 = vmax.f32 %v2882, %v2883
    %v3384 = vrot.slane %v3383, 4
    %v3385 = vmax.f32 %v3383, %v3384
    %v3386 = vrot.slane %v3385, 2
    %v3387 = vmax.f32 %v3385, %v3386
    %v3388 = vrot.slane %v3387, 1
    %v3389 = vmax.f32 %v3387, %v3388
    %v3390 = vmax.f32 %v2884, %v2885
    %v3391 = vrot.slane %v3390, 4
    %v3392 = vmax.f32 %v3390, %v3391
    %v3393 = vrot.slane %v3392, 2
    %v3394 = vmax.f32 %v3392, %v3393
    %v3395 = vrot.slane %v3394, 1
    %v3396 = vmax.f32 %v3394, %v3395
    %v3397 = vmax.f32 %v2886, %v2887
    %v3398 = vrot.slane %v3397, 4
    %v3399 = vmax.f32 %v3397, %v3398
    %v3400 = vrot.slane %v3399, 2
    %v3401 = vmax.f32 %v3399, %v3400
    %v3402 = vrot.slane %v3401, 1
    %v3403 = vmax.f32 %v3401, %v3402
    %v3404 = vmax.f32 %v2888, %v2889
    %v3405 = vrot.slane %v3404, 4
    %v3406 = vmax.f32 %v3404, %v3405
    %v3407 = vrot.slane %v3406, 2
    %v3408 = vmax.f32 %v3406, %v3407
    %v3409 = vrot.slane %v3408, 1
    %v3410 = vmax.f32 %v3408, %v3409
    %v3411 = vmax.f32 %v2890, %v2891
    %v3412 = vrot.slane %v3411, 4
    %v3413 = vmax.f32 %v3411, %v3412
    %v3414 = vrot.slane %v3413, 2
    %v3415 = vmax.f32 %v3413, %v3414
    %v3416 = vrot.slane %v3415, 1
    %v3417 = vmax.f32 %v3415, %v3416
    %v3418 = vmax.f32 %v2892, %v2893
    %v3419 = vrot.slane %v3418, 4
    %v3420 = vmax.f32 %v3418, %v3419
    %v3421 = vrot.slane %v3420, 2
    %v3422 = vmax.f32 %v3420, %v3421
    %v3423 = vrot.slane %v3422, 1
    %v3424 = vmax.f32 %v3422, %v3423
    %v3425 = vmax.f32 %v2894, %v2895
    %v3426 = vrot.slane %v3425, 4
    %v3427 = vmax.f32 %v3425, %v3426
    %v3428 = vrot.slane %v3427, 2
    %v3429 = vmax.f32 %v3427, %v3428
    %v3430 = vrot.slane %v3429, 1
    %v3431 = vmax.f32 %v3429, %v3430
    %v3432 = vmax.f32 %v2896, %v2897
    %v3433 = vrot.slane %v3432, 4
    %v3434 = vmax.f32 %v3432, %v3433
    %v3435 = vrot.slane %v3434, 2
    %v3436 = vmax.f32 %v3434, %v3435
    %v3437 = vrot.slane %v3436, 1
    %v3438 = vmax.f32 %v3436, %v3437
    %v3439 = vmax.f32 %v2898, %v2899
    %v3440 = vrot.slane %v3439, 4
    %v3441 = vmax.f32 %v3439, %v3440
    %v3442 = vrot.slane %v3441, 2
    %v3443 = vmax.f32 %v3441, %v3442
    %v3444 = vrot.slane %v3443, 1
    %v3445 = vmax.f32 %v3443, %v3444
    %v3446 = vmax.f32 %v2900, %v2901
    %v3447 = vrot.slane %v3446, 4
    %v3448 = vmax.f32 %v3446, %v3447
    %v3449 = vrot.slane %v3448, 2
    %v3450 = vmax.f32 %v3448, %v3449
    %v3451 = vrot.slane %v3450, 1
    %v3452 = vmax.f32 %v3450, %v3451
    %v3453 = vmax.f32 %v2902, %v2903
    %v3454 = vrot.slane %v3453, 4
    %v3455 = vmax.f32 %v3453, %v3454
    %v3456 = vrot.slane %v3455, 2
    %v3457 = vmax.f32 %v3455, %v3456
    %v3458 = vrot.slane %v3457, 1
    %v3459 = vmax.f32 %v3457, %v3458
    %v3460 = vmax.f32 %v2904, %v2905
    %v3461 = vrot.slane %v3460, 4
    %v3462 = vmax.f32 %v3460, %v3461
    %v3463 = vrot.slane %v3462, 2
    %v3464 = vmax.f32 %v3462, %v3463
    %v3465 = vrot.slane %v3464, 1
    %v3466 = vmax.f32 %v3464, %v3465
    %v3467 = vmax.f32 %v2906, %v2907
    %v3468 = vrot.slane %v3467, 4
    %v3469 = vmax.f32 %v3467, %v3468
    %v3470 = vrot.slane %v3469, 2
    %v3471 = vmax.f32 %v3469, %v3470
    %v3472 = vrot.slane %v3471, 1
    %v3473 = vmax.f32 %v3471, %v3472
    %v3474 = vmax.f32 %v2908, %v2909
    %v3475 = vrot.slane %v3474, 4
    %v3476 = vmax.f32 %v3474, %v3475
    %v3477 = vrot.slane %v3476, 2
    %v3478 = vmax.f32 %v3476, %v3477
    %v3479 = vrot.slane %v3478, 1
    %v3480 = vmax.f32 %v3478, %v3479
    %v3481 = vmax.f32 %v2910, %v2911
    %v3482 = vrot.slane %v3481, 4
    %v3483 = vmax.f32 %v3481, %v3482
    %v3484 = vrot.slane %v3483, 2
    %v3485 = vmax.f32 %v3483, %v3484
    %v3486 = vrot.slane %v3485, 1
    %v3487 = vmax.f32 %v3485, %v3486
    %v3488 = vmax.f32 %v2912, %v2913
    %v3489 = vrot.slane %v3488, 4
    %v3490 = vmax.f32 %v3488, %v3489
    %v3491 = vrot.slane %v3490, 2
    %v3492 = vmax.f32 %v3490, %v3491
    %v3493 = vrot.slane %v3492, 1
    %v3494 = vmax.f32 %v3492, %v3493
    %v3495 = vmax.f32 %v2914, %v2915
    %v3496 = vrot.slane %v3495, 4
    %v3497 = vmax.f32 %v3495, %v3496
    %v3498 = vrot.slane %v3497, 2
    %v3499 = vmax.f32 %v3497, %v3498
    %v3500 = vrot.slane %v3499, 1
    %v3501 = vmax.f32 %v3499, %v3500
    %v3502 = vmax.f32 %v2916, %v2917
    %v3503 = vrot.slane %v3502, 4
    %v3504 = vmax.f32 %v3502, %v3503
    %v3505 = vrot.slane %v3504, 2
    %v3506 = vmax.f32 %v3504, %v3505
    %v3507 = vrot.slane %v3506, 1
    %v3508 = vmax.f32 %v3506, %v3507
    %v3509 = vmax.f32 %v2918, %v2919
    %v3510 = vrot.slane %v3509, 4
    %v3511 = vmax.f32 %v3509, %v3510
    %v3512 = vrot.slane %v3511, 2
    %v3513 = vmax.f32 %v3511, %v3512
    %v3514 = vrot.slane %v3513, 1
    %v3515 = vmax.f32 %v3513, %v3514
    %v3516 = vmax.f32 %v2920, %v2921
    %v3517 = vrot.slane %v3516, 4
    %v3518 = vmax.f32 %v3516, %v3517
    %v3519 = vrot.slane %v3518, 2
    %v3520 = vmax.f32 %v3518, %v3519
    %v3521 = vrot.slane %v3520, 1
    %v3522 = vmax.f32 %v3520, %v3521
    %v3523 = vmax.f32 %v2922, %v2923
    %v3524 = vrot.slane %v3523, 4
    %v3525 = vmax.f32 %v3523, %v3524
    %v3526 = vrot.slane %v3525, 2
    %v3527 = vmax.f32 %v3525, %v3526
    %v3528 = vrot.slane %v3527, 1
    %v3529 = vmax.f32 %v3527, %v3528
    %v3530 = vmax.f32 %v2924, %v2925
    %v3531 = vrot.slane %v3530, 4
    %v3532 = vmax.f32 %v3530, %v3531
    %v3533 = vrot.slane %v3532, 2
    %v3534 = vmax.f32 %v3532, %v3533
    %v3535 = vrot.slane %v3534, 1
    %v3536 = vmax.f32 %v3534, %v3535
    %v3537 = vmax.f32 %v2926, %v2927
    %v3538 = vrot.slane %v3537, 4
    %v3539 = vmax.f32 %v3537, %v3538
    %v3540 = vrot.slane %v3539, 2
    %v3541 = vmax.f32 %v3539, %v3540
    %v3542 = vrot.slane %v3541, 1
    %v3543 = vmax.f32 %v3541, %v3542
    %v3544 = vmax.f32 %v2928, %v2929
    %v3545 = vrot.slane %v3544, 4
    %v3546 = vmax.f32 %v3544, %v3545
    %v3547 = vrot.slane %v3546, 2
    %v3548 = vmax.f32 %v3546, %v3547
    %v3549 = vrot.slane %v3548, 1
    %v3550 = vmax.f32 %v3548, %v3549
    %v3551 = vmax.f32 %v2930, %v2931
    %v3552 = vrot.slane %v3551, 4
    %v3553 = vmax.f32 %v3551, %v3552
    %v3554 = vrot.slane %v3553, 2
    %v3555 = vmax.f32 %v3553, %v3554
    %v3556 = vrot.slane %v3555, 1
    %v3557 = vmax.f32 %v3555, %v3556
    %v3558 = vmax.f32 %v2932, %v2933
    %v3559 = vrot.slane %v3558, 4
    %v3560 = vmax.f32 %v3558, %v3559
    %v3561 = vrot.slane %v3560, 2
    %v3562 = vmax.f32 %v3560, %v3561
    %v3563 = vrot.slane %v3562, 1
    %v3564 = vmax.f32 %v3562, %v3563
    %v3565 = vmax.f32 %v2934, %v2935
    %v3566 = vrot.slane %v3565, 4
    %v3567 = vmax.f32 %v3565, %v3566
    %v3568 = vrot.slane %v3567, 2
    %v3569 = vmax.f32 %v3567, %v3568
    %v3570 = vrot.slane %v3569, 1
    %v3571 = vmax.f32 %v3569, %v3570
    %v3572 = vmax.f32 %v2936, %v2937
    %v3573 = vrot.slane %v3572, 4
    %v3574 = vmax.f32 %v3572, %v3573
    %v3575 = vrot.slane %v3574, 2
    %v3576 = vmax.f32 %v3574, %v3575
    %v3577 = vrot.slane %v3576, 1
    %v3578 = vmax.f32 %v3576, %v3577
    %v3579 = vmax.f32 %v2938, %v2939
    %v3580 = vrot.slane %v3579, 4
    %v3581 = vmax.f32 %v3579, %v3580
    %v3582 = vrot.slane %v3581, 2
    %v3583 = vmax.f32 %v3581, %v3582
    %v3584 = vrot.slane %v3583, 1
    %v3585 = vmax.f32 %v3583, %v3584
    %v3586 = vmax.f32 %v2940, %v2941
    %v3587 = vrot.slane %v3586, 4
    %v3588 = vmax.f32 %v3586, %v3587
    %v3589 = vrot.slane %v3588, 2
    %v3590 = vmax.f32 %v3588, %v3589
    %v3591 = vrot.slane %v3590, 1
    %v3592 = vmax.f32 %v3590, %v3591
    %v3593 = vmax.f32 %v2942, %v2943
    %v3594 = vrot.slane %v3593, 4
    %v3595 = vmax.f32 %v3593, %v3594
    %v3596 = vrot.slane %v3595, 2
    %v3597 = vmax.f32 %v3595, %v3596
    %v3598 = vrot.slane %v3597, 1
    %v3599 = vmax.f32 %v3597, %v3598
    %v3600 = vmax.f32 %v2944, %v2945
    %v3601 = vrot.slane %v3600, 4
    %v3602 = vmax.f32 %v3600, %v3601
    %v3603 = vrot.slane %v3602, 2
    %v3604 = vmax.f32 %v3602, %v3603
    %v3605 = vrot.slane %v3604, 1
    %v3606 = vmax.f32 %v3604, %v3605
    %v3607 = vmax.f32 %v2946, %v2947
    %v3608 = vrot.slane %v3607, 4
    %v3609 = vmax.f32 %v3607, %v3608
    %v3610 = vrot.slane %v3609, 2
    %v3611 = vmax.f32 %v3609, %v3610
    %v3612 = vrot.slane %v3611, 1
    %v3613 = vmax.f32 %v3611, %v3612
    %v3614 = vmax.f32 %v2948, %v2949
    %v3615 = vrot.slane %v3614, 4
    %v3616 = vmax.f32 %v3614, %v3615
    %v3617 = vrot.slane %v3616, 2
    %v3618 = vmax.f32 %v3616, %v3617
    %v3619 = vrot.slane %v3618, 1
    %v3620 = vmax.f32 %v3618, %v3619
    %v3621 = vmax.f32 %v2950, %v2951
    %v3622 = vrot.slane %v3621, 4
    %v3623 = vmax.f32 %v3621, %v3622
    %v3624 = vrot.slane %v3623, 2
    %v3625 = vmax.f32 %v3623, %v3624
    %v3626 = vrot.slane %v3625, 1
    %v3627 = vmax.f32 %v3625, %v3626
    %v3628 = vmax.f32 %v2952, %v2953
    %v3629 = vrot.slane %v3628, 4
    %v3630 = vmax.f32 %v3628, %v3629
    %v3631 = vrot.slane %v3630, 2
    %v3632 = vmax.f32 %v3630, %v3631
    %v3633 = vrot.slane %v3632, 1
    %v3634 = vmax.f32 %v3632, %v3633
    %v3635 = vmax.f32 %v2954, %v2955
    %v3636 = vrot.slane %v3635, 4
    %v3637 = vmax.f32 %v3635, %v3636
    %v3638 = vrot.slane %v3637, 2
    %v3639 = vmax.f32 %v3637, %v3638
    %v3640 = vrot.slane %v3639, 1
    %v3641 = vmax.f32 %v3639, %v3640
    %v3642 = vmax.f32 %v2956, %v2957
    %v3643 = vrot.slane %v3642, 4
    %v3644 = vmax.f32 %v3642, %v3643
    %v3645 = vrot.slane %v3644, 2
    %v3646 = vmax.f32 %v3644, %v3645
    %v3647 = vrot.slane %v3646, 1
    %v3648 = vmax.f32 %v3646, %v3647
    %v3649 = vmax.f32 %v2958, %v2959
    %v3650 = vrot.slane %v3649, 4
    %v3651 = vmax.f32 %v3649, %v3650
    %v3652 = vrot.slane %v3651, 2
    %v3653 = vmax.f32 %v3651, %v3652
    %v3654 = vrot.slane %v3653, 1
    %v3655 = vmax.f32 %v3653, %v3654
    %v3656 = vmax.f32 %v2960, %v2961
    %v3657 = vrot.slane %v3656, 4
    %v3658 = vmax.f32 %v3656, %v3657
    %v3659 = vrot.slane %v3658, 2
    %v3660 = vmax.f32 %v3658, %v3659
    %v3661 = vrot.slane %v3660, 1
    %v3662 = vmax.f32 %v3660, %v3661
    %v3663 = vmax.f32 %v2962, %v2963
    %v3664 = vrot.slane %v3663, 4
    %v3665 = vmax.f32 %v3663, %v3664
    %v3666 = vrot.slane %v3665, 2
    %v3667 = vmax.f32 %v3665, %v3666
    %v3668 = vrot.slane %v3667, 1
    %v3669 = vmax.f32 %v3667, %v3668
    %v3670 = vmax.f32 %v2964, %v2965
    %v3671 = vrot.slane %v3670, 4
    %v3672 = vmax.f32 %v3670, %v3671
    %v3673 = vrot.slane %v3672, 2
    %v3674 = vmax.f32 %v3672, %v3673
    %v3675 = vrot.slane %v3674, 1
    %v3676 = vmax.f32 %v3674, %v3675
    %v3677 = vmax.f32 %v2966, %v2967
    %v3678 = vrot.slane %v3677, 4
    %v3679 = vmax.f32 %v3677, %v3678
    %v3680 = vrot.slane %v3679, 2
    %v3681 = vmax.f32 %v3679, %v3680
    %v3682 = vrot.slane %v3681, 1
    %v3683 = vmax.f32 %v3681, %v3682
    %v3684 = vmax.f32 %v2968, %v2969
    %v3685 = vrot.slane %v3684, 4
    %v3686 = vmax.f32 %v3684, %v3685
    %v3687 = vrot.slane %v3686, 2
    %v3688 = vmax.f32 %v3686, %v3687
    %v3689 = vrot.slane %v3688, 1
    %v3690 = vmax.f32 %v3688, %v3689
    %v3691 = vmax.f32 %v2970, %v2971
    %v3692 = vrot.slane %v3691, 4
    %v3693 = vmax.f32 %v3691, %v3692
    %v3694 = vrot.slane %v3693, 2
    %v3695 = vmax.f32 %v3693, %v3694
    %v3696 = vrot.slane %v3695, 1
    %v3697 = vmax.f32 %v3695, %v3696
    %v3698 = vmax.f32 %v2972, %v2973
    %v3699 = vrot.slane %v3698, 4
    %v3700 = vmax.f32 %v3698, %v3699
    %v3701 = vrot.slane %v3700, 2
    %v3702 = vmax.f32 %v3700, %v3701
    %v3703 = vrot.slane %v3702, 1
    %v3704 = vmax.f32 %v3702, %v3703
    %v3705 = vmax.f32 %v2974, %v2975
    %v3706 = vrot.slane %v3705, 4
    %v3707 = vmax.f32 %v3705, %v3706
    %v3708 = vrot.slane %v3707, 2
    %v3709 = vmax.f32 %v3707, %v3708
    %v3710 = vrot.slane %v3709, 1
    %v3711 = vmax.f32 %v3709, %v3710
    %v3712 = vmax.f32 %v2976, %v2977
    %v3713 = vrot.slane %v3712, 4
    %v3714 = vmax.f32 %v3712, %v3713
    %v3715 = vrot.slane %v3714, 2
    %v3716 = vmax.f32 %v3714, %v3715
    %v3717 = vrot.slane %v3716, 1
    %v3718 = vmax.f32 %v3716, %v3717
    %v3719 = vmax.f32 %v2978, %v2979
    %v3720 = vrot.slane %v3719, 4
    %v3721 = vmax.f32 %v3719, %v3720
    %v3722 = vrot.slane %v3721, 2
    %v3723 = vmax.f32 %v3721, %v3722
    %v3724 = vrot.slane %v3723, 1
    %v3725 = vmax.f32 %v3723, %v3724
    %v3726 = vmax.f32 %v2980, %v2981
    %v3727 = vrot.slane %v3726, 4
    %v3728 = vmax.f32 %v3726, %v3727
    %v3729 = vrot.slane %v3728, 2
    %v3730 = vmax.f32 %v3728, %v3729
    %v3731 = vrot.slane %v3730, 1
    %v3732 = vmax.f32 %v3730, %v3731
    %v3733 = vmax.f32 %v2982, %v2983
    %v3734 = vrot.slane %v3733, 4
    %v3735 = vmax.f32 %v3733, %v3734
    %v3736 = vrot.slane %v3735, 2
    %v3737 = vmax.f32 %v3735, %v3736
    %v3738 = vrot.slane %v3737, 1
    %v3739 = vmax.f32 %v3737, %v3738
    %v3740 = vmax.f32 %v2984, %v2985
    %v3741 = vrot.slane %v3740, 4
    %v3742 = vmax.f32 %v3740, %v3741
    %v3743 = vrot.slane %v3742, 2
    %v3744 = vmax.f32 %v3742, %v3743
    %v3745 = vrot.slane %v3744, 1
    %v3746 = vmax.f32 %v3744, %v3745
    %v3747 = vmax.f32 %v2986, %v2987
    %v3748 = vrot.slane %v3747, 4
    %v3749 = vmax.f32 %v3747, %v3748
    %v3750 = vrot.slane %v3749, 2
    %v3751 = vmax.f32 %v3749, %v3750
    %v3752 = vrot.slane %v3751, 1
    %v3753 = vmax.f32 %v3751, %v3752
    %v3754 = vmax.f32 %v2988, %v2989
    %v3755 = vrot.slane %v3754, 4
    %v3756 = vmax.f32 %v3754, %v3755
    %v3757 = vrot.slane %v3756, 2
    %v3758 = vmax.f32 %v3756, %v3757
    %v3759 = vrot.slane %v3758, 1
    %v3760 = vmax.f32 %v3758, %v3759
    %v3761 = vmax.f32 %v2990, %v2991
    %v3762 = vrot.slane %v3761, 4
    %v3763 = vmax.f32 %v3761, %v3762
    %v3764 = vrot.slane %v3763, 2
    %v3765 = vmax.f32 %v3763, %v3764
    %v3766 = vrot.slane %v3765, 1
    %v3767 = vmax.f32 %v3765, %v3766
    %v3768 = vmax.f32 %v2992, %v2993
    %v3769 = vrot.slane %v3768, 4
    %v3770 = vmax.f32 %v3768, %v3769
    %v3771 = vrot.slane %v3770, 2
    %v3772 = vmax.f32 %v3770, %v3771
    %v3773 = vrot.slane %v3772, 1
    %v3774 = vmax.f32 %v3772, %v3773
    %v3775 = vmax.f32 %v2994, %v2995
    %v3776 = vrot.slane %v3775, 4
    %v3777 = vmax.f32 %v3775, %v3776
    %v3778 = vrot.slane %v3777, 2
    %v3779 = vmax.f32 %v3777, %v3778
    %v3780 = vrot.slane %v3779, 1
    %v3781 = vmax.f32 %v3779, %v3780
    %v3782 = vmax.f32 %v2996, %v2997
    %v3783 = vrot.slane %v3782, 4
    %v3784 = vmax.f32 %v3782, %v3783
    %v3785 = vrot.slane %v3784, 2
    %v3786 = vmax.f32 %v3784, %v3785
    %v3787 = vrot.slane %v3786, 1
    %v3788 = vmax.f32 %v3786, %v3787
    %v3789 = vmax.f32 %v2998, %v2999
    %v3790 = vrot.slane %v3789, 4
    %v3791 = vmax.f32 %v3789, %v3790
    %v3792 = vrot.slane %v3791, 2
    %v3793 = vmax.f32 %v3791, %v3792
    %v3794 = vrot.slane %v3793, 1
    %v3795 = vmax.f32 %v3793, %v3794
    %v3796 = vmax.f32 %v3000, %v3001
    %v3797 = vrot.slane %v3796, 4
    %v3798 = vmax.f32 %v3796, %v3797
    %v3799 = vrot.slane %v3798, 2
    %v3800 = vmax.f32 %v3798, %v3799
    %v3801 = vrot.slane %v3800, 1
    %v3802 = vmax.f32 %v3800, %v3801
    %v3803 = vmax.f32 %v3002, %v3003
    %v3804 = vrot.slane %v3803, 4
    %v3805 = vmax.f32 %v3803, %v3804
    %v3806 = vrot.slane %v3805, 2
    %v3807 = vmax.f32 %v3805, %v3806
    %v3808 = vrot.slane %v3807, 1
    %v3809 = vmax.f32 %v3807, %v3808
    %v3810 = vmax.f32 %v3004, %v3005
    %v3811 = vrot.slane %v3810, 4
    %v3812 = vmax.f32 %v3810, %v3811
    %v3813 = vrot.slane %v3812, 2
    %v3814 = vmax.f32 %v3812, %v3813
    %v3815 = vrot.slane %v3814, 1
    %v3816 = vmax.f32 %v3814, %v3815
    %v3817 = vmax.f32 %v3006, %v3007
    %v3818 = vrot.slane %v3817, 4
    %v3819 = vmax.f32 %v3817, %v3818
    %v3820 = vrot.slane %v3819, 2
    %v3821 = vmax.f32 %v3819, %v3820
    %v3822 = vrot.slane %v3821, 1
    %v3823 = vmax.f32 %v3821, %v3822
    %v3824 = vmax.f32 %v3008, %v3009
    %v3825 = vrot.slane %v3824, 4
    %v3826 = vmax.f32 %v3824, %v3825
    %v3827 = vrot.slane %v3826, 2
    %v3828 = vmax.f32 %v3826, %v3827
    %v3829 = vrot.slane %v3828, 1
    %v3830 = vmax.f32 %v3828, %v3829
    %v3831 = vmax.f32 %v3010, %v3011
    %v3832 = vrot.slane %v3831, 4
    %v3833 = vmax.f32 %v3831, %v3832
    %v3834 = vrot.slane %v3833, 2
    %v3835 = vmax.f32 %v3833, %v3834
    %v3836 = vrot.slane %v3835, 1
    %v3837 = vmax.f32 %v3835, %v3836
    %v3838 = vmax.f32 %v3012, %v3013
    %v3839 = vrot.slane %v3838, 4
    %v3840 = vmax.f32 %v3838, %v3839
    %v3841 = vrot.slane %v3840, 2
    %v3842 = vmax.f32 %v3840, %v3841
    %v3843 = vrot.slane %v3842, 1
    %v3844 = vmax.f32 %v3842, %v3843
    %v3845 = vmax.f32 %v3014, %v3015
    %v3846 = vrot.slane %v3845, 4
    %v3847 = vmax.f32 %v3845, %v3846
    %v3848 = vrot.slane %v3847, 2
    %v3849 = vmax.f32 %v3847, %v3848
    %v3850 = vrot.slane %v3849, 1
    %v3851 = vmax.f32 %v3849, %v3850
    %v3852 = vmax.f32 %v3016, %v3017
    %v3853 = vrot.slane %v3852, 4
    %v3854 = vmax.f32 %v3852, %v3853
    %v3855 = vrot.slane %v3854, 2
    %v3856 = vmax.f32 %v3854, %v3855
    %v3857 = vrot.slane %v3856, 1
    %v3858 = vmax.f32 %v3856, %v3857
    %v3859 = vmax.f32 %v3018, %v3019
    %v3860 = vrot.slane %v3859, 4
    %v3861 = vmax.f32 %v3859, %v3860
    %v3862 = vrot.slane %v3861, 2
    %v3863 = vmax.f32 %v3861, %v3862
    %v3864 = vrot.slane %v3863, 1
    %v3865 = vmax.f32 %v3863, %v3864
    %v3866 = vmax.f32 %v3020, %v3021
    %v3867 = vrot.slane %v3866, 4
    %v3868 = vmax.f32 %v3866, %v3867
    %v3869 = vrot.slane %v3868, 2
    %v3870 = vmax.f32 %v3868, %v3869
    %v3871 = vrot.slane %v3870, 1
    %v3872 = vmax.f32 %v3870, %v3871
    %v3873 = vmax.f32 %v3022, %v3023
    %v3874 = vrot.slane %v3873, 4
    %v3875 = vmax.f32 %v3873, %v3874
    %v3876 = vrot.slane %v3875, 2
    %v3877 = vmax.f32 %v3875, %v3876
    %v3878 = vrot.slane %v3877, 1
    %v3879 = vmax.f32 %v3877, %v3878
    %v3880 = vmax.f32 %v3024, %v3025
    %v3881 = vrot.slane %v3880, 4
    %v3882 = vmax.f32 %v3880, %v3881
    %v3883 = vrot.slane %v3882, 2
    %v3884 = vmax.f32 %v3882, %v3883
    %v3885 = vrot.slane %v3884, 1
    %v3886 = vmax.f32 %v3884, %v3885
    %v3887 = vmax.f32 %v3026, %v3027
    %v3888 = vrot.slane %v3887, 4
    %v3889 = vmax.f32 %v3887, %v3888
    %v3890 = vrot.slane %v3889, 2
    %v3891 = vmax.f32 %v3889, %v3890
    %v3892 = vrot.slane %v3891, 1
    %v3893 = vmax.f32 %v3891, %v3892
    %v3894 = vmax.f32 %v3028, %v3029
    %v3895 = vrot.slane %v3894, 4
    %v3896 = vmax.f32 %v3894, %v3895
    %v3897 = vrot.slane %v3896, 2
    %v3898 = vmax.f32 %v3896, %v3897
    %v3899 = vrot.slane %v3898, 1
    %v3900 = vmax.f32 %v3898, %v3899
    %v3901 = vmax.f32 %v3030, %v3031
    %v3902 = vrot.slane %v3901, 4
    %v3903 = vmax.f32 %v3901, %v3902
    %v3904 = vrot.slane %v3903, 2
    %v3905 = vmax.f32 %v3903, %v3904
    %v3906 = vrot.slane %v3905, 1
    %v3907 = vmax.f32 %v3905, %v3906
    %v3908 = vmax.f32 %v3032, %v3033
    %v3909 = vrot.slane %v3908, 4
    %v3910 = vmax.f32 %v3908, %v3909
    %v3911 = vrot.slane %v3910, 2
    %v3912 = vmax.f32 %v3910, %v3911
    %v3913 = vrot.slane %v3912, 1
    %v3914 = vmax.f32 %v3912, %v3913
    %v3915 = vmax.f32 %v3034, %v3035
    %v3916 = vrot.slane %v3915, 4
    %v3917 = vmax.f32 %v3915, %v3916
    %v3918 = vrot.slane %v3917, 2
    %v3919 = vmax.f32 %v3917, %v3918
    %v3920 = vrot.slane %v3919, 1
    %v3921 = vmax.f32 %v3919, %v3920
    %v3922 = vmax.f32 %v3036, %v3037
    %v3923 = vrot.slane %v3922, 4
    %v3924 = vmax.f32 %v3922, %v3923
    %v3925 = vrot.slane %v3924, 2
    %v3926 = vmax.f32 %v3924, %v3925
    %v3927 = vrot.slane %v3926, 1
    %v3928 = vmax.f32 %v3926, %v3927
    %v3929 = vmax.f32 %v3038, %v3039
    %v3930 = vrot.slane %v3929, 4
    %v3931 = vmax.f32 %v3929, %v3930
    %v3932 = vrot.slane %v3931, 2
    %v3933 = vmax.f32 %v3931, %v3932
    %v3934 = vrot.slane %v3933, 1
    %v3935 = vmax.f32 %v3933, %v3934
    %v3936 = vpack.c.bf16 %v3046, %v3046
    %v3937 = vpack.c.bf16 %v3053, %v3053
    %v3938 = vpack.c.bf16 %v3060, %v3060
    %v3939 = vpack.c.bf16 %v3067, %v3067
    %v3940 = vpack.c.bf16 %v3074, %v3074
    %v3941 = vpack.c.bf16 %v3081, %v3081
    %v3942 = vpack.c.bf16 %v3088, %v3088
    %v3943 = vpack.c.bf16 %v3095, %v3095
    %v3944 = vpack.c.bf16 %v3102, %v3102
    %v3945 = vpack.c.bf16 %v3109, %v3109
    %v3946 = vpack.c.bf16 %v3116, %v3116
    %v3947 = vpack.c.bf16 %v3123, %v3123
    %v3948 = vpack.c.bf16 %v3130, %v3130
    %v3949 = vpack.c.bf16 %v3137, %v3137
    %v3950 = vpack.c.bf16 %v3144, %v3144
    %v3951 = vpack.c.bf16 %v3151, %v3151
    %v3952 = vpack.c.bf16 %v3158, %v3158
    %v3953 = vpack.c.bf16 %v3165, %v3165
    %v3954 = vpack.c.bf16 %v3172, %v3172
    %v3955 = vpack.c.bf16 %v3179, %v3179
    %v3956 = vpack.c.bf16 %v3186, %v3186
    %v3957 = vpack.c.bf16 %v3193, %v3193
    %v3958 = vpack.c.bf16 %v3200, %v3200
    %v3959 = vpack.c.bf16 %v3207, %v3207
    %v3960 = vpack.c.bf16 %v3214, %v3214
    %v3961 = vpack.c.bf16 %v3221, %v3221
    %v3962 = vpack.c.bf16 %v3228, %v3228
    %v3963 = vpack.c.bf16 %v3235, %v3235
    %v3964 = vpack.c.bf16 %v3242, %v3242
    %v3965 = vpack.c.bf16 %v3249, %v3249
    %v3966 = vpack.c.bf16 %v3256, %v3256
    %v3967 = vpack.c.bf16 %v3263, %v3263
    %v3968 = vpack.c.bf16 %v3270, %v3270
    %v3969 = vpack.c.bf16 %v3277, %v3277
    %v3970 = vpack.c.bf16 %v3284, %v3284
    %v3971 = vpack.c.bf16 %v3291, %v3291
    %v3972 = vpack.c.bf16 %v3298, %v3298
    %v3973 = vpack.c.bf16 %v3305, %v3305
    %v3974 = vpack.c.bf16 %v3312, %v3312
    %v3975 = vpack.c.bf16 %v3319, %v3319
    %v3976 = vpack.c.bf16 %v3326, %v3326
    %v3977 = vpack.c.bf16 %v3333, %v3333
    %v3978 = vpack.c.bf16 %v3340, %v3340
    %v3979 = vpack.c.bf16 %v3347, %v3347
    %v3980 = vpack.c.bf16 %v3354, %v3354
    %v3981 = vpack.c.bf16 %v3361, %v3361
    %v3982 = vpack.c.bf16 %v3368, %v3368
    %v3983 = vpack.c.bf16 %v3375, %v3375
    %v3984 = vpack.c.bf16 %v3382, %v3382
    %v3985 = vpack.c.bf16 %v3389, %v3389
    %v3986 = vpack.c.bf16 %v3396, %v3396
    %v3987 = vpack.c.bf16 %v3403, %v3403
    %v3988 = vpack.c.bf16 %v3410, %v3410
    %v3989 = vpack.c.bf16 %v3417, %v3417
    %v3990 = vpack.c.bf16 %v3424, %v3424
    %v3991 = vpack.c.bf16 %v3431, %v3431
    %v3992 = vpack.c.bf16 %v3438, %v3438
    %v3993 = vpack.c.bf16 %v3445, %v3445
    %v3994 = vpack.c.bf16 %v3452, %v3452
    %v3995 = vpack.c.bf16 %v3459, %v3459
    %v3996 = vpack.c.bf16 %v3466, %v3466
    %v3997 = vpack.c.bf16 %v3473, %v3473
    %v3998 = vpack.c.bf16 %v3480, %v3480
    %v3999 = vpack.c.bf16 %v3487, %v3487
    %v4000 = vpack.c.bf16 %v3494, %v3494
    %v4001 = vpack.c.bf16 %v3501, %v3501
    %v4002 = vpack.c.bf16 %v3508, %v3508
    %v4003 = vpack.c.bf16 %v3515, %v3515
    %v4004 = vpack.c.bf16 %v3522, %v3522
    %v4005 = vpack.c.bf16 %v3529, %v3529
    %v4006 = vpack.c.bf16 %v3536, %v3536
    %v4007 = vpack.c.bf16 %v3543, %v3543
    %v4008 = vpack.c.bf16 %v3550, %v3550
    %v4009 = vpack.c.bf16 %v3557, %v3557
    %v4010 = vpack.c.bf16 %v3564, %v3564
    %v4011 = vpack.c.bf16 %v3571, %v3571
    %v4012 = vpack.c.bf16 %v3578, %v3578
    %v4013 = vpack.c.bf16 %v3585, %v3585
    %v4014 = vpack.c.bf16 %v3592, %v3592
    %v4015 = vpack.c.bf16 %v3599, %v3599
    %v4016 = vpack.c.bf16 %v3606, %v3606
    %v4017 = vpack.c.bf16 %v3613, %v3613
    %v4018 = vpack.c.bf16 %v3620, %v3620
    %v4019 = vpack.c.bf16 %v3627, %v3627
    %v4020 = vpack.c.bf16 %v3634, %v3634
    %v4021 = vpack.c.bf16 %v3641, %v3641
    %v4022 = vpack.c.bf16 %v3648, %v3648
    %v4023 = vpack.c.bf16 %v3655, %v3655
    %v4024 = vpack.c.bf16 %v3662, %v3662
    %v4025 = vpack.c.bf16 %v3669, %v3669
    %v4026 = vpack.c.bf16 %v3676, %v3676
    %v4027 = vpack.c.bf16 %v3683, %v3683
    %v4028 = vpack.c.bf16 %v3690, %v3690
    %v4029 = vpack.c.bf16 %v3697, %v3697
    %v4030 = vpack.c.bf16 %v3704, %v3704
    %v4031 = vpack.c.bf16 %v3711, %v3711
    %v4032 = vpack.c.bf16 %v3718, %v3718
    %v4033 = vpack.c.bf16 %v3725, %v3725
    %v4034 = vpack.c.bf16 %v3732, %v3732
    %v4035 = vpack.c.bf16 %v3739, %v3739
    %v4036 = vpack.c.bf16 %v3746, %v3746
    %v4037 = vpack.c.bf16 %v3753, %v3753
    %v4038 = vpack.c.bf16 %v3760, %v3760
    %v4039 = vpack.c.bf16 %v3767, %v3767
    %v4040 = vpack.c.bf16 %v3774, %v3774
    %v4041 = vpack.c.bf16 %v3781, %v3781
    %v4042 = vpack.c.bf16 %v3788, %v3788
    %v4043 = vpack.c.bf16 %v3795, %v3795
    %v4044 = vpack.c.bf16 %v3802, %v3802
    %v4045 = vpack.c.bf16 %v3809, %v3809
    %v4046 = vpack.c.bf16 %v3816, %v3816
    %v4047 = vpack.c.bf16 %v3823, %v3823
    %v4048 = vpack.c.bf16 %v3830, %v3830
    %v4049 = vpack.c.bf16 %v3837, %v3837
    %v4050 = vpack.c.bf16 %v3844, %v3844
    %v4051 = vpack.c.bf16 %v3851, %v3851
    %v4052 = vpack.c.bf16 %v3858, %v3858
    %v4053 = vpack.c.bf16 %v3865, %v3865
    %v4054 = vpack.c.bf16 %v3872, %v3872
    %v4055 = vpack.c.bf16 %v3879, %v3879
    %v4056 = vpack.c.bf16 %v3886, %v3886
    %v4057 = vpack.c.bf16 %v3893, %v3893
    %v4058 = vpack.c.bf16 %v3900, %v3900
    %v4059 = vpack.c.bf16 %v3907, %v3907
    %v4060 = vpack.c.bf16 %v3914, %v3914
    %v4061 = vpack.c.bf16 %v3921, %v3921
    %v4062 = vpack.c.bf16 %v3928, %v3928
    %v4063 = vpack.c.bf16 %v3935, %v3935
    %v4064 = vld [vmem:[%s4] sm:$0xff]
    %v4065 = vld [vmem:[%s4 + $0x8] sm:$0xff]
    %v4066 = vld [vmem:[%s4 + $0x10] sm:$0xff]
    %v4067 = vld [vmem:[%s4 + $0x18] sm:$0xff]
    %v4068 = vld [vmem:[%s4 + $0x20] sm:$0xff]
    %v4069 = vld [vmem:[%s4 + $0x28] sm:$0xff]
    %v4070 = vld [vmem:[%s4 + $0x30] sm:$0xff]
    %v4071 = vld [vmem:[%s4 + $0x38] sm:$0xff]
    %v4072 = vld [vmem:[%s4 + $0x40] sm:$0xff]
    %v4073 = vld [vmem:[%s4 + $0x48] sm:$0xff]
    %v4074 = vld [vmem:[%s4 + $0x50] sm:$0xff]
    %v4075 = vld [vmem:[%s4 + $0x58] sm:$0xff]
    %v4076 = vld [vmem:[%s4 + $0x60] sm:$0xff]
    %v4077 = vld [vmem:[%s4 + $0x68] sm:$0xff]
    %v4078 = vld [vmem:[%s4 + $0x70] sm:$0xff]
    %v4079 = vld [vmem:[%s4 + $0x78] sm:$0xff]
    %v4080 = vld [vmem:[%s1] sm:$0xf]
    %v4081 = vld [vmem:[%s1 + $0x4] sm:$0xf]
    %v4082 = vld [vmem:[%s1 + $0x8] sm:$0xf]
    %v4083 = vld [vmem:[%s1 + $0xc] sm:$0xf]
    %v4084 = vld [vmem:[%s1 + $0x10] sm:$0xf]
    %v4085 = vld [vmem:[%s1 + $0x14] sm:$0xf]
    %v4086 = vld [vmem:[%s1 + $0x18] sm:$0xf]
    %v4087 = vld [vmem:[%s1 + $0x1c] sm:$0xf]
    %v4088 = vld [vmem:[%s1 + $0x20] sm:$0xf]
    %v4089 = vld [vmem:[%s1 + $0x24] sm:$0xf]
    %v4090 = vld [vmem:[%s1 + $0x28] sm:$0xf]
    %v4091 = vld [vmem:[%s1 + $0x2c] sm:$0xf]
    %v4092 = vld [vmem:[%s1 + $0x30] sm:$0xf]
    %v4093 = vld [vmem:[%s1 + $0x34] sm:$0xf]
    %v4094 = vld [vmem:[%s1 + $0x38] sm:$0xf]
    %v4095 = vld [vmem:[%s1 + $0x3c] sm:$0xf]
    %v4096 = vld [vmem:[%s5] sm:$0xff]
    %v4097 = vld [vmem:[%s5 + $0x8] sm:$0xff]
    %v4098 = vld [vmem:[%s5 + $0x10] sm:$0xff]
    %v4099 = vld [vmem:[%s5 + $0x18] sm:$0xff]
    %v4100 = vld [vmem:[%s5 + $0x20] sm:$0xff]
    %v4101 = vld [vmem:[%s5 + $0x28] sm:$0xff]
    %v4102 = vld [vmem:[%s5 + $0x30] sm:$0xff]
    %v4103 = vld [vmem:[%s5 + $0x38] sm:$0xff]
    %v4104 = vld [vmem:[%s5 + $0x40] sm:$0xff]
    %v4105 = vld [vmem:[%s5 + $0x48] sm:$0xff]
    %v4106 = vld [vmem:[%s5 + $0x50] sm:$0xff]
    %v4107 = vld [vmem:[%s5 + $0x58] sm:$0xff]
    %v4108 = vld [vmem:[%s5 + $0x60] sm:$0xff]
    %v4109 = vld [vmem:[%s5 + $0x68] sm:$0xff]
    %v4110 = vld [vmem:[%s5 + $0x70] sm:$0xff]
    %v4111 = vld [vmem:[%s5 + $0x78] sm:$0xff]
    %v4128 = vunpack.c.l.b16 %v4080
    %v4129 = vunpack.c.l.b16 %v4081
    %v4130 = vunpack.c.l.b16 %v4082
    %v4131 = vunpack.c.l.b16 %v4083
    %v4132 = vunpack.c.l.b16 %v4084
    %v4133 = vunpack.c.l.b16 %v4085
    %v4134 = vunpack.c.l.b16 %v4086
    %v4135 = vunpack.c.l.b16 %v4087
    %v4136 = vunpack.c.l.b16 %v4088
    %v4137 = vunpack.c.l.b16 %v4089
    %v4138 = vunpack.c.l.b16 %v4090
    %v4139 = vunpack.c.l.b16 %v4091
    %v4140 = vunpack.c.l.b16 %v4092
    %v4141 = vunpack.c.l.b16 %v4093
    %v4142 = vunpack.c.l.b16 %v4094
    %v4143 = vunpack.c.l.b16 %v4095
    %v4144 = vpack.c.b16 %v4129, %v4128
    %v4145 = vpack.c.b16 %v4131, %v4130
    %v4146 = vpack.c.b16 %v4133, %v4132
    %v4147 = vpack.c.b16 %v4135, %v4134
    %v4148 = vpack.c.b16 %v4137, %v4136
    %v4149 = vpack.c.b16 %v4139, %v4138
    %v4150 = vpack.c.b16 %v4141, %v4140
    %v4151 = vpack.c.b16 %v4143, %v4142
    %v4176 = vunpack.c.l.b16 %v4096
    %v4177 = vunpack.c.h.b16 %v4096
    %v4178 = vunpack.c.l.b16 %v4097
    %v4179 = vunpack.c.h.b16 %v4097
    %v4180 = vunpack.c.l.b16 %v4098
    %v4181 = vunpack.c.h.b16 %v4098
    %v4182 = vunpack.c.l.b16 %v4099
    %v4183 = vunpack.c.h.b16 %v4099
    %v4184 = vunpack.c.l.b16 %v4100
    %v4185 = vunpack.c.h.b16 %v4100
    %v4186 = vunpack.c.l.b16 %v4101
    %v4187 = vunpack.c.h.b16 %v4101
    %v4188 = vunpack.c.l.b16 %v4102
    %v4189 = vunpack.c.h.b16 %v4102
    %v4190 = vunpack.c.l.b16 %v4103
    %v4191 = vunpack.c.h.b16 %v4103
    %v4192 = vunpack.c.l.b16 %v4104
    %v4193 = vunpack.c.h.b16 %v4104
    %v4194 = vunpack.c.l.b16 %v4105
    %v4195 = vunpack.c.h.b16 %v4105
    %v4196 = vunpack.c.l.b16 %v4106
    %v4197 = vunpack.c.h.b16 %v4106
    %v4198 = vunpack.c.l.b16 %v4107
    %v4199 = vunpack.c.h.b16 %v4107
    %v4200 = vunpack.c.l.b16 %v4108
    %v4201 = vunpack.c.h.b16 %v4108
    %v4202 = vunpack.c.l.b16 %v4109
    %v4203 = vunpack.c.h.b16 %v4109
    %v4204 = vunpack.c.l.b16 %v4110
    %v4205 = vunpack.c.h.b16 %v4110
    %v4206 = vunpack.c.l.b16 %v4111
    %v4207 = vunpack.c.h.b16 %v4111
    %v4208 = vpack.c.b16 %v4178, %v4176
    %v4209 = vpack.c.b16 %v4179, %v4177
    %v4210 = vpack.c.b16 %v4182, %v4180
    %v4211 = vpack.c.b16 %v4183, %v4181
    %v4212 = vpack.c.b16 %v4186, %v4184
    %v4213 = vpack.c.b16 %v4187, %v4185
    %v4214 = vpack.c.b16 %v4190, %v4188
    %v4215 = vpack.c.b16 %v4191, %v4189
    %v4216 = vpack.c.b16 %v4194, %v4192
    %v4217 = vpack.c.b16 %v4195, %v4193
    %v4218 = vpack.c.b16 %v4198, %v4196
    %v4219 = vpack.c.b16 %v4199, %v4197
    %v4220 = vpack.c.b16 %v4202, %v4200
    %v4221 = vpack.c.b16 %v4203, %v4201
    %v4222 = vpack.c.b16 %v4206, %v4204
    %v4223 = vpack.c.b16 %v4207, %v4205
    %4240 = vmatprep.subr.bf16.mxu0 %v4209
    %4241 = vmatpush1.bf16.msra.mxu0 %v4208
    %4242 = vmatprep.subr.bf16.mxu0 %v4211
    %4243 = vmatpush1.bf16.msra.mxu0 %v4210
    %4244 = vmatprep.subr.bf16.mxu0 %v4213
    %4245 = vmatpush1.bf16.msra.mxu0 %v4212
    %4246 = vmatprep.subr.bf16.mxu0 %v4215
    %4247 = vmatpush1.bf16.msra.mxu0 %v4214
    %4248 = vmatprep.subr.bf16.mxu0 %v4217
    %4249 = vmatpush1.bf16.msra.mxu0 %v4216
    %4250 = vmatprep.subr.bf16.mxu0 %v4219
    %4251 = vmatpush1.bf16.msra.mxu0 %v4218
    %4252 = vmatprep.subr.bf16.mxu0 %v4221
    %4253 = vmatpush1.bf16.msra.mxu0 %v4220
    %4254 = vmatprep.subr.bf16.mxu0 %v4223
    %4255 = vmatpush1.bf16.msra.mxu0 %v4222
    %4256 = vmatprep.subr.bf16.mxu0 0
    %4257 = vmatpush1.bf16.msra.mxu0 0
    %4258 = vmatprep.subr.bf16.mxu0 0
    %4259 = vmatpush1.bf16.msra.mxu0 0
    %4260 = vmatprep.subr.bf16.mxu0 0
    %4261 = vmatpush1.bf16.msra.mxu0 0
    %4262 = vmatprep.subr.bf16.mxu0 0
    %4263 = vmatpush1.bf16.msra.mxu0 0
    %4264 = vmatprep.subr.bf16.mxu0 0
    %4265 = vmatpush1.bf16.msra.mxu0 0
    %4266 = vmatprep.subr.bf16.mxu0 0
    %4267 = vmatpush1.bf16.msra.mxu0 0
    %4268 = vmatprep.subr.bf16.mxu0 0
    %4269 = vmatpush1.bf16.msra.mxu0 0
    %4270 = vmatprep.subr.bf16.mxu0 0
    %4271 = vmatpush1.bf16.msra.mxu0 0
    %4272 = vmatprep.mubr.bf16.mxu0 0
    %4273 = vmatmul.mubr.bf16.gmra.mrb[0].mxu0 %v4144
    %v4274 = vpop.f32.mrb[0].mxu0
    %v4275 = vadd.f32 0.0, %v4274
    %v4276 = vpop.f32.mrb[0].mxu0
    %v4277 = vadd.f32 0.0, %v4276
    %v4278 = vpop.f32.mrb[0].mxu0
    %v4279 = vadd.f32 0.0, %v4278
    %v4280 = vpop.f32.mrb[0].mxu0
    %v4281 = vadd.f32 0.0, %v4280
    %4282 = vmatprep.mubr.bf16.mxu0 0
    %4283 = vmatmul.mubr.bf16.gmra.mrb[0].mxu0 %v4145
    %v4284 = vpop.f32.mrb[0].mxu0
    %v4285 = vadd.f32 0.0, %v4284
    %v4286 = vpop.f32.mrb[0].mxu0
    %v4287 = vadd.f32 0.0, %v4286
    %v4288 = vpop.f32.mrb[0].mxu0
    %v4289 = vadd.f32 0.0, %v4288
    %v4290 = vpop.f32.mrb[0].mxu0
    %v4291 = vadd.f32 0.0, %v4290
    %4292 = vmatprep.mubr.bf16.mxu0 0
    %4293 = vmatmul.mubr.bf16.gmra.mrb[0].mxu0 %v4146
    %v4294 = vpop.f32.mrb[0].mxu0
    %v4295 = vadd.f32 0.0, %v4294
    %v4296 = vpop.f32.mrb[0].mxu0
    %v4297 = vadd.f32 0.0, %v4296
    %v4298 = vpop.f32.mrb[0].mxu0
    %v4299 = vadd.f32 0.0, %v4298
    %v4300 = vpop.f32.mrb[0].mxu0
    %v4301 = vadd.f32 0.0, %v4300
    %4302 = vmatprep.mubr.bf16.mxu0 0
    %4303 = vmatmul.mubr.bf16.gmra.mrb[0].mxu0 %v4147
    %v4304 = vpop.f32.mrb[0].mxu0
    %v4305 = vadd.f32 0.0, %v4304
    %v4306 = vpop.f32.mrb[0].mxu0
    %v4307 = vadd.f32 0.0, %v4306
    %v4308 = vpop.f32.mrb[0].mxu0
    %v4309 = vadd.f32 0.0, %v4308
    %v4310 = vpop.f32.mrb[0].mxu0
    %v4311 = vadd.f32 0.0, %v4310
    %4312 = vmatprep.mubr.bf16.mxu0 0
    %4313 = vmatmul.mubr.bf16.gmra.mrb[0].mxu0 %v4148
    %v4314 = vpop.f32.mrb[0].mxu0
    %v4315 = vadd.f32 0.0, %v4314
    %v4316 = vpop.f32.mrb[0].mxu0
    %v4317 = vadd.f32 0.0, %v4316
    %v4318 = vpop.f32.mrb[0].mxu0
    %v4319 = vadd.f32 0.0, %v4318
    %v4320 = vpop.f32.mrb[0].mxu0
    %v4321 = vadd.f32 0.0, %v4320
    %4322 = vmatprep.mubr.bf16.mxu0 0
    %4323 = vmatmul.mubr.bf16.gmra.mrb[0].mxu0 %v4149
    %v4324 = vpop.f32.mrb[0].mxu0
    %v4325 = vadd.f32 0.0, %v4324
    %v4326 = vpop.f32.mrb[0].mxu0
    %v4327 = vadd.f32 0.0, %v4326
    %v4328 = vpop.f32.mrb[0].mxu0
    %v4329 = vadd.f32 0.0, %v4328
    %v4330 = vpop.f32.mrb[0].mxu0
    %v4331 = vadd.f32 0.0, %v4330
    %4332 = vmatprep.mubr.bf16.mxu0 0
    %4333 = vmatmul.mubr.bf16.gmra.mrb[0].mxu0 %v4150
    %v4334 = vpop.f32.mrb[0].mxu0
    %v4335 = vadd.f32 0.0, %v4334
    %v4336 = vpop.f32.mrb[0].mxu0
    %v4337 = vadd.f32 0.0, %v4336
    %v4338 = vpop.f32.mrb[0].mxu0
    %v4339 = vadd.f32 0.0, %v4338
    %v4340 = vpop.f32.mrb[0].mxu0
    %v4341 = vadd.f32 0.0, %v4340
    %4342 = vmatprep.mubr.bf16.mxu0 0
    %4343 = vmatmul.mubr.bf16.gmra.mrb[0].mxu0 %v4151
    %v4344 = vpop.f32.mrb[0].mxu0
    %v4345 = vadd.f32 0.0, %v4344
    %v4346 = vpop.f32.mrb[0].mxu0
    %v4347 = vadd.f32 0.0, %v4346
    %v4348 = vpop.f32.mrb[0].mxu0
    %v4349 = vadd.f32 0.0, %v4348
    %v4350 = vpop.f32.mrb[0].mxu0
    %v4351 = vadd.f32 0.0, %v4350
    %4352 = vdwg.mxu0
    %v4481 = vunpack.c.l.b16 %v3936
    %v4482 = vunpack.c.l.b16 %v3937
    %v4483 = vunpack.c.l.b16 %v3938
    %v4484 = vunpack.c.l.b16 %v3939
    %v4485 = vunpack.c.l.b16 %v3940
    %v4486 = vunpack.c.l.b16 %v3941
    %v4487 = vunpack.c.l.b16 %v3942
    %v4488 = vunpack.c.l.b16 %v3943
    %v4489 = vunpack.c.l.b16 %v3944
    %v4490 = vunpack.c.l.b16 %v3945
    %v4491 = vunpack.c.l.b16 %v3946
    %v4492 = vunpack.c.l.b16 %v3947
    %v4493 = vunpack.c.l.b16 %v3948
    %v4494 = vunpack.c.l.b16 %v3949
    %v4495 = vunpack.c.l.b16 %v3950
    %v4496 = vunpack.c.l.b16 %v3951
    %v4497 = vunpack.c.l.b16 %v3952
    %v4498 = vunpack.c.l.b16 %v3953
    %v4499 = vunpack.c.l.b16 %v3954
    %v4500 = vunpack.c.l.b16 %v3955
    %v4501 = vunpack.c.l.b16 %v3956
    %v4502 = vunpack.c.l.b16 %v3957
    %v4503 = vunpack.c.l.b16 %v3958
    %v4504 = vunpack.c.l.b16 %v3959
    %v4505 = vunpack.c.l.b16 %v3960
    %v4506 = vunpack.c.l.b16 %v3961
    %v4507 = vunpack.c.l.b16 %v3962
    %v4508 = vunpack.c.l.b16 %v3963
    %v4509 = vunpack.c.l.b16 %v3964
    %v4510 = vunpack.c.l.b16 %v3965
    %v4511 = vunpack.c.l.b16 %v3966
    %v4512 = vunpack.c.l.b16 %v3967
    %v4513 = vunpack.c.l.b16 %v3968
    %v4514 = vunpack.c.l.b16 %v3969
    %v4515 = vunpack.c.l.b16 %v3970
    %v4516 = vunpack.c.l.b16 %v3971
    %v4517 = vunpack.c.l.b16 %v3972
    %v4518 = vunpack.c.l.b16 %v3973
    %v4519 = vunpack.c.l.b16 %v3974
    %v4520 = vunpack.c.l.b16 %v3975
    %v4521 = vunpack.c.l.b16 %v3976
    %v4522 = vunpack.c.l.b16 %v3977
    %v4523 = vunpack.c.l.b16 %v3978
    %v4524 = vunpack.c.l.b16 %v3979
    %v4525 = vunpack.c.l.b16 %v3980
    %v4526 = vunpack.c.l.b16 %v3981
    %v4527 = vunpack.c.l.b16 %v3982
    %v4528 = vunpack.c.l.b16 %v3983
    %v4529 = vunpack.c.l.b16 %v3984
    %v4530 = vunpack.c.l.b16 %v3985
    %v4531 = vunpack.c.l.b16 %v3986
    %v4532 = vunpack.c.l.b16 %v3987
    %v4533 = vunpack.c.l.b16 %v3988
    %v4534 = vunpack.c.l.b16 %v3989
    %v4535 = vunpack.c.l.b16 %v3990
    %v4536 = vunpack.c.l.b16 %v3991
    %v4537 = vunpack.c.l.b16 %v3992
    %v4538 = vunpack.c.l.b16 %v3993
    %v4539 = vunpack.c.l.b16 %v3994
    %v4540 = vunpack.c.l.b16 %v3995
    %v4541 = vunpack.c.l.b16 %v3996
    %v4542 = vunpack.c.l.b16 %v3997
    %v4543 = vunpack.c.l.b16 %v3998
    %v4544 = vunpack.c.l.b16 %v3999
    %v4545 = vunpack.c.l.b16 %v4000
    %v4546 = vunpack.c.l.b16 %v4001
    %v4547 = vunpack.c.l.b16 %v4002
    %v4548 = vunpack.c.l.b16 %v4003
    %v4549 = vunpack.c.l.b16 %v4004
    %v4550 = vunpack.c.l.b16 %v4005
    %v4551 = vunpack.c.l.b16 %v4006
    %v4552 = vunpack.c.l.b16 %v4007
    %v4553 = vunpack.c.l.b16 %v4008
    %v4554 = vunpack.c.l.b16 %v4009
    %v4555 = vunpack.c.l.b16 %v4010
    %v4556 = vunpack.c.l.b16 %v4011
    %v4557 = vunpack.c.l.b16 %v4012
    %v4558 = vunpack.c.l.b16 %v4013
    %v4559 = vunpack.c.l.b16 %v4014
    %v4560 = vunpack.c.l.b16 %v4015
    %v4561 = vunpack.c.l.b16 %v4016
    %v4562 = vunpack.c.l.b16 %v4017
    %v4563 = vunpack.c.l.b16 %v4018
    %v4564 = vunpack.c.l.b16 %v4019
    %v4565 = vunpack.c.l.b16 %v4020
    %v4566 = vunpack.c.l.b16 %v4021
    %v4567 = vunpack.c.l.b16 %v4022
    %v4568 = vunpack.c.l.b16 %v4023
    %v4569 = vunpack.c.l.b16 %v4024
    %v4570 = vunpack.c.l.b16 %v4025
    %v4571 = vunpack.c.l.b16 %v4026
    %v4572 = vunpack.c.l.b16 %v4027
    %v4573 = vunpack.c.l.b16 %v4028
    %v4574 = vunpack.c.l.b16 %v4029
    %v4575 = vunpack.c.l.b16 %v4030
    %v4576 = vunpack.c.l.b16 %v4031
    %v4577 = vunpack.c.l.b16 %v4032
    %v4578 = vunpack.c.l.b16 %v4033
    %v4579 = vunpack.c.l.b16 %v4034
    %v4580 = vunpack.c.l.b16 %v4035
    %v4581 = vunpack.c.l.b16 %v4036
    %v4582 = vunpack.c.l.b16 %v4037
    %v4583 = vunpack.c.l.b16 %v4038
    %v4584 = vunpack.c.l.b16 %v4039
    %v4585 = vunpack.c.l.b16 %v4040
    %v4586 = vunpack.c.l.b16 %v4041
    %v4587 = vunpack.c.l.b16 %v4042
    %v4588 = vunpack.c.l.b16 %v4043
    %v4589 = vunpack.c.l.b16 %v4044
    %v4590 = vunpack.c.l.b16 %v4045
    %v4591 = vunpack.c.l.b16 %v4046
    %v4592 = vunpack.c.l.b16 %v4047
    %v4593 = vunpack.c.l.b16 %v4048
    %v4594 = vunpack.c.l.b16 %v4049
    %v4595 = vunpack.c.l.b16 %v4050
    %v4596 = vunpack.c.l.b16 %v4051
    %v4597 = vunpack.c.l.b16 %v4052
    %v4598 = vunpack.c.l.b16 %v4053
    %v4599 = vunpack.c.l.b16 %v4054
    %v4600 = vunpack.c.l.b16 %v4055
    %v4601 = vunpack.c.l.b16 %v4056
    %v4602 = vunpack.c.l.b16 %v4057
    %v4603 = vunpack.c.l.b16 %v4058
    %v4604 = vunpack.c.l.b16 %v4059
    %v4605 = vunpack.c.l.b16 %v4060
    %v4606 = vunpack.c.l.b16 %v4061
    %v4607 = vunpack.c.l.b16 %v4062
    %v4608 = vunpack.c.l.b16 %v4063
    %vm4609 = vcmask 1041409
    %v4610 = vsel %vm4609, %v4482, %v4481
    %vm4611 = vcmask 1042434
    %v4612 = vsel %vm4611, %v4483, %v4610
    %vm4613 = vcmask 1043459
    %v4614 = vsel %vm4613, %v4484, %v4612
    %vm4615 = vcmask 1044484
    %v4616 = vsel %vm4615, %v4485, %v4614
    %vm4617 = vcmask 1045509
    %v4618 = vsel %vm4617, %v4486, %v4616
    %vm4619 = vcmask 1046534
    %v4620 = vsel %vm4619, %v4487, %v4618
    %vm4621 = vcmask 1047559
    %v4622 = vsel %vm4621, %v4488, %v4620
    %v4623 = vsel %vm4609, %v4490, %v4489
    %v4624 = vsel %vm4611, %v4491, %v4623
    %v4625 = vsel %vm4613, %v4492, %v4624
    %v4626 = vsel %vm4615, %v4493, %v4625
    %v4627 = vsel %vm4617, %v4494, %v4626
    %v4628 = vsel %vm4619, %v4495, %v4627
    %v4629 = vsel %vm4621, %v4496, %v4628
    %v4630 = vsel %vm4609, %v4498, %v4497
    %v4631 = vsel %vm4611, %v4499, %v4630
    %v4632 = vsel %vm4613, %v4500, %v4631
    %v4633 = vsel %vm4615, %v4501, %v4632
    %v4634 = vsel %vm4617, %v4502, %v4633
    %v4635 = vsel %vm4619, %v4503, %v4634
    %v4636 = vsel %vm4621, %v4504, %v4635
    %v4637 = vsel %vm4609, %v4506, %v4505
    %v4638 = vsel %vm4611, %v4507, %v4637
    %v4639 = vsel %vm4613, %v4508, %v4638
    %v4640 = vsel %vm4615, %v4509, %v4639
    %v4641 = vsel %vm4617, %v4510, %v4640
    %v4642 = vsel %vm4619, %v4511, %v4641
    %v4643 = vsel %vm4621, %v4512, %v4642
    %v4644 = vsel %vm4609, %v4514, %v4513
    %v4645 = vsel %vm4611, %v4515, %v4644
    %v4646 = vsel %vm4613, %v4516, %v4645
    %v4647 = vsel %vm4615, %v4517, %v4646
    %v4648 = vsel %vm4617, %v4518, %v4647
    %v4649 = vsel %vm4619, %v4519, %v4648
    %v4650 = vsel %vm4621, %v4520, %v4649
    %v4651 = vsel %vm4609, %v4522, %v4521
    %v4652 = vsel %vm4611, %v4523, %v4651
    %v4653 = vsel %vm4613, %v4524, %v4652
    %v4654 = vsel %vm4615, %v4525, %v4653
    %v4655 = vsel %vm4617, %v4526, %v4654
    %v4656 = vsel %vm4619, %v4527, %v4655
    %v4657 = vsel %vm4621, %v4528, %v4656
    %v4658 = vsel %vm4609, %v4530, %v4529
    %v4659 = vsel %vm4611, %v4531, %v4658
    %v4660 = vsel %vm4613, %v4532, %v4659
    %v4661 = vsel %vm4615, %v4533, %v4660
    %v4662 = vsel %vm4617, %v4534, %v4661
    %v4663 = vsel %vm4619, %v4535, %v4662
    %v4664 = vsel %vm4621, %v4536, %v4663
    %v4665 = vsel %vm4609, %v4538, %v4537
    %v4666 = vsel %vm4611, %v4539, %v4665
    %v4667 = vsel %vm4613, %v4540, %v4666
    %v4668 = vsel %vm4615, %v4541, %v4667
    %v4669 = vsel %vm4617, %v4542, %v4668
    %v4670 = vsel %vm4619, %v4543, %v4669
    %v4671 = vsel %vm4621, %v4544, %v4670
    %v4672 = vsel %vm4609, %v4546, %v4545
    %v4673 = vsel %vm4611, %v4547, %v4672
    %v4674 = vsel %vm4613, %v4548, %v4673
    %v4675 = vsel %vm4615, %v4549, %v4674
    %v4676 = vsel %vm4617, %v4550, %v4675
    %v4677 = vsel %vm4619, %v4551, %v4676
    %v4678 = vsel %vm4621, %v4552, %v4677
    %v4679 = vsel %vm4609, %v4554, %v4553
    %v4680 = vsel %vm4611, %v4555, %v4679
    %v4681 = vsel %vm4613, %v4556, %v4680
    %v4682 = vsel %vm4615, %v4557, %v4681
    %v4683 = vsel %vm4617, %v4558, %v4682
    %v4684 = vsel %vm4619, %v4559, %v4683
    %v4685 = vsel %vm4621, %v4560, %v4684
    %v4686 = vsel %vm4609, %v4562, %v4561
    %v4687 = vsel %vm4611, %v4563, %v4686
    %v4688 = vsel %vm4613, %v4564, %v4687
    %v4689 = vsel %vm4615, %v4565, %v4688
    %v4690 = vsel %vm4617, %v4566, %v4689
    %v4691 = vsel %vm4619, %v4567, %v4690
    %v4692 = vsel %vm4621, %v4568, %v4691
    %v4693 = vsel %vm4609, %v4570, %v4569
    %v4694 = vsel %vm4611, %v4571, %v4693
    %v4695 = vsel %vm4613, %v4572, %v4694
    %v4696 = vsel %vm4615, %v4573, %v4695
    %v4697 = vsel %vm4617, %v4574, %v4696
    %v4698 = vsel %vm4619, %v4575, %v4697
    %v4699 = vsel %vm4621, %v4576, %v4698
    %v4700 = vsel %vm4609, %v4578, %v4577
    %v4701 = vsel %vm4611, %v4579, %v4700
    %v4702 = vsel %vm4613, %v4580, %v4701
    %v4703 = vsel %vm4615, %v4581, %v4702
    %v4704 = vsel %vm4617, %v4582, %v4703
    %v4705 = vsel %vm4619, %v4583, %v4704
    %v4706 = vsel %vm4621, %v4584, %v4705
    %v4707 = vsel %vm4609, %v4586, %v4585
    %v4708 = vsel %vm4611, %v4587, %v4707
    %v4709 = vsel %vm4613, %v4588, %v4708
    %v4710 = vsel %vm4615, %v4589, %v4709
    %v4711 = vsel %vm4617, %v4590, %v4710
    %v4712 = vsel %vm4619, %v4591, %v4711
    %v4713 = vsel %vm4621, %v4592, %v4712
    %v4714 = vsel %vm4609, %v4594, %v4593
    %v4715 = vsel %vm4611, %v4595, %v4714
    %v4716 = vsel %vm4613, %v4596, %v4715
    %v4717 = vsel %vm4615, %v4597, %v4716
    %v4718 = vsel %vm4617, %v4598, %v4717
    %v4719 = vsel %vm4619, %v4599, %v4718
    %v4720 = vsel %vm4621, %v4600, %v4719
    %v4721 = vsel %vm4609, %v4602, %v4601
    %v4722 = vsel %vm4611, %v4603, %v4721
    %v4723 = vsel %vm4613, %v4604, %v4722
    %v4724 = vsel %vm4615, %v4605, %v4723
    %v4725 = vsel %vm4617, %v4606, %v4724
    %v4726 = vsel %vm4619, %v4607, %v4725
    %v4727 = vsel %vm4621, %v4608, %v4726
    %v4728 = vpack.c.b16 %v4629, %v4622
    %v4729 = vpack.c.b16 %v4643, %v4636
    %v4730 = vpack.c.b16 %v4657, %v4650
    %v4731 = vpack.c.b16 %v4671, %v4664
    %v4732 = vpack.c.b16 %v4685, %v4678
    %v4733 = vpack.c.b16 %v4699, %v4692
    %v4734 = vpack.c.b16 %v4713, %v4706
    %v4735 = vpack.c.b16 %v4727, %v4720
    %v4760 = vunpack.c.l.b16 %v4064
    %v4761 = vunpack.c.h.b16 %v4064
    %v4762 = vunpack.c.l.b16 %v4065
    %v4763 = vunpack.c.h.b16 %v4065
    %v4764 = vunpack.c.l.b16 %v4066
    %v4765 = vunpack.c.h.b16 %v4066
    %v4766 = vunpack.c.l.b16 %v4067
    %v4767 = vunpack.c.h.b16 %v4067
    %v4768 = vunpack.c.l.b16 %v4068
    %v4769 = vunpack.c.h.b16 %v4068
    %v4770 = vunpack.c.l.b16 %v4069
    %v4771 = vunpack.c.h.b16 %v4069
    %v4772 = vunpack.c.l.b16 %v4070
    %v4773 = vunpack.c.h.b16 %v4070
    %v4774 = vunpack.c.l.b16 %v4071
    %v4775 = vunpack.c.h.b16 %v4071
    %v4776 = vunpack.c.l.b16 %v4072
    %v4777 = vunpack.c.h.b16 %v4072
    %v4778 = vunpack.c.l.b16 %v4073
    %v4779 = vunpack.c.h.b16 %v4073
    %v4780 = vunpack.c.l.b16 %v4074
    %v4781 = vunpack.c.h.b16 %v4074
    %v4782 = vunpack.c.l.b16 %v4075
    %v4783 = vunpack.c.h.b16 %v4075
    %v4784 = vunpack.c.l.b16 %v4076
    %v4785 = vunpack.c.h.b16 %v4076
    %v4786 = vunpack.c.l.b16 %v4077
    %v4787 = vunpack.c.h.b16 %v4077
    %v4788 = vunpack.c.l.b16 %v4078
    %v4789 = vunpack.c.h.b16 %v4078
    %v4790 = vunpack.c.l.b16 %v4079
    %v4791 = vunpack.c.h.b16 %v4079
    %v4792 = vpack.c.b16 %v4762, %v4760
    %v4793 = vpack.c.b16 %v4763, %v4761
    %v4794 = vpack.c.b16 %v4766, %v4764
    %v4795 = vpack.c.b16 %v4767, %v4765
    %v4796 = vpack.c.b16 %v4770, %v4768
    %v4797 = vpack.c.b16 %v4771, %v4769
    %v4798 = vpack.c.b16 %v4774, %v4772
    %v4799 = vpack.c.b16 %v4775, %v4773
    %v4800 = vpack.c.b16 %v4778, %v4776
    %v4801 = vpack.c.b16 %v4779, %v4777
    %v4802 = vpack.c.b16 %v4782, %v4780
    %v4803 = vpack.c.b16 %v4783, %v4781
    %v4804 = vpack.c.b16 %v4786, %v4784
    %v4805 = vpack.c.b16 %v4787, %v4785
    %v4806 = vpack.c.b16 %v4790, %v4788
    %v4807 = vpack.c.b16 %v4791, %v4789
    %4824 = vmatprep.subr.bf16.mxu0 %v4793
    %4825 = vmatpush1.bf16.msra.mxu0 %v4792
    %4826 = vmatprep.subr.bf16.mxu0 %v4795
    %4827 = vmatpush1.bf16.msra.mxu0 %v4794
    %4828 = vmatprep.subr.bf16.mxu0 %v4797
    %4829 = vmatpush1.bf16.msra.mxu0 %v4796
    %4830 = vmatprep.subr.bf16.mxu0 %v4799
    %4831 = vmatpush1.bf16.msra.mxu0 %v4798
    %4832 = vmatprep.subr.bf16.mxu0 %v4801
    %4833 = vmatpush1.bf16.msra.mxu0 %v4800
    %4834 = vmatprep.subr.bf16.mxu0 %v4803
    %4835 = vmatpush1.bf16.msra.mxu0 %v4802
    %4836 = vmatprep.subr.bf16.mxu0 %v4805
    %4837 = vmatpush1.bf16.msra.mxu0 %v4804
    %4838 = vmatprep.subr.bf16.mxu0 %v4807
    %4839 = vmatpush1.bf16.msra.mxu0 %v4806
    %4840 = vmatprep.subr.bf16.mxu0 0
    %4841 = vmatpush1.bf16.msra.mxu0 0
    %4842 = vmatprep.subr.bf16.mxu0 0
    %4843 = vmatpush1.bf16.msra.mxu0 0
    %4844 = vmatprep.subr.bf16.mxu0 0
    %4845 = vmatpush1.bf16.msra.mxu0 0
    %4846 = vmatprep.subr.bf16.mxu0 0
    %4847 = vmatpush1.bf16.msra.mxu0 0
    %4848 = vmatprep.subr.bf16.mxu0 0
    %4849 = vmatpush1.bf16.msra.mxu0 0
    %4850 = vmatprep.subr.bf16.mxu0 0
    %4851 = vmatpush1.bf16.msra.mxu0 0
    %4852 = vmatprep.subr.bf16.mxu0 0
    %4853 = vmatpush1.bf16.msra.mxu0 0
    %4854 = vmatprep.subr.bf16.mxu0 0
    %4855 = vmatpush1.bf16.msra.mxu0 0
    %4856 = vmatprep.mubr.bf16.mxu0 0
    %4857 = vmatmul.mubr.bf16.gmra.mrb[0].mxu0 %v4728
    %v4858 = vpop.f32.mrb[0].mxu0
    %v4859 = vadd.f32 %v4275, %v4858
    %v4860 = vpop.f32.mrb[0].mxu0
    %v4861 = vadd.f32 %v4277, %v4860
    %v4862 = vpop.f32.mrb[0].mxu0
    %v4863 = vadd.f32 %v4279, %v4862
    %v4864 = vpop.f32.mrb[0].mxu0
    %v4865 = vadd.f32 %v4281, %v4864
    %4866 = vmatprep.mubr.bf16.mxu0 0
    %4867 = vmatmul.mubr.bf16.gmra.mrb[0].mxu0 %v4729
    %v4868 = vpop.f32.mrb[0].mxu0
    %v4869 = vadd.f32 %v4285, %v4868
    %v4870 = vpop.f32.mrb[0].mxu0
    %v4871 = vadd.f32 %v4287, %v4870
    %v4872 = vpop.f32.mrb[0].mxu0
    %v4873 = vadd.f32 %v4289, %v4872
    %v4874 = vpop.f32.mrb[0].mxu0
    %v4875 = vadd.f32 %v4291, %v4874
    %4876 = vmatprep.mubr.bf16.mxu0 0
    %4877 = vmatmul.mubr.bf16.gmra.mrb[0].mxu0 %v4730
    %v4878 = vpop.f32.mrb[0].mxu0
    %v4879 = vadd.f32 %v4295, %v4878
    %v4880 = vpop.f32.mrb[0].mxu0
    %v4881 = vadd.f32 %v4297, %v4880
    %v4882 = vpop.f32.mrb[0].mxu0
    %v4883 = vadd.f32 %v4299, %v4882
    %v4884 = vpop.f32.mrb[0].mxu0
    %v4885 = vadd.f32 %v4301, %v4884
    %4886 = vmatprep.mubr.bf16.mxu0 0
    %4887 = vmatmul.mubr.bf16.gmra.mrb[0].mxu0 %v4731
    %v4888 = vpop.f32.mrb[0].mxu0
    %v4889 = vadd.f32 %v4305, %v4888
    %v4890 = vpop.f32.mrb[0].mxu0
    %v4891 = vadd.f32 %v4307, %v4890
    %v4892 = vpop.f32.mrb[0].mxu0
    %v4893 = vadd.f32 %v4309, %v4892
    %v4894 = vpop.f32.mrb[0].mxu0
    %v4895 = vadd.f32 %v4311, %v4894
    %4896 = vmatprep.mubr.bf16.mxu0 0
    %4897 = vmatmul.mubr.bf16.gmra.mrb[0].mxu0 %v4732
    %v4898 = vpop.f32.mrb[0].mxu0
    %v4899 = vadd.f32 %v4315, %v4898
    %v4900 = vpop.f32.mrb[0].mxu0
    %v4901 = vadd.f32 %v4317, %v4900
    %v4902 = vpop.f32.mrb[0].mxu0
    %v4903 = vadd.f32 %v4319, %v4902
    %v4904 = vpop.f32.mrb[0].mxu0
    %v4905 = vadd.f32 %v4321, %v4904
    %4906 = vmatprep.mubr.bf16.mxu0 0
    %4907 = vmatmul.mubr.bf16.gmra.mrb[0].mxu0 %v4733
    %v4908 = vpop.f32.mrb[0].mxu0
    %v4909 = vadd.f32 %v4325, %v4908
    %v4910 = vpop.f32.mrb[0].mxu0
    %v4911 = vadd.f32 %v4327, %v4910
    %v4912 = vpop.f32.mrb[0].mxu0
    %v4913 = vadd.f32 %v4329, %v4912
    %v4914 = vpop.f32.mrb[0].mxu0
    %v4915 = vadd.f32 %v4331, %v4914
    %4916 = vmatprep.mubr.bf16.mxu0 0
    %4917 = vmatmul.mubr.bf16.gmra.mrb[0].mxu0 %v4734
    %v4918 = vpop.f32.mrb[0].mxu0
    %v4919 = vadd.f32 %v4335, %v4918
    %v4920 = vpop.f32.mrb[0].mxu0
    %v4921 = vadd.f32 %v4337, %v4920
    %v4922 = vpop.f32.mrb[0].mxu0
    %v4923 = vadd.f32 %v4339, %v4922
    %v4924 = vpop.f32.mrb[0].mxu0
    %v4925 = vadd.f32 %v4341, %v4924
    %4926 = vmatprep.mubr.bf16.mxu0 0
    %4927 = vmatmul.mubr.bf16.gmra.mrb[0].mxu0 %v4735
    %v4928 = vpop.f32.mrb[0].mxu0
    %v4929 = vadd.f32 %v4345, %v4928
    %v4930 = vpop.f32.mrb[0].mxu0
    %v4931 = vadd.f32 %v4347, %v4930
    %v4932 = vpop.f32.mrb[0].mxu0
    %v4933 = vadd.f32 %v4349, %v4932
    %v4934 = vpop.f32.mrb[0].mxu0
    %v4935 = vadd.f32 %v4351, %v4934
    %4936 = vdwg.mxu0
    %v4937 = vld [vmem:[%s6] sm:$0x3]
    %v4939 = vlaneseq
    %v4940 = vshrl.u32 %v4939, 7
    %v4941 = vsub.s32 0, %v4940
    %v4942 = vrot.slane %v4937, %v4941
    %v4943 = vlaneseq
    %v4944 = vshrl.u32 %v4943, 7
    %v4945 = vsub.s32 1, %v4944
    %v4946 = vrot.slane %v4937, %v4945
    %v4949 = vadd.f32 %v4859, %v4942
    %v4950 = vadd.f32 %v4861, %v4946
    %v4951 = vadd.f32 %v4863, %v4942
    %v4952 = vadd.f32 %v4865, %v4946
    %v4953 = vadd.f32 %v4869, %v4942
    %v4954 = vadd.f32 %v4871, %v4946
    %v4955 = vadd.f32 %v4873, %v4942
    %v4956 = vadd.f32 %v4875, %v4946
    %v4957 = vadd.f32 %v4879, %v4942
    %v4958 = vadd.f32 %v4881, %v4946
    %v4959 = vadd.f32 %v4883, %v4942
    %v4960 = vadd.f32 %v4885, %v4946
    %v4961 = vadd.f32 %v4889, %v4942
    %v4962 = vadd.f32 %v4891, %v4946
    %v4963 = vadd.f32 %v4893, %v4942
    %v4964 = vadd.f32 %v4895, %v4946
    %v4965 = vadd.f32 %v4899, %v4942
    %v4966 = vadd.f32 %v4901, %v4946
    %v4967 = vadd.f32 %v4903, %v4942
    %v4968 = vadd.f32 %v4905, %v4946
    %v4969 = vadd.f32 %v4909, %v4942
    %v4970 = vadd.f32 %v4911, %v4946
    %v4971 = vadd.f32 %v4913, %v4942
    %v4972 = vadd.f32 %v4915, %v4946
    %v4973 = vadd.f32 %v4919, %v4942
    %v4974 = vadd.f32 %v4921, %v4946
    %v4975 = vadd.f32 %v4923, %v4942
    %v4976 = vadd.f32 %v4925, %v4946
    %v4977 = vadd.f32 %v4929, %v4942
    %v4978 = vadd.f32 %v4931, %v4946
    %v4979 = vadd.f32 %v4933, %v4942
    %v4980 = vadd.f32 %v4935, %v4946
    %v4981 = vmax.f32 %v4949, 0.0
    %v4982 = vmax.f32 %v4950, 0.0
    %v4983 = vmax.f32 %v4951, 0.0
    %v4984 = vmax.f32 %v4952, 0.0
    %v4985 = vmax.f32 %v4953, 0.0
    %v4986 = vmax.f32 %v4954, 0.0
    %v4987 = vmax.f32 %v4955, 0.0
    %v4988 = vmax.f32 %v4956, 0.0
    %v4989 = vmax.f32 %v4957, 0.0
    %v4990 = vmax.f32 %v4958, 0.0
    %v4991 = vmax.f32 %v4959, 0.0
    %v4992 = vmax.f32 %v4960, 0.0
    %v4993 = vmax.f32 %v4961, 0.0
    %v4994 = vmax.f32 %v4962, 0.0
    %v4995 = vmax.f32 %v4963, 0.0
    %v4996 = vmax.f32 %v4964, 0.0
    %v4997 = vmax.f32 %v4965, 0.0
    %v4998 = vmax.f32 %v4966, 0.0
    %v4999 = vmax.f32 %v4967, 0.0
    %v5000 = vmax.f32 %v4968, 0.0
    %v5001 = vmax.f32 %v4969, 0.0
    %v5002 = vmax.f32 %v4970, 0.0
    %v5003 = vmax.f32 %v4971, 0.0
    %v5004 = vmax.f32 %v4972, 0.0
    %v5005 = vmax.f32 %v4973, 0.0
    %v5006 = vmax.f32 %v4974, 0.0
    %v5007 = vmax.f32 %v4975, 0.0
    %v5008 = vmax.f32 %v4976, 0.0
    %v5009 = vmax.f32 %v4977, 0.0
    %v5010 = vmax.f32 %v4978, 0.0
    %v5011 = vmax.f32 %v4979, 0.0
    %v5012 = vmax.f32 %v4980, 0.0
    %v5013 = vpack.c.bf16 %v4983, %v4981
    %v5014 = vpack.c.bf16 %v4984, %v4982
    %v5015 = vpack.c.bf16 %v4987, %v4985
    %v5016 = vpack.c.bf16 %v4988, %v4986
    %v5017 = vpack.c.bf16 %v4991, %v4989
    %v5018 = vpack.c.bf16 %v4992, %v4990
    %v5019 = vpack.c.bf16 %v4995, %v4993
    %v5020 = vpack.c.bf16 %v4996, %v4994
    %v5021 = vpack.c.bf16 %v4999, %v4997
    %v5022 = vpack.c.bf16 %v5000, %v4998
    %v5023 = vpack.c.bf16 %v5003, %v5001
    %v5024 = vpack.c.bf16 %v5004, %v5002
    %v5025 = vpack.c.bf16 %v5007, %v5005
    %v5026 = vpack.c.bf16 %v5008, %v5006
    %v5027 = vpack.c.bf16 %v5011, %v5009
    %v5028 = vpack.c.bf16 %v5012, %v5010
    %v5029 = vld [vmem:[%s7] sm:$0xf]
    %v5030 = vld [vmem:[%s7 + $0x4] sm:$0xf]
    %v5031 = vld [vmem:[%s7 + $0x8] sm:$0xf]
    %v5032 = vld [vmem:[%s7 + $0xc] sm:$0xf]
    %v5033 = vld [vmem:[%s7 + $0x10] sm:$0xf]
    %v5034 = vld [vmem:[%s7 + $0x14] sm:$0xf]
    %v5035 = vld [vmem:[%s7 + $0x18] sm:$0xf]
    %v5036 = vld [vmem:[%s7 + $0x1c] sm:$0xf]
    %v5037 = vld [vmem:[%s7 + $0x20] sm:$0xf]
    %v5038 = vld [vmem:[%s7 + $0x24] sm:$0xf]
    %v5039 = vld [vmem:[%s7 + $0x28] sm:$0xf]
    %v5040 = vld [vmem:[%s7 + $0x2c] sm:$0xf]
    %v5041 = vld [vmem:[%s7 + $0x30] sm:$0xf]
    %v5042 = vld [vmem:[%s7 + $0x34] sm:$0xf]
    %v5043 = vld [vmem:[%s7 + $0x38] sm:$0xf]
    %v5044 = vld [vmem:[%s7 + $0x3c] sm:$0xf]
    %v5045 = vld [vmem:[%s7 + $0x40] sm:$0xf]
    %v5046 = vld [vmem:[%s7 + $0x44] sm:$0xf]
    %v5047 = vld [vmem:[%s7 + $0x48] sm:$0xf]
    %v5048 = vld [vmem:[%s7 + $0x4c] sm:$0xf]
    %v5049 = vld [vmem:[%s7 + $0x50] sm:$0xf]
    %v5050 = vld [vmem:[%s7 + $0x54] sm:$0xf]
    %v5051 = vld [vmem:[%s7 + $0x58] sm:$0xf]
    %v5052 = vld [vmem:[%s7 + $0x5c] sm:$0xf]
    %v5053 = vld [vmem:[%s8] sm:$0x1]
    %v5055 = vlaneseq
    %v5056 = vshrl.u32 %v5055, 7
    %v5057 = vsub.s32 0, %v5056
    %v5058 = vrot.slane %v5053, %v5057
    %v5084 = vunpack.c.l.b16 %v5029
    %v5085 = vunpack.c.l.b16 %v5030
    %v5086 = vunpack.c.l.b16 %v5031
    %v5087 = vunpack.c.l.b16 %v5032
    %v5088 = vunpack.c.l.b16 %v5033
    %v5089 = vunpack.c.l.b16 %v5034
    %v5090 = vunpack.c.l.b16 %v5035
    %v5091 = vunpack.c.l.b16 %v5036
    %v5092 = vunpack.c.l.b16 %v5037
    %v5093 = vunpack.c.l.b16 %v5038
    %v5094 = vunpack.c.l.b16 %v5039
    %v5095 = vunpack.c.l.b16 %v5040
    %v5096 = vunpack.c.l.b16 %v5041
    %v5097 = vunpack.c.l.b16 %v5042
    %v5098 = vunpack.c.l.b16 %v5043
    %v5099 = vunpack.c.l.b16 %v5044
    %v5100 = vunpack.c.l.b16 %v5045
    %v5101 = vunpack.c.l.b16 %v5046
    %v5102 = vunpack.c.l.b16 %v5047
    %v5103 = vunpack.c.l.b16 %v5048
    %v5104 = vunpack.c.l.b16 %v5049
    %v5105 = vunpack.c.l.b16 %v5050
    %v5106 = vunpack.c.l.b16 %v5051
    %v5107 = vunpack.c.l.b16 %v5052
    %v5108 = vpack.c.b16 %v5085, %v5084
    %v5109 = vpack.c.b16 %v5087, %v5086
    %v5110 = vpack.c.b16 %v5089, %v5088
    %v5111 = vpack.c.b16 %v5091, %v5090
    %v5112 = vpack.c.b16 %v5093, %v5092
    %v5113 = vpack.c.b16 %v5095, %v5094
    %v5114 = vpack.c.b16 %v5097, %v5096
    %v5115 = vpack.c.b16 %v5099, %v5098
    %v5116 = vpack.c.b16 %v5101, %v5100
    %v5117 = vpack.c.b16 %v5103, %v5102
    %v5118 = vpack.c.b16 %v5105, %v5104
    %v5119 = vpack.c.b16 %v5107, %v5106
    %vm5132 = vcmask 523264
    %v5134 = vsel %vm5132, %v5014, 0
    %v5137 = vsel %vm5132, %v5016, 0
    %v5140 = vsel %vm5132, %v5018, 0
    %v5143 = vsel %vm5132, %v5020, 0
    %v5146 = vsel %vm5132, %v5022, 0
    %v5149 = vsel %vm5132, %v5024, 0
    %v5152 = vsel %vm5132, %v5026, 0
    %v5155 = vsel %vm5132, %v5028, 0
    %5157 = vmatprep.subr.bf16.mxu0 0
    %5158 = vmatpush1.bf16.msra.mxu0 %v5108
    %5159 = vmatprep.subr.bf16.mxu0 0
    %5160 = vmatpush1.bf16.msra.mxu0 %v5109
    %5161 = vmatprep.subr.bf16.mxu0 0
    %5162 = vmatpush1.bf16.msra.mxu0 %v5110
    %5163 = vmatprep.subr.bf16.mxu0 0
    %5164 = vmatpush1.bf16.msra.mxu0 %v5111
    %5165 = vmatprep.subr.bf16.mxu0 0
    %5166 = vmatpush1.bf16.msra.mxu0 %v5112
    %5167 = vmatprep.subr.bf16.mxu0 0
    %5168 = vmatpush1.bf16.msra.mxu0 %v5113
    %5169 = vmatprep.subr.bf16.mxu0 0
    %5170 = vmatpush1.bf16.msra.mxu0 %v5114
    %5171 = vmatprep.subr.bf16.mxu0 0
    %5172 = vmatpush1.bf16.msra.mxu0 %v5115
    %5173 = vmatprep.subr.bf16.mxu0 0
    %5174 = vmatpush1.bf16.msra.mxu0 %v5116
    %5175 = vmatprep.subr.bf16.mxu0 0
    %5176 = vmatpush1.bf16.msra.mxu0 %v5117
    %5177 = vmatprep.subr.bf16.mxu0 0
    %5178 = vmatpush1.bf16.msra.mxu0 %v5118
    %5179 = vmatprep.subr.bf16.mxu0 0
    %5180 = vmatpush1.bf16.msra.mxu0 %v5119
    %5181 = vmatprep.subr.bf16.mxu0 0
    %5182 = vmatpush1.bf16.msra.mxu0 0
    %5183 = vmatprep.subr.bf16.mxu0 0
    %5184 = vmatpush1.bf16.msra.mxu0 0
    %5185 = vmatprep.subr.bf16.mxu0 0
    %5186 = vmatpush1.bf16.msra.mxu0 0
    %5187 = vmatprep.subr.bf16.mxu0 0
    %5188 = vmatpush1.bf16.msra.mxu0 0
    %5189 = vmatprep.mubr.bf16.mxu0 %v5134
    %5190 = vmatmul.mubr.bf16.gmra.mrb[0].mxu0 %v5013
    %v5191 = vpop.f32.mrb[0].mxu0
    %v5192 = vadd.f32 %v5058, %v5191
    %v5193 = vpop.f32.mrb[0].mxu0
    %v5194 = vpop.f32.mrb[0].mxu0
    %v5195 = vadd.f32 %v5058, %v5194
    %v5196 = vpop.f32.mrb[0].mxu0
    %5197 = vmatprep.mubr.bf16.mxu0 %v5137
    %5198 = vmatmul.mubr.bf16.gmra.mrb[0].mxu0 %v5015
    %v5199 = vpop.f32.mrb[0].mxu0
    %v5200 = vadd.f32 %v5058, %v5199
    %v5201 = vpop.f32.mrb[0].mxu0
    %v5202 = vpop.f32.mrb[0].mxu0
    %v5203 = vadd.f32 %v5058, %v5202
    %v5204 = vpop.f32.mrb[0].mxu0
    %5205 = vmatprep.mubr.bf16.mxu0 %v5140
    %5206 = vmatmul.mubr.bf16.gmra.mrb[0].mxu0 %v5017
    %v5207 = vpop.f32.mrb[0].mxu0
    %v5208 = vadd.f32 %v5058, %v5207
    %v5209 = vpop.f32.mrb[0].mxu0
    %v5210 = vpop.f32.mrb[0].mxu0
    %v5211 = vadd.f32 %v5058, %v5210
    %v5212 = vpop.f32.mrb[0].mxu0
    %5213 = vmatprep.mubr.bf16.mxu0 %v5143
    %5214 = vmatmul.mubr.bf16.gmra.mrb[0].mxu0 %v5019
    %v5215 = vpop.f32.mrb[0].mxu0
    %v5216 = vadd.f32 %v5058, %v5215
    %v5217 = vpop.f32.mrb[0].mxu0
    %v5218 = vpop.f32.mrb[0].mxu0
    %v5219 = vadd.f32 %v5058, %v5218
    %v5220 = vpop.f32.mrb[0].mxu0
    %5221 = vmatprep.mubr.bf16.mxu0 %v5146
    %5222 = vmatmul.mubr.bf16.gmra.mrb[0].mxu0 %v5021
    %v5223 = vpop.f32.mrb[0].mxu0
    %v5224 = vadd.f32 %v5058, %v5223
    %v5225 = vpop.f32.mrb[0].mxu0
    %v5226 = vpop.f32.mrb[0].mxu0
    %v5227 = vadd.f32 %v5058, %v5226
    %v5228 = vpop.f32.mrb[0].mxu0
    %5229 = vmatprep.mubr.bf16.mxu0 %v5149
    %5230 = vmatmul.mubr.bf16.gmra.mrb[0].mxu0 %v5023
    %v5231 = vpop.f32.mrb[0].mxu0
    %v5232 = vadd.f32 %v5058, %v5231
    %v5233 = vpop.f32.mrb[0].mxu0
    %v5234 = vpop.f32.mrb[0].mxu0
    %v5235 = vadd.f32 %v5058, %v5234
    %v5236 = vpop.f32.mrb[0].mxu0
    %5237 = vmatprep.mubr.bf16.mxu0 %v5152
    %5238 = vmatmul.mubr.bf16.gmra.mrb[0].mxu0 %v5025
    %v5239 = vpop.f32.mrb[0].mxu0
    %v5240 = vadd.f32 %v5058, %v5239
    %v5241 = vpop.f32.mrb[0].mxu0
    %v5242 = vpop.f32.mrb[0].mxu0
    %v5243 = vadd.f32 %v5058, %v5242
    %v5244 = vpop.f32.mrb[0].mxu0
    %5245 = vmatprep.mubr.bf16.mxu0 %v5155
    %5246 = vmatmul.mubr.bf16.gmra.mrb[0].mxu0 %v5027
    %v5247 = vpop.f32.mrb[0].mxu0
    %v5248 = vadd.f32 %v5058, %v5247
    %v5249 = vpop.f32.mrb[0].mxu0
    %v5250 = vpop.f32.mrb[0].mxu0
    %v5251 = vadd.f32 %v5058, %v5250
    %v5252 = vpop.f32.mrb[0].mxu0
    %5253 = vdwg.mxu0
    %v5254 = vmax.f32 %v5192, 0.0
    %v5255 = vmax.f32 %v5195, 0.0
    %v5256 = vmax.f32 %v5200, 0.0
    %v5257 = vmax.f32 %v5203, 0.0
    %v5258 = vmax.f32 %v5208, 0.0
    %v5259 = vmax.f32 %v5211, 0.0
    %v5260 = vmax.f32 %v5216, 0.0
    %v5261 = vmax.f32 %v5219, 0.0
    %v5262 = vmax.f32 %v5224, 0.0
    %v5263 = vmax.f32 %v5227, 0.0
    %v5264 = vmax.f32 %v5232, 0.0
    %v5265 = vmax.f32 %v5235, 0.0
    %v5266 = vmax.f32 %v5240, 0.0
    %v5267 = vmax.f32 %v5243, 0.0
    %v5268 = vmax.f32 %v5248, 0.0
    %v5269 = vmax.f32 %v5251, 0.0
    %5270 = vxpose.xlu0.b32.start [1/16] %v5254, 128
    %5271 = vxpose.xlu0.b32.cont [2/16] %v5255, 128
    %5272 = vxpose.xlu0.b32.cont [3/16] %v5256, 128
    %5273 = vxpose.xlu0.b32.cont [4/16] %v5257, 128
    %5274 = vxpose.xlu0.b32.cont [5/16] %v5258, 128
    %5275 = vxpose.xlu0.b32.cont [6/16] %v5259, 128
    %5276 = vxpose.xlu0.b32.cont [7/16] %v5260, 128
    %5277 = vxpose.xlu0.b32.cont [8/16] %v5261, 128
    %5278 = vxpose.xlu0.b32.cont [9/16] %v5262, 128
    %5279 = vxpose.xlu0.b32.cont [10/16] %v5263, 128
    %5280 = vxpose.xlu0.b32.cont [11/16] %v5264, 128
    %5281 = vxpose.xlu0.b32.cont [12/16] %v5265, 128
    %5282 = vxpose.xlu0.b32.cont [13/16] %v5266, 128
    %5283 = vxpose.xlu0.b32.cont [14/16] %v5267, 128
    %5284 = vxpose.xlu0.b32.cont [15/16] %v5268, 128
    %5285 = vxpose.xlu0.b32.end [16/16] %v5269, 128
    %v5286 = vpop.trf.xlu0
    %v5287 = vpop.trf.xlu0
    %v5288 = vpop.trf.xlu0
    %v5289 = vpop.trf.xlu0
    %v5290 = vpop.trf.xlu0
    %v5291 = vpop.trf.xlu0
    %v5292 = vpop.trf.xlu0
    %v5293 = vpop.trf.xlu0
    %v5294 = vpop.trf.xlu0
    %v5295 = vpop.trf.xlu0
    %v5296 = vpop.trf.xlu0
    %v5297 = vpop.trf.xlu0
    %v5298 = vpop.trf.xlu0
    %v5299 = vpop.trf.xlu0
    %v5300 = vpop.trf.xlu0
    %v5301 = vpop.trf.xlu0
    %v5302 = vld [vmem:[%s9] sm:$0xff]
    %v5303 = vld [vmem:[%s9 + $0x8] sm:$0xff]
    %v5304 = vld [vmem:[%s9 + $0x10] sm:$0xff]
    %v5305 = vld [vmem:[%s9 + $0x18] sm:$0xff]
    %v5306 = vld [vmem:[%s9 + $0x20] sm:$0xff]
    %v5307 = vld [vmem:[%s9 + $0x28] sm:$0xff]
    %v5308 = vld [vmem:[%s9 + $0x30] sm:$0xff]
    %v5309 = vld [vmem:[%s9 + $0x38] sm:$0xff]
    %v5310 = vld [vmem:[%s9 + $0x40] sm:$0xff]
    %v5311 = vld [vmem:[%s9 + $0x48] sm:$0xff]
    %v5312 = vld [vmem:[%s9 + $0x50] sm:$0xff]
    %v5313 = vld [vmem:[%s9 + $0x58] sm:$0xff]
    %v5314 = vld [vmem:[%s9 + $0x60] sm:$0xff]
    %v5315 = vld [vmem:[%s9 + $0x68] sm:$0xff]
    %v5316 = vld [vmem:[%s9 + $0x70] sm:$0xff]
    %v5317 = vld [vmem:[%s9 + $0x78] sm:$0xff]
    %5319 = vset.pattern.permute.xlu0 0
    %5320 = vperm.xlu0 %5319, %v5302
    %v5321 = vpop.permute.xlu0 %5320
    %5324 = vset.pattern.permute.xlu0 0
    %5325 = vperm.xlu0 %5324, %v5303
    %v5326 = vpop.permute.xlu0 %5325
    %5329 = vset.pattern.permute.xlu0 0
    %5330 = vperm.xlu0 %5329, %v5304
    %v5331 = vpop.permute.xlu0 %5330
    %5334 = vset.pattern.permute.xlu0 0
    %5335 = vperm.xlu0 %5334, %v5305
    %v5336 = vpop.permute.xlu0 %5335
    %5339 = vset.pattern.permute.xlu0 0
    %5340 = vperm.xlu0 %5339, %v5306
    %v5341 = vpop.permute.xlu0 %5340
    %5344 = vset.pattern.permute.xlu0 0
    %5345 = vperm.xlu0 %5344, %v5307
    %v5346 = vpop.permute.xlu0 %5345
    %5349 = vset.pattern.permute.xlu0 0
    %5350 = vperm.xlu0 %5349, %v5308
    %v5351 = vpop.permute.xlu0 %5350
    %5354 = vset.pattern.permute.xlu0 0
    %5355 = vperm.xlu0 %5354, %v5309
    %v5356 = vpop.permute.xlu0 %5355
    %5359 = vset.pattern.permute.xlu0 0
    %5360 = vperm.xlu0 %5359, %v5310
    %v5361 = vpop.permute.xlu0 %5360
    %5364 = vset.pattern.permute.xlu0 0
    %5365 = vperm.xlu0 %5364, %v5311
    %v5366 = vpop.permute.xlu0 %5365
    %5369 = vset.pattern.permute.xlu0 0
    %5370 = vperm.xlu0 %5369, %v5312
    %v5371 = vpop.permute.xlu0 %5370
    %5374 = vset.pattern.permute.xlu0 0
    %5375 = vperm.xlu0 %5374, %v5313
    %v5376 = vpop.permute.xlu0 %5375
    %5379 = vset.pattern.permute.xlu0 0
    %5380 = vperm.xlu0 %5379, %v5314
    %v5381 = vpop.permute.xlu0 %5380
    %5384 = vset.pattern.permute.xlu0 0
    %5385 = vperm.xlu0 %5384, %v5315
    %v5386 = vpop.permute.xlu0 %5385
    %5389 = vset.pattern.permute.xlu0 0
    %5390 = vperm.xlu0 %5389, %v5316
    %v5391 = vpop.permute.xlu0 %5390
    %5394 = vset.pattern.permute.xlu0 0
    %5395 = vperm.xlu0 %5394, %v5317
    %v5396 = vpop.permute.xlu0 %5395
    %v5398 = vmul.f32 %v5286, %v5321
    %v5399 = vmul.f32 %v5287, %v5326
    %v5400 = vmul.f32 %v5288, %v5331
    %v5401 = vmul.f32 %v5289, %v5336
    %v5402 = vmul.f32 %v5290, %v5341
    %v5403 = vmul.f32 %v5291, %v5346
    %v5404 = vmul.f32 %v5292, %v5351
    %v5405 = vmul.f32 %v5293, %v5356
    %v5406 = vmul.f32 %v5294, %v5361
    %v5407 = vmul.f32 %v5295, %v5366
    %v5408 = vmul.f32 %v5296, %v5371
    %v5409 = vmul.f32 %v5297, %v5376
    %v5410 = vmul.f32 %v5298, %v5381
    %v5411 = vmul.f32 %v5299, %v5386
    %v5412 = vmul.f32 %v5300, %v5391
    %v5413 = vmul.f32 %v5301, %v5396
    %v5414 = vadd.f32 %v5398, %v5399
    %v5415 = vadd.f32 %v5414, %v5400
    %v5416 = vadd.f32 %v5415, %v5401
    %v5417 = vadd.f32 %v5416, %v5402
    %v5418 = vadd.f32 %v5417, %v5403
    %v5419 = vadd.f32 %v5418, %v5404
    %v5420 = vadd.f32 %v5419, %v5405
    %v5421 = vadd.f32 %v5420, %v5406
    %v5422 = vadd.f32 %v5421, %v5407
    %v5423 = vadd.f32 %v5422, %v5408
    %v5424 = vadd.f32 %v5423, %v5409
    %v5425 = vadd.f32 %v5424, %v5410
    %v5426 = vadd.f32 %v5425, %v5411
    %v5427 = vadd.f32 %v5426, %v5412
    %v5428 = vadd.f32 %v5427, %v5413
    %v5429 = vrot.slane %v5428, 4
    %v5430 = vadd.f32 %v5428, %v5429
    %v5431 = vrot.slane %v5430, 2
    %v5432 = vadd.f32 %v5430, %v5431
    %v5433 = vrot.slane %v5432, 1
    %v5434 = vadd.f32 %v5432, %v5433
    %v5435 = vld [vmem:[#allocation2] sm:$0x1]
    %5437 = vset.pattern.permute.xlu0 0
    %5438 = vperm.xlu0 %5437, %v5435
    %v5439 = vpop.permute.xlu0 %5438
    %v5441 = vlaneseq
    %v5442 = vshrl.u32 %v5441, 7
    %v5443 = vsub.s32 0, %v5442
    %v5444 = vrot.slane %v5439, %v5443
    %v5445 = vadd.f32 %v5434, %v5444
    %v5446 = vsub.f32 0.0, %v5445
    %v5447 = vmul.f32 %v5446, 1.442695
    %v5448 = vpow.pop %v5447
    %v5449 = vadd.f32 %v5448, 1.0
    %v5450 = vrcp.pop %v5449
    %v5451 = vmul.f32 1.0, %v5450
    %5452 = vst [vmem:[#allocation6] sm:$0x1] %v5451
    // Predicated region
    $region50: #{tpu_custom_call.1} parent=1 // pred_check
      _
    $region51: #{tpu_custom_call.1} parent=1 // pred_check_branch
      %5454 = sbr.rel (0) target = $region53
    $region52: #{tpu_custom_call.1} parent=1 // pred_region
      %s5456 = ssub.s32 16, 16
      %5457 = vsyncadd [#allocation5], %s5456
      %s5459 = sshll.u32 [#allocation6], 4
      %s5460 = int_to_ptr.vmem [resolvable:$true] %s5459
      %5462 = dma.vmem_to_hbm [thread:$0]  %s5460, 16, %s11, [#allocation5]
    $region53: #{tpu_custom_call.1} parent=1 // pred_fallthru
      _
    // Predicated region
    $region54: #{tpu_custom_call.1} parent=1 // pred_check
      _
    $region55: #{tpu_custom_call.1} parent=1 // pred_check_branch
      %5464 = sbr.rel (0) target = $region57
    $region56: #{tpu_custom_call.1} parent=1 // pred_region
      %5465 = dma.done [#allocation5], 16
    $region57: #{tpu_custom_call.1} parent=1 // pred_fallthru
      _
    %5466 = vsyncpa [#allocation4], 1
    %5467 = vsyncpa [#allocation5], 1

</llo_original>
